<compile_context>
chip_gen: v7x
topology: tpu7x:2x2x1
jax: 0.10.0
libtpu: 0.0.40
codegen_flags: <defaults>
</compile_context>

<pallas_src>
import functools
import math

import jax
import jax.numpy as jnp
from jax.experimental import pallas as pl
from jax.experimental.pallas import tpu as pltpu


# ----------------------------------------------------------------------------
# helpers
# ----------------------------------------------------------------------------

_VMEM_LIMIT = None


def _vmem_limit_bytes():
    """Generation-aware VMEM budget: ~48 MiB on v7x (64 MiB parts),
    96 MiB on v5e/v6e (128 MiB parts).  Falls back to 48 MiB."""
    global _VMEM_LIMIT
    if _VMEM_LIMIT is None:
        limit = 48 * 1024 * 1024
        try:
            cap = pltpu.get_tpu_info().vmem_capacity_bytes
            limit = min((int(cap) * 3) // 4, 96 * 1024 * 1024)
        except Exception:
            pass
        _VMEM_LIMIT = int(limit)
    return _VMEM_LIMIT


def _pad_cols(n):
    """Pad a column count up to a multiple of 128 (lane width)."""
    return n + (-n) % 128


def _pick_tile(dim, preferred, align):
    """Largest tile <= preferred that divides `dim`; prefers 256-aligned tiles
    (full v6e/v7x MXU) over `align`-aligned ones; falls back to the full dim
    (only reachable for un-padded dims)."""
    if dim <= preferred:
        return dim
    aligns = (256, align) if align < 256 else (align,)
    for a in aligns:
        t = (preferred // a) * a
        while t >= a:
            if dim % t == 0:
                return t
            t -= a
    return dim


def _apply_activation(y, activation):
    if activation == "gelu":
        # GPT2 "gelu_new" (tanh approximation), computed in f32.
        c = 0.7978845608028654  # sqrt(2/pi)
        return 0.5 * y * (1.0 + jnp.tanh(c * (y + 0.044715 * y * y * y)))
    if activation == "tanh":
        return jnp.tanh(y)
    return y


# ----------------------------------------------------------------------------
# Tiled linear kernel (optional fused residual add), K-reduction with f32 acc
# ----------------------------------------------------------------------------

def _linear_kernel(x_ref, w_ref, b_ref, *rest, activation, has_residual):
    if has_residual:
        res_ref, o_ref, acc_ref = rest
    else:
        o_ref, acc_ref = rest
        res_ref = None

    k = pl.program_id(2)

    @pl.when(k == 0)
    def _():
        acc_ref[...] = jnp.zeros_like(acc_ref)

    acc_ref[...] += jnp.dot(x_ref[...], w_ref[...],
                            preferred_element_type=jnp.float32)

    @pl.when(k == pl.num_programs(2) - 1)
    def _():
        y = acc_ref[...] + b_ref[...]
        y = _apply_activation(y, activation)
        if has_residual:
            y = y + res_ref[...].astype(jnp.float32)   # residual added in f32
        o_ref[...] = y.astype(o_ref.dtype)


def linear(x, w, b=None, residual=None, activation="none",
           out_dtype=jnp.bfloat16, tm=256, tn=512, tk=512):
    """y = act(x @ W + b) [+ residual].  x: [M,K] (->bf16), w: [K,N0] (->bf16).
    N is padded to a multiple of 128 so the weight never tiles as one block."""
    M, K = x.shape
    N0 = w.shape[1]
    N = _pad_cols(N0)
    if b is None:
        b = jnp.zeros((N0,), jnp.float32)
    b = b.astype(jnp.float32)
    if N != N0:
        w = jnp.pad(w, ((0, 0), (0, N - N0)))
        b = jnp.pad(b, (0, N - N0))
        if residual is not None:
            residual = jnp.pad(residual, ((0, 0), (0, N - N0)))
    tm = _pick_tile(M, tm, 8)
    tn = _pick_tile(N, tn, 128)
    tk = _pick_tile(K, tk, 128)

    in_specs = [
        pl.BlockSpec((tm, tk), lambda i, j, k: (i, k)),
        pl.BlockSpec((tk, tn), lambda i, j, k: (k, j)),
        pl.BlockSpec((1, tn), lambda i, j, k: (0, j)),
    ]
    args = [x.astype(jnp.bfloat16), w.astype(jnp.bfloat16), b.reshape(1, N)]
    if residual is not None:
        in_specs.append(pl.BlockSpec((tm, tn), lambda i, j, k: (i, j)))
        args.append(residual)            # residual stream kept in f32

    out = pl.pallas_call(
        functools.partial(_linear_kernel, activation=activation,
                          has_residual=residual is not None),
        out_shape=jax.ShapeDtypeStruct((M, N), out_dtype),
        grid_spec=pltpu.PrefetchScalarGridSpec(
            num_scalar_prefetch=0,
            grid=(M // tm, N // tn, K // tk),
            in_specs=in_specs,
            out_specs=pl.BlockSpec((tm, tn), lambda i, j, k: (i, j)),
            scratch_shapes=[pltpu.VMEM((tm, tn), jnp.float32)],
        ),
        compiler_params=pltpu.CompilerParams(
            dimension_semantics=("parallel", "parallel", "arbitrary"),
            vmem_limit_bytes=_vmem_limit_bytes(),
        ),
    )(*args)
    return out[:, :N0] if N != N0 else out


# ----------------------------------------------------------------------------
# Fused LayerNorm + linear kernel.
# K kept whole so LN stats see the full row; LN result cached once per M-tile
# in a bf16 VMEM scratch and reused for every N tile.
# ----------------------------------------------------------------------------

def _ln_linear_kernel(x_ref, g_ref, bln_ref, w_ref, b_ref, o_ref, xn_ref, *,
                      eps, activation):
    @pl.when(pl.program_id(1) == 0)
    def _():
        x = x_ref[...].astype(jnp.float32)
        mean = jnp.mean(x, axis=-1, keepdims=True)
        xc = x - mean
        var = jnp.mean(xc * xc, axis=-1, keepdims=True)
        xn = xc * jax.lax.rsqrt(var + eps)
        xn_ref[...] = (xn * g_ref[...] + bln_ref[...]).astype(jnp.bfloat16)

    y = jnp.dot(xn_ref[...], w_ref[...], preferred_element_type=jnp.float32)
    y = y + b_ref[...]
    y = _apply_activation(y, activation)
    o_ref[...] = y.astype(o_ref.dtype)


def ln_linear(x, gamma, beta, w, b=None, activation="none",
              out_dtype=jnp.bfloat16, tm=256, tn=512, eps=1e-5):
    """y = act(LayerNorm(x) @ W + b).  x: [M,K], w: [K,N0] (N padded to 128)."""
    M, K = x.shape
    N0 = w.shape[1]
    N = _pad_cols(N0)
    if b is None:
        b = jnp.zeros((N0,), jnp.float32)
    b = b.astype(jnp.float32)
    if N != N0:
        w = jnp.pad(w, ((0, 0), (0, N - N0)))
        b = jnp.pad(b, (0, N - N0))
    tm = _pick_tile(M, tm, 8)
    tn = _pick_tile(N, tn, 128)

    out = pl.pallas_call(
        functools.partial(_ln_linear_kernel, eps=eps, activation=activation),
        out_shape=jax.ShapeDtypeStruct((M, N), out_dtype),
        grid_spec=pltpu.PrefetchScalarGridSpec(
            num_scalar_prefetch=0,
            grid=(M // tm, N // tn),
            in_specs=[
                pl.BlockSpec((tm, K), lambda i, j: (i, 0)),  # resident over j
                pl.BlockSpec((1, K), lambda i, j: (0, 0)),
                pl.BlockSpec((1, K), lambda i, j: (0, 0)),
                pl.BlockSpec((K, tn), lambda i, j: (0, j)),
                pl.BlockSpec((1, tn), lambda i, j: (0, j)),
            ],
            out_specs=pl.BlockSpec((tm, tn), lambda i, j: (i, j)),
            scratch_shapes=[pltpu.VMEM((tm, K), jnp.bfloat16)],  # LN cache
        ),
        compiler_params=pltpu.CompilerParams(
            # N axis must iterate sequentially so the LN cache filled at j==0
            # stays valid for every later j of the same i.
            dimension_semantics=("parallel", "arbitrary"),
            vmem_limit_bytes=_vmem_limit_bytes(),
        ),
    )(x,
      gamma.reshape(1, K).astype(jnp.float32),
      beta.reshape(1, K).astype(jnp.float32),
      w.astype(jnp.bfloat16),
      b.reshape(1, N))
    return out[:, :N0] if N != N0 else out


# ----------------------------------------------------------------------------
# Causal self-attention: one batch row per grid step, heads assembled directly
# into the lane-dense [S, H] output block (static column offsets, no concat).
# ----------------------------------------------------------------------------

def _attn_kernel(qkv_ref, o_ref, *, n_heads, scale):
    S = qkv_ref.shape[1]
    H = qkv_ref.shape[2] // 3
    Dh = H // n_heads

    row = jax.lax.broadcasted_iota(jnp.int32, (S, S), 0)
    col = jax.lax.broadcasted_iota(jnp.int32, (S, S), 1)
    causal = col <= row

    # TODO(synk): for S >= ~512 replace with a KV-tiled flash loop (online
    # softmax); the materialized [S,S] scores stress v7x's 64 MiB VMEM first.
    for h in range(n_heads):
        q = qkv_ref[0, :, h * Dh:(h + 1) * Dh]                     # [S, Dh]
        k = qkv_ref[0, :, H + h * Dh:H + (h + 1) * Dh]             # [S, Dh]
        v = qkv_ref[0, :, 2 * H + h * Dh:2 * H + (h + 1) * Dh]     # [S, Dh]
        # fold 1/sqrt(Dh) into q: S*Dh multiplies instead of S*S
        q = (q.astype(jnp.float32) * scale).astype(jnp.bfloat16)
        s = jax.lax.dot_general(q, k, (((1,), (1,)), ((), ())),
                                preferred_element_type=jnp.float32)
        s = jnp.where(causal, s, -1e30)
        m = jnp.max(s, axis=-1, keepdims=True)
        p = jnp.exp(s - m)
        # approx reciprocal: matches exact softmax to within bf16 tolerance
        p = p * pl.reciprocal(jnp.sum(p, axis=-1, keepdims=True), approx=True)
        o_h = jnp.dot(p.astype(jnp.bfloat16), v,
                      preferred_element_type=jnp.float32)          # [S, Dh]
        # assemble the lane-dense output block head-by-head (static offsets);
        # each head's temporaries die at this store (no concat relayout).
        o_ref[0, :, h * Dh:(h + 1) * Dh] = o_h.astype(o_ref.dtype)


def causal_self_attention(qkv, n_heads):
    """qkv: [B, S, 3H] bf16 (q|k|v concatenated) -> [B, S, H] bf16."""
    B, S, H3 = qkv.shape
    H = H3 // 3
    Dh = H // n_heads
    # NOTE: grid is (B,) -- on v7x keep B*grid >= 2 (or add a q-tile axis) so
    # both TensorCores are used; B=2 here.
    return pl.pallas_call(
        functools.partial(_attn_kernel, n_heads=n_heads,
                          scale=1.0 / math.sqrt(Dh)),
        out_shape=jax.ShapeDtypeStruct((B, S, H), jnp.bfloat16),
        grid=(B,),
        in_specs=[pl.BlockSpec((1, S, H3), lambda b: (b, 0, 0))],
        out_specs=pl.BlockSpec((1, S, H), lambda b: (b, 0, 0)),
        compiler_params=pltpu.CompilerParams(
            dimension_semantics=("parallel",),
            vmem_limit_bytes=_vmem_limit_bytes(),
        ),
    )(qkv.astype(jnp.bfloat16))


# ----------------------------------------------------------------------------
# Model definition (parameters + forward, glue in plain JAX)
# ----------------------------------------------------------------------------

class Config:
    vocab_size = 256        # stand-in for 21128
    n_positions = 32
    hidden = 128            # stand-in for 768
    n_heads = 4             # stand-in for 12
    n_layers = 2            # stand-in for 12
    ffn = 4 * 128
    lm_vocab = 256          # lm_head output dim (stand-in for 21128)


def init_params(key, cfg):
    std = 0.02
    keys = iter(jax.random.split(key, 8 + 8 * cfg.n_layers))

    def normal(shape):
        # matmul weights stored in bf16 (MXU path); LN params / biases in f32
        return (std * jax.random.normal(next(keys), shape, jnp.float32)
                ).astype(jnp.bfloat16)

    params = {}
    params["wte"] = normal((cfg.vocab_size, cfg.hidden))
    params["wpe"] = normal((cfg.n_positions, cfg.hidden))
    params["lnf_g"] = jnp.ones((cfg.hidden,), jnp.float32)
    params["lnf_b"] = jnp.zeros((cfg.hidden,), jnp.float32)
    params["lm_w"] = normal((cfg.hidden, cfg.lm_vocab))          # lm_head (no bias)
    params["value_w"] = normal((cfg.hidden, 1))                  # Linear(768, 1)
    params["value_b"] = jnp.zeros((1,), jnp.float32)

    layers = []
    for _ in range(cfg.n_layers):
        layers.append({
            "ln1_g": jnp.ones((cfg.hidden,), jnp.float32),
            "ln1_b": jnp.zeros((cfg.hidden,), jnp.float32),
            "attn_w": normal((cfg.hidden, 3 * cfg.hidden)),
            "attn_b": jnp.zeros((3 * cfg.hidden,), jnp.float32),
            "attn_proj_w": normal((cfg.hidden, cfg.hidden)),
            "attn_proj_b": jnp.zeros((cfg.hidden,), jnp.float32),
            "ln2_g": jnp.ones((cfg.hidden,), jnp.float32),
            "ln2_b": jnp.zeros((cfg.hidden,), jnp.float32),
            "fc_w": normal((cfg.hidden, cfg.ffn)),
            "fc_b": jnp.zeros((cfg.ffn,), jnp.float32),
            "proj_w": normal((cfg.ffn, cfg.hidden)),
            "proj_b": jnp.zeros((cfg.hidden,), jnp.float32),
        })
    params["layers"] = layers
    return params


def gpt2_block(x_flat, p, B, S, cfg):
    """Pre-LN transformer block.  x_flat: [B*S, H] f32 residual stream."""
    H = cfg.hidden

    # --- attention sub-block (LN1 fused into QKV matmul) ---
    qkv = ln_linear(x_flat, p["ln1_g"], p["ln1_b"],
                    p["attn_w"], p["attn_b"])                     # [B*S, 3H] bf16
    attn = causal_self_attention(qkv.reshape(B, S, 3 * H), cfg.n_heads)
    attn = attn.reshape(B * S, H)                                 # [B*S, H] bf16
    # attn_proj with fused residual add (attn dropout = identity)
    x_flat = linear(attn, p["attn_proj_w"], p["attn_proj_b"],
                    residual=x_flat, out_dtype=jnp.float32)

    # --- MLP sub-block (LN2 fused into fc matmul, residual fused into proj) ---
    h = ln_linear(x_flat, p["ln2_g"], p["ln2_b"],
                  p["fc_w"], p["fc_b"], activation="gelu")        # [B*S, ffn] bf16
    x_flat = linear(h, p["proj_w"], p["proj_b"],
                    residual=x_flat, out_dtype=jnp.float32)       # mlp dropout = id
    return x_flat


def gpt2_forward(params, token_inputs, cfg, use_rlhf=False):
    """token_inputs: [B, S] int32 -> logits [B, S, lm_vocab]
    (and value [B, S] if use_rlhf)."""
    B, S = token_inputs.shape
    H = cfg.hidden
    V = cfg.lm_vocab

    # embeddings (gather is glue, plain JAX); residual stream carried in f32
    tok_emb = params["wte"][token_inputs].astype(jnp.float32)     # [B, S, H]
    pos_emb = params["wpe"][:S].astype(jnp.float32)               # [S, H]
    x = (tok_emb + pos_emb[None, :, :]).reshape(B * S, H)

    for p in params["layers"]:
        x = gpt2_block(x, p, B, S, cfg)

    # forward(): Dropout(0.1) on embedding -> identity (inference)
    if not use_rlhf:
        logits = ln_linear(x, params["lnf_g"], params["lnf_b"],
                           params["lm_w"], None, out_dtype=jnp.float32)
        return logits.reshape(B, S, V)

    # Fused lm_head + value head: one pallas_call sharing a single LayerNorm
    # pass over x; the value column is padded to a full 128-lane tile inside
    # ln_linear, so no N=1 masked-store kernel remains.
    # (For the real 21K-vocab checkpoint, pre-concatenate once outside jit.)
    w_cat = jnp.concatenate(
        [params["lm_w"], params["value_w"].astype(params["lm_w"].dtype)], axis=1)
    b_cat = jnp.concatenate(
        [jnp.zeros((V,), jnp.float32), params["value_b"].astype(jnp.float32)],
        axis=0)
    out = ln_linear(x, params["lnf_g"], params["lnf_b"], w_cat, b_cat,
                    out_dtype=jnp.float32)                        # [B*S, V+1]
    logits = out[:, :V].reshape(B, S, V)
    value = jnp.tanh(out[:, V]).reshape(B, S)   # Linear -> Tanh -> Dropout(id), squeeze
    return logits, value


# ----------------------------------------------------------------------------
# Main
# ----------------------------------------------------------------------------

if __name__ == "__main__":
    cfg = Config()
    key = jax.random.PRNGKey(0)
    pkey, tkey = jax.random.split(key)

    params = init_params(pkey, cfg)

    B, S = 2, 8
    token_inputs = jax.random.randint(tkey, (B, S), 0, cfg.vocab_size, jnp.int32)

    fwd = jax.jit(lambda p, t: gpt2_forward(p, t, cfg, use_rlhf=False))
    fwd_rlhf = jax.jit(lambda p, t: gpt2_forward(p, t, cfg, use_rlhf=True))

    # path 1: use_rlhf = False -> logits only
    logits = jax.block_until_ready(fwd(params, token_inputs))
    assert logits.shape == (B, S, cfg.lm_vocab)

    # path 2: use_rlhf = True -> (logits, value)
    logits2, value = fwd_rlhf(params, token_inputs)
    logits2 = jax.block_until_ready(logits2)
    value = jax.block_until_ready(value)
    assert logits2.shape == (B, S, cfg.lm_vocab)
    assert value.shape == (B, S)
    assert bool(jnp.all(jnp.isfinite(logits))) and bool(jnp.all(jnp.isfinite(value)))

    print("KERNEL_OK")
</pallas_src>

<mosaic_0001>
module attributes {stable_mosaic.version = 11 : i64} {
  func.func @_ln_linear_kernel(%arg0: i32, %arg1: i32, %arg2: memref<16x128xf32, #tpu.memory_space<vmem>>, %arg3: memref<1x128xf32, #tpu.memory_space<vmem>>, %arg4: memref<1x128xf32, #tpu.memory_space<vmem>>, %arg5: memref<128x384xbf16, #tpu.memory_space<vmem>>, %arg6: memref<1x384xf32, #tpu.memory_space<vmem>>, %arg7: memref<16x384xbf16, #tpu.memory_space<vmem>>, %arg8: memref<16x128xbf16, #tpu.memory_space<vmem>>) attributes {dimension_semantics = [#tpu.dimension_semantics<parallel>, #tpu.dimension_semantics<arbitrary>], iteration_bounds = array<i64: 1, 1>, scalar_prefetch = 0 : i64, scratch_operands = 1 : i64, tpu.core_type = #tpu.core_type<tc>, window_params = [{transform_indices = @transform_0, window_bounds = array<i64: 16, 128>}, {pipeline_mode = #tpu.pipeline_mode<synchronous>, transform_indices = @transform_1, window_bounds = array<i64: 1, 128>}, {pipeline_mode = #tpu.pipeline_mode<synchronous>, transform_indices = @transform_2, window_bounds = array<i64: 1, 128>}, {transform_indices = @transform_3, window_bounds = array<i64: 128, 384>}, {transform_indices = @transform_4, window_bounds = array<i64: 1, 384>}, {transform_indices = @transform_5, window_bounds = array<i64: 16, 384>}]} {
    %c0_i32 = arith.constant 0 : i32
    %0 = arith.cmpi eq, %arg1, %c0_i32 : i32
    %1 = arith.extui %0 : i1 to i32
    %c0_i32_0 = arith.constant 0 : i32
    %2 = arith.cmpi ne, %1, %c0_i32_0 : i32
    scf.if %2 {
      %c0_8 = arith.constant 0 : index
      %c0_9 = arith.constant 0 : index
      %11 = vector.load %arg2[%c0_8, %c0_9] : memref<16x128xf32, #tpu.memory_space<vmem>>, vector<16x128xf32>
      %cst_10 = arith.constant dense<0.000000e+00> : vector<16xf32>
      %12 = vector.multi_reduction <add>, %11, %cst_10 [1] : vector<16x128xf32> to vector<16xf32>
      %13 = vector.shape_cast %12 : vector<16xf32> to vector<16x1xf32>
      %cst_11 = arith.constant 1.280000e+02 : f32
      %14 = vector.broadcast %cst_11 : f32 to vector<16x1xf32>
      %15 = arith.divf %13, %14 : vector<16x1xf32>
      %16 = vector.broadcast %15 : vector<16x1xf32> to vector<16x128xf32>
      %17 = arith.subf %11, %16 : vector<16x128xf32>
      %18 = arith.mulf %17, %17 : vector<16x128xf32>
      %cst_12 = arith.constant dense<0.000000e+00> : vector<16xf32>
      %19 = vector.multi_reduction <add>, %18, %cst_12 [1] : vector<16x128xf32> to vector<16xf32>
      %20 = vector.shape_cast %19 : vector<16xf32> to vector<16x1xf32>
      %cst_13 = arith.constant 1.280000e+02 : f32
      %21 = vector.broadcast %cst_13 : f32 to vector<16x1xf32>
      %22 = arith.divf %20, %21 : vector<16x1xf32>
      %cst_14 = arith.constant 9.99999974E-6 : f32
      %23 = vector.broadcast %cst_14 : f32 to vector<16x1xf32>
      %24 = arith.addf %22, %23 : vector<16x1xf32>
      %25 = math.rsqrt %24 : vector<16x1xf32>
      %26 = vector.broadcast %25 : vector<16x1xf32> to vector<16x128xf32>
      %27 = arith.mulf %17, %26 : vector<16x128xf32>
      %c0_15 = arith.constant 0 : index
      %c0_16 = arith.constant 0 : index
      %28 = vector.load %arg3[%c0_15, %c0_16] : memref<1x128xf32, #tpu.memory_space<vmem>>, vector<1x128xf32>
      %29 = vector.broadcast %28 : vector<1x128xf32> to vector<16x128xf32>
      %30 = arith.mulf %27, %29 : vector<16x128xf32>
      %c0_17 = arith.constant 0 : index
      %c0_18 = arith.constant 0 : index
      %31 = vector.load %arg4[%c0_17, %c0_18] : memref<1x128xf32, #tpu.memory_space<vmem>>, vector<1x128xf32>
      %32 = vector.broadcast %31 : vector<1x128xf32> to vector<16x128xf32>
      %33 = arith.addf %30, %32 : vector<16x128xf32>
      %34 = arith.truncf %33 : vector<16x128xf32> to vector<16x128xbf16>
      %c0_19 = arith.constant 0 : index
      %c0_20 = arith.constant 0 : index
      %35 = vector.load %arg8[%c0_19, %c0_20] : memref<16x128xbf16, #tpu.memory_space<vmem>>, vector<16x128xbf16>
      tpu.vector_store %arg8[%c0_19, %c0_20], %34 {strides = array<i32>} : memref<16x128xbf16, #tpu.memory_space<vmem>>, vector<16x128xbf16>,
    } else {
    }
    %c0 = arith.constant 0 : index
    %c0_1 = arith.constant 0 : index
    %3 = vector.load %arg8[%c0, %c0_1] : memref<16x128xbf16, #tpu.memory_space<vmem>>, vector<16x128xbf16>
    %c0_2 = arith.constant 0 : index
    %c0_3 = arith.constant 0 : index
    %4 = vector.load %arg5[%c0_2, %c0_3] : memref<128x384xbf16, #tpu.memory_space<vmem>>, vector<128x384xbf16>
    %cst = arith.constant dense<0.000000e+00> : vector<16x384xf32>
    %5 = tpu.matmul %3, %4, %cst {dimension_numbers = #tpu.dot_dimension_numbers<[1], [0], [0], [1], [0, 0, 1, 1], [], []>} : vector<16x128xbf16>, vector<128x384xbf16>, vector<16x384xf32> -> vector<16x384xf32>
    %c0_4 = arith.constant 0 : index
    %c0_5 = arith.constant 0 : index
    %6 = vector.load %arg6[%c0_4, %c0_5] : memref<1x384xf32, #tpu.memory_space<vmem>>, vector<1x384xf32>
    %7 = vector.broadcast %6 : vector<1x384xf32> to vector<16x384xf32>
    %8 = arith.addf %5, %7 : vector<16x384xf32>
    %9 = arith.truncf %8 : vector<16x384xf32> to vector<16x384xbf16>
    %c0_6 = arith.constant 0 : index
    %c0_7 = arith.constant 0 : index
    %10 = vector.load %arg7[%c0_6, %c0_7] : memref<16x384xbf16, #tpu.memory_space<vmem>>, vector<16x384xbf16>
    tpu.vector_store %arg7[%c0_6, %c0_7], %9 {strides = array<i32>} : memref<16x384xbf16, #tpu.memory_space<vmem>>, vector<16x384xbf16>,
    return
  }
  func.func @transform_0(%arg0: i32, %arg1: i32) -> (i32, i32) {
    %c0_i32 = arith.constant 0 : i32
    %c0_i32_0 = arith.constant 0 : i32
    return %arg0, %c0_i32 : i32, i32
  }
  func.func @transform_1(%arg0: i32, %arg1: i32) -> (i32, i32) {
    %c0_i32 = arith.constant 0 : i32
    %c0_i32_0 = arith.constant 0 : i32
    %c0_i32_1 = arith.constant 0 : i32
    return %c0_i32, %c0_i32_0 : i32, i32
  }
  func.func @transform_2(%arg0: i32, %arg1: i32) -> (i32, i32) {
    %c0_i32 = arith.constant 0 : i32
    %c0_i32_0 = arith.constant 0 : i32
    %c0_i32_1 = arith.constant 0 : i32
    return %c0_i32, %c0_i32_0 : i32, i32
  }
  func.func @transform_3(%arg0: i32, %arg1: i32) -> (i32, i32) {
    %c0_i32 = arith.constant 0 : i32
    %c0_i32_0 = arith.constant 0 : i32
    return %c0_i32, %arg1 : i32, i32
  }
  func.func @transform_4(%arg0: i32, %arg1: i32) -> (i32, i32) {
    %c0_i32 = arith.constant 0 : i32
    %c0_i32_0 = arith.constant 0 : i32
    return %c0_i32, %arg1 : i32, i32
  }
  func.func @transform_5(%arg0: i32, %arg1: i32) -> (i32, i32) {
    %c0_i32 = arith.constant 0 : i32
    return %arg0, %arg1 : i32, i32
  }
}

module attributes {stable_mosaic.version = 11 : i64} {
  func.func @_linear_kernel(%arg0: i32, %arg1: i32, %arg2: i32, %arg3: memref<16x128xbf16, #tpu.memory_space<vmem>>, %arg4: memref<128x128xbf16, #tpu.memory_space<vmem>>, %arg5: memref<1x128xf32, #tpu.memory_space<vmem>>, %arg6: memref<16x128xf32, #tpu.memory_space<vmem>>, %arg7: memref<16x128xf32, #tpu.memory_space<vmem>>, %arg8: memref<16x128xf32, #tpu.memory_space<vmem>>) attributes {dimension_semantics = [#tpu.dimension_semantics<parallel>, #tpu.dimension_semantics<parallel>, #tpu.dimension_semantics<arbitrary>], iteration_bounds = array<i64: 1, 1, 1>, scalar_prefetch = 0 : i64, scratch_operands = 1 : i64, tpu.core_type = #tpu.core_type<tc>, window_params = [{transform_indices = @transform_0, window_bounds = array<i64: 16, 128>}, {transform_indices = @transform_1, window_bounds = array<i64: 128, 128>}, {transform_indices = @transform_2, window_bounds = array<i64: 1, 128>}, {transform_indices = @transform_3, window_bounds = array<i64: 16, 128>}, {transform_indices = @transform_4, window_bounds = array<i64: 16, 128>}]} {
    %c0_i32 = arith.constant 0 : i32
    %0 = arith.cmpi eq, %arg2, %c0_i32 : i32
    %1 = arith.extui %0 : i1 to i32
    %c0_i32_0 = arith.constant 0 : i32
    %2 = arith.cmpi ne, %1, %c0_i32_0 : i32
    scf.if %2 {
      %cst_10 = arith.constant 0.000000e+00 : f32
      %12 = vector.broadcast %cst_10 : f32 to vector<16x128xf32>
      %c0_11 = arith.constant 0 : index
      %c0_12 = arith.constant 0 : index
      %13 = vector.load %arg8[%c0_11, %c0_12] : memref<16x128xf32, #tpu.memory_space<vmem>>, vector<16x128xf32>
      tpu.vector_store %arg8[%c0_11, %c0_12], %12 {strides = array<i32>} : memref<16x128xf32, #tpu.memory_space<vmem>>, vector<16x128xf32>,
    } else {
    }
    %c0 = arith.constant 0 : index
    %c0_1 = arith.constant 0 : index
    %3 = vector.load %arg8[%c0, %c0_1] : memref<16x128xf32, #tpu.memory_space<vmem>>, vector<16x128xf32>
    %c0_2 = arith.constant 0 : index
    %c0_3 = arith.constant 0 : index
    %4 = vector.load %arg3[%c0_2, %c0_3] : memref<16x128xbf16, #tpu.memory_space<vmem>>, vector<16x128xbf16>
    %c0_4 = arith.constant 0 : index
    %c0_5 = arith.constant 0 : index
    %5 = vector.load %arg4[%c0_4, %c0_5] : memref<128x128xbf16, #tpu.memory_space<vmem>>, vector<128x128xbf16>
    %cst = arith.constant dense<0.000000e+00> : vector<16x128xf32>
    %6 = tpu.matmul %4, %5, %cst {dimension_numbers = #tpu.dot_dimension_numbers<[1], [0], [0], [1], [0, 0, 1, 1], [], []>} : vector<16x128xbf16>, vector<128x128xbf16>, vector<16x128xf32> -> vector<16x128xf32>
    %7 = arith.addf %3, %6 : vector<16x128xf32>
    %c0_6 = arith.constant 0 : index
    %c0_7 = arith.constant 0 : index
    %8 = vector.load %arg8[%c0_6, %c0_7] : memref<16x128xf32, #tpu.memory_space<vmem>>, vector<16x128xf32>
    tpu.vector_store %arg8[%c0_6, %c0_7], %7 {strides = array<i32>} : memref<16x128xf32, #tpu.memory_space<vmem>>, vector<16x128xf32>,
    %c0_i32_8 = arith.constant 0 : i32
    %9 = arith.cmpi eq, %arg2, %c0_i32_8 : i32
    %10 = arith.extui %9 : i1 to i32
    %c0_i32_9 = arith.constant 0 : i32
    %11 = arith.cmpi ne, %10, %c0_i32_9 : i32
    scf.if %11 {
      %c0_10 = arith.constant 0 : index
      %c0_11 = arith.constant 0 : index
      %12 = vector.load %arg8[%c0_10, %c0_11] : memref<16x128xf32, #tpu.memory_space<vmem>>, vector<16x128xf32>
      %c0_12 = arith.constant 0 : index
      %c0_13 = arith.constant 0 : index
      %13 = vector.load %arg5[%c0_12, %c0_13] : memref<1x128xf32, #tpu.memory_space<vmem>>, vector<1x128xf32>
      %14 = vector.broadcast %13 : vector<1x128xf32> to vector<16x128xf32>
      %15 = arith.addf %12, %14 : vector<16x128xf32>
      %c0_14 = arith.constant 0 : index
      %c0_15 = arith.constant 0 : index
      %16 = vector.load %arg6[%c0_14, %c0_15] : memref<16x128xf32, #tpu.memory_space<vmem>>, vector<16x128xf32>
      %17 = arith.addf %15, %16 : vector<16x128xf32>
      %c0_16 = arith.constant 0 : index
      %c0_17 = arith.constant 0 : index
      %18 = vector.load %arg7[%c0_16, %c0_17] : memref<16x128xf32, #tpu.memory_space<vmem>>, vector<16x128xf32>
      tpu.vector_store %arg7[%c0_16, %c0_17], %17 {strides = array<i32>} : memref<16x128xf32, #tpu.memory_space<vmem>>, vector<16x128xf32>,
    } else {
    }
    return
  }
  func.func @transform_0(%arg0: i32, %arg1: i32, %arg2: i32) -> (i32, i32) {
    %c0_i32 = arith.constant 0 : i32
    return %arg0, %arg2 : i32, i32
  }
  func.func @transform_1(%arg0: i32, %arg1: i32, %arg2: i32) -> (i32, i32) {
    %c0_i32 = arith.constant 0 : i32
    return %arg2, %arg1 : i32, i32
  }
  func.func @transform_2(%arg0: i32, %arg1: i32, %arg2: i32) -> (i32, i32) {
    %c0_i32 = arith.constant 0 : i32
    %c0_i32_0 = arith.constant 0 : i32
    return %c0_i32, %arg1 : i32, i32
  }
  func.func @transform_3(%arg0: i32, %arg1: i32, %arg2: i32) -> (i32, i32) {
    %c0_i32 = arith.constant 0 : i32
    return %arg0, %arg1 : i32, i32
  }
  func.func @transform_4(%arg0: i32, %arg1: i32, %arg2: i32) -> (i32, i32) {
    %c0_i32 = arith.constant 0 : i32
    return %arg0, %arg1 : i32, i32
  }
}

module attributes {stable_mosaic.version = 11 : i64} {
  func.func @_attn_kernel(%arg0: i32, %arg1: memref<1x8x384xbf16, #tpu.memory_space<vmem>>, %arg2: memref<1x8x128xbf16, #tpu.memory_space<vmem>>) attributes {dimension_semantics = [#tpu.dimension_semantics<parallel>], iteration_bounds = array<i64: 2>, scalar_prefetch = 0 : i64, scratch_operands = 0 : i64, tpu.core_type = #tpu.core_type<tc>, window_params = [{transform_indices = @transform_0, window_bounds = array<i64: 1, 8, 384>}, {transform_indices = @transform_1, window_bounds = array<i64: 1, 8, 128>}]} {
    %0 = tpu.iota {dimensions = array<i32: 0>} : vector<8x8xi32>
    %1 = tpu.iota {dimensions = array<i32: 1>} : vector<8x8xi32>
    %2 = arith.cmpi sle, %1, %0 : vector<8x8xi32>
    %c0 = arith.constant 0 : index
    %c0_0 = arith.constant 0 : index
    %c0_1 = arith.constant 0 : index
    %3 = vector.load %arg1[%c0, %c0_0, %c0_1] : memref<1x8x384xbf16, #tpu.memory_space<vmem>>, vector<1x8x32xbf16>
    %4 = vector.shape_cast %3 : vector<1x8x32xbf16> to vector<8x32xbf16>
    %c0_2 = arith.constant 0 : index
    %c0_3 = arith.constant 0 : index
    %c128 = arith.constant 128 : index
    %5 = vector.load %arg1[%c0_2, %c0_3, %c128] : memref<1x8x384xbf16, #tpu.memory_space<vmem>>, vector<1x8x32xbf16>
    %6 = vector.shape_cast %5 : vector<1x8x32xbf16> to vector<8x32xbf16>
    %c0_4 = arith.constant 0 : index
    %c0_5 = arith.constant 0 : index
    %c256 = arith.constant 256 : index
    %7 = vector.load %arg1[%c0_4, %c0_5, %c256] : memref<1x8x384xbf16, #tpu.memory_space<vmem>>, vector<1x8x32xbf16>
    %8 = vector.shape_cast %7 : vector<1x8x32xbf16> to vector<8x32xbf16>
    %9 = arith.extf %4 : vector<8x32xbf16> to vector<8x32xf32>
    %cst = arith.constant 0.176776692 : f32
    %10 = vector.broadcast %cst : f32 to vector<8x32xf32>
    %11 = arith.mulf %9, %10 : vector<8x32xf32>
    %12 = arith.truncf %11 : vector<8x32xf32> to vector<8x32xbf16>
    %cst_6 = arith.constant dense<0.000000e+00> : vector<8x8xf32>
    %13 = tpu.matmul %12, %6, %cst_6 {dimension_numbers = #tpu.dot_dimension_numbers<[1], [1], [0], [0], [0, 0, 1, 0], [], []>} : vector<8x32xbf16>, vector<8x32xbf16>, vector<8x8xf32> -> vector<8x8xf32>
    %cst_7 = arith.constant -1.000000e+30 : f32
    %14 = vector.broadcast %cst_7 : f32 to vector<8x8xf32>
    %15 = arith.select %2, %13, %14 : vector<8x8xi1>, vector<8x8xf32>
    %cst_8 = arith.constant dense<0xFF800000> : vector<8xf32>
    %16 = vector.multi_reduction <maximumf>, %15, %cst_8 [1] : vector<8x8xf32> to vector<8xf32>
    %17 = vector.shape_cast %16 : vector<8xf32> to vector<8x1xf32>
    %18 = vector.broadcast %17 : vector<8x1xf32> to vector<8x8xf32>
    %19 = arith.subf %15, %18 : vector<8x8xf32>
    %20 = math.exp %19 : vector<8x8xf32>
    %cst_9 = arith.constant dense<0.000000e+00> : vector<8xf32>
    %21 = vector.multi_reduction <add>, %20, %cst_9 [1] : vector<8x8xf32> to vector<8xf32>
    %22 = vector.shape_cast %21 : vector<8xf32> to vector<8x1xf32>
    %23 = tpu.reciprocal %22 {approx = true} : vector<8x1xf32> -> vector<8x1xf32>
    %24 = vector.broadcast %23 : vector<8x1xf32> to vector<8x8xf32>
    %25 = arith.mulf %20, %24 : vector<8x8xf32>
    %26 = arith.truncf %25 : vector<8x8xf32> to vector<8x8xbf16>
    %cst_10 = arith.constant dense<0.000000e+00> : vector<8x32xf32>
    %27 = tpu.matmul %26, %8, %cst_10 {dimension_numbers = #tpu.dot_dimension_numbers<[1], [0], [0], [1], [0, 0, 1, 1], [], []>} : vector<8x8xbf16>, vector<8x32xbf16>, vector<8x32xf32> -> vector<8x32xf32>
    %28 = arith.truncf %27 : vector<8x32xf32> to vector<8x32xbf16>
    %c0_11 = arith.constant 0 : index
    %c0_12 = arith.constant 0 : index
    %c0_13 = arith.constant 0 : index
    %29 = vector.load %arg2[%c0_11, %c0_12, %c0_13] : memref<1x8x128xbf16, #tpu.memory_space<vmem>>, vector<1x8x32xbf16>
    %30 = vector.shape_cast %29 : vector<1x8x32xbf16> to vector<8x32xbf16>
    %31 = vector.shape_cast %28 : vector<8x32xbf16> to vector<1x8x32xbf16>
    tpu.vector_store %arg2[%c0_11, %c0_12, %c0_13], %31 {strides = array<i32>} : memref<1x8x128xbf16, #tpu.memory_space<vmem>>, vector<1x8x32xbf16>,
    %c0_14 = arith.constant 0 : index
    %c0_15 = arith.constant 0 : index
    %c32 = arith.constant 32 : index
    %32 = vector.load %arg1[%c0_14, %c0_15, %c32] : memref<1x8x384xbf16, #tpu.memory_space<vmem>>, vector<1x8x32xbf16>
    %33 = vector.shape_cast %32 : vector<1x8x32xbf16> to vector<8x32xbf16>
    %c0_16 = arith.constant 0 : index
    %c0_17 = arith.constant 0 : index
    %c160 = arith.constant 160 : index
    %34 = vector.load %arg1[%c0_16, %c0_17, %c160] : memref<1x8x384xbf16, #tpu.memory_space<vmem>>, vector<1x8x32xbf16>
    %35 = vector.shape_cast %34 : vector<1x8x32xbf16> to vector<8x32xbf16>
    %c0_18 = arith.constant 0 : index
    %c0_19 = arith.constant 0 : index
    %c288 = arith.constant 288 : index
    %36 = vector.load %arg1[%c0_18, %c0_19, %c288] : memref<1x8x384xbf16, #tpu.memory_space<vmem>>, vector<1x8x32xbf16>
    %37 = vector.shape_cast %36 : vector<1x8x32xbf16> to vector<8x32xbf16>
    %38 = arith.extf %33 : vector<8x32xbf16> to vector<8x32xf32>
    %cst_20 = arith.constant 0.176776692 : f32
    %39 = vector.broadcast %cst_20 : f32 to vector<8x32xf32>
    %40 = arith.mulf %38, %39 : vector<8x32xf32>
    %41 = arith.truncf %40 : vector<8x32xf32> to vector<8x32xbf16>
    %cst_21 = arith.constant dense<0.000000e+00> : vector<8x8xf32>
    %42 = tpu.matmul %41, %35, %cst_21 {dimension_numbers = #tpu.dot_dimension_numbers<[1], [1], [0], [0], [0, 0, 1, 0], [], []>} : vector<8x32xbf16>, vector<8x32xbf16>, vector<8x8xf32> -> vector<8x8xf32>
    %cst_22 = arith.constant -1.000000e+30 : f32
    %43 = vector.broadcast %cst_22 : f32 to vector<8x8xf32>
    %44 = arith.select %2, %42, %43 : vector<8x8xi1>, vector<8x8xf32>
    %cst_23 = arith.constant dense<0xFF800000> : vector<8xf32>
    %45 = vector.multi_reduction <maximumf>, %44, %cst_23 [1] : vector<8x8xf32> to vector<8xf32>
    %46 = vector.shape_cast %45 : vector<8xf32> to vector<8x1xf32>
    %47 = vector.broadcast %46 : vector<8x1xf32> to vector<8x8xf32>
    %48 = arith.subf %44, %47 : vector<8x8xf32>
    %49 = math.exp %48 : vector<8x8xf32>
    %cst_24 = arith.constant dense<0.000000e+00> : vector<8xf32>
    %50 = vector.multi_reduction <add>, %49, %cst_24 [1] : vector<8x8xf32> to vector<8xf32>
    %51 = vector.shape_cast %50 : vector<8xf32> to vector<8x1xf32>
    %52 = tpu.reciprocal %51 {approx = true} : vector<8x1xf32> -> vector<8x1xf32>
    %53 = vector.broadcast %52 : vector<8x1xf32> to vector<8x8xf32>
    %54 = arith.mulf %49, %53 : vector<8x8xf32>
    %55 = arith.truncf %54 : vector<8x8xf32> to vector<8x8xbf16>
    %cst_25 = arith.constant dense<0.000000e+00> : vector<8x32xf32>
    %56 = tpu.matmul %55, %37, %cst_25 {dimension_numbers = #tpu.dot_dimension_numbers<[1], [0], [0], [1], [0, 0, 1, 1], [], []>} : vector<8x8xbf16>, vector<8x32xbf16>, vector<8x32xf32> -> vector<8x32xf32>
    %57 = arith.truncf %56 : vector<8x32xf32> to vector<8x32xbf16>
    %c0_26 = arith.constant 0 : index
    %c0_27 = arith.constant 0 : index
    %c32_28 = arith.constant 32 : index
    %58 = vector.load %arg2[%c0_26, %c0_27, %c32_28] : memref<1x8x128xbf16, #tpu.memory_space<vmem>>, vector<1x8x32xbf16>
    %59 = vector.shape_cast %58 : vector<1x8x32xbf16> to vector<8x32xbf16>
    %60 = vector.shape_cast %57 : vector<8x32xbf16> to vector<1x8x32xbf16>
    tpu.vector_store %arg2[%c0_26, %c0_27, %c32_28], %60 {strides = array<i32>} : memref<1x8x128xbf16, #tpu.memory_space<vmem>>, vector<1x8x32xbf16>,
    %c0_29 = arith.constant 0 : index
    %c0_30 = arith.constant 0 : index
    %c64 = arith.constant 64 : index
    %61 = vector.load %arg1[%c0_29, %c0_30, %c64] : memref<1x8x384xbf16, #tpu.memory_space<vmem>>, vector<1x8x32xbf16>
    %62 = vector.shape_cast %61 : vector<1x8x32xbf16> to vector<8x32xbf16>
    %c0_31 = arith.constant 0 : index
    %c0_32 = arith.constant 0 : index
    %c192 = arith.constant 192 : index
    %63 = vector.load %arg1[%c0_31, %c0_32, %c192] : memref<1x8x384xbf16, #tpu.memory_space<vmem>>, vector<1x8x32xbf16>
    %64 = vector.shape_cast %63 : vector<1x8x32xbf16> to vector<8x32xbf16>
    %c0_33 = arith.constant 0 : index
    %c0_34 = arith.constant 0 : index
    %c320 = arith.constant 320 : index
    %65 = vector.load %arg1[%c0_33, %c0_34, %c320] : memref<1x8x384xbf16, #tpu.memory_space<vmem>>, vector<1x8x32xbf16>
    %66 = vector.shape_cast %65 : vector<1x8x32xbf16> to vector<8x32xbf16>
    %67 = arith.extf %62 : vector<8x32xbf16> to vector<8x32xf32>
    %cst_35 = arith.constant 0.176776692 : f32
    %68 = vector.broadcast %cst_35 : f32 to vector<8x32xf32>
    %69 = arith.mulf %67, %68 : vector<8x32xf32>
    %70 = arith.truncf %69 : vector<8x32xf32> to vector<8x32xbf16>
    %cst_36 = arith.constant dense<0.000000e+00> : vector<8x8xf32>
    %71 = tpu.matmul %70, %64, %cst_36 {dimension_numbers = #tpu.dot_dimension_numbers<[1], [1], [0], [0], [0, 0, 1, 0], [], []>} : vector<8x32xbf16>, vector<8x32xbf16>, vector<8x8xf32> -> vector<8x8xf32>
    %cst_37 = arith.constant -1.000000e+30 : f32
    %72 = vector.broadcast %cst_37 : f32 to vector<8x8xf32>
    %73 = arith.select %2, %71, %72 : vector<8x8xi1>, vector<8x8xf32>
    %cst_38 = arith.constant dense<0xFF800000> : vector<8xf32>
    %74 = vector.multi_reduction <maximumf>, %73, %cst_38 [1] : vector<8x8xf32> to vector<8xf32>
    %75 = vector.shape_cast %74 : vector<8xf32> to vector<8x1xf32>
    %76 = vector.broadcast %75 : vector<8x1xf32> to vector<8x8xf32>
    %77 = arith.subf %73, %76 : vector<8x8xf32>
    %78 = math.exp %77 : vector<8x8xf32>
    %cst_39 = arith.constant dense<0.000000e+00> : vector<8xf32>
    %79 = vector.multi_reduction <add>, %78, %cst_39 [1] : vector<8x8xf32> to vector<8xf32>
    %80 = vector.shape_cast %79 : vector<8xf32> to vector<8x1xf32>
    %81 = tpu.reciprocal %80 {approx = true} : vector<8x1xf32> -> vector<8x1xf32>
    %82 = vector.broadcast %81 : vector<8x1xf32> to vector<8x8xf32>
    %83 = arith.mulf %78, %82 : vector<8x8xf32>
    %84 = arith.truncf %83 : vector<8x8xf32> to vector<8x8xbf16>
    %cst_40 = arith.constant dense<0.000000e+00> : vector<8x32xf32>
    %85 = tpu.matmul %84, %66, %cst_40 {dimension_numbers = #tpu.dot_dimension_numbers<[1], [0], [0], [1], [0, 0, 1, 1], [], []>} : vector<8x8xbf16>, vector<8x32xbf16>, vector<8x32xf32> -> vector<8x32xf32>
    %86 = arith.truncf %85 : vector<8x32xf32> to vector<8x32xbf16>
    %c0_41 = arith.constant 0 : index
    %c0_42 = arith.constant 0 : index
    %c64_43 = arith.constant 64 : index
    %87 = vector.load %arg2[%c0_41, %c0_42, %c64_43] : memref<1x8x128xbf16, #tpu.memory_space<vmem>>, vector<1x8x32xbf16>
    %88 = vector.shape_cast %87 : vector<1x8x32xbf16> to vector<8x32xbf16>
    %89 = vector.shape_cast %86 : vector<8x32xbf16> to vector<1x8x32xbf16>
    tpu.vector_store %arg2[%c0_41, %c0_42, %c64_43], %89 {strides = array<i32>} : memref<1x8x128xbf16, #tpu.memory_space<vmem>>, vector<1x8x32xbf16>,
    %c0_44 = arith.constant 0 : index
    %c0_45 = arith.constant 0 : index
    %c96 = arith.constant 96 : index
    %90 = vector.load %arg1[%c0_44, %c0_45, %c96] : memref<1x8x384xbf16, #tpu.memory_space<vmem>>, vector<1x8x32xbf16>
    %91 = vector.shape_cast %90 : vector<1x8x32xbf16> to vector<8x32xbf16>
    %c0_46 = arith.constant 0 : index
    %c0_47 = arith.constant 0 : index
    %c224 = arith.constant 224 : index
    %92 = vector.load %arg1[%c0_46, %c0_47, %c224] : memref<1x8x384xbf16, #tpu.memory_space<vmem>>, vector<1x8x32xbf16>
    %93 = vector.shape_cast %92 : vector<1x8x32xbf16> to vector<8x32xbf16>
    %c0_48 = arith.constant 0 : index
    %c0_49 = arith.constant 0 : index
    %c352 = arith.constant 352 : index
    %94 = vector.load %arg1[%c0_48, %c0_49, %c352] : memref<1x8x384xbf16, #tpu.memory_space<vmem>>, vector<1x8x32xbf16>
    %95 = vector.shape_cast %94 : vector<1x8x32xbf16> to vector<8x32xbf16>
    %96 = arith.extf %91 : vector<8x32xbf16> to vector<8x32xf32>
    %cst_50 = arith.constant 0.176776692 : f32
    %97 = vector.broadcast %cst_50 : f32 to vector<8x32xf32>
    %98 = arith.mulf %96, %97 : vector<8x32xf32>
    %99 = arith.truncf %98 : vector<8x32xf32> to vector<8x32xbf16>
    %cst_51 = arith.constant dense<0.000000e+00> : vector<8x8xf32>
    %100 = tpu.matmul %99, %93, %cst_51 {dimension_numbers = #tpu.dot_dimension_numbers<[1], [1], [0], [0], [0, 0, 1, 0], [], []>} : vector<8x32xbf16>, vector<8x32xbf16>, vector<8x8xf32> -> vector<8x8xf32>
    %cst_52 = arith.constant -1.000000e+30 : f32
    %101 = vector.broadcast %cst_52 : f32 to vector<8x8xf32>
    %102 = arith.select %2, %100, %101 : vector<8x8xi1>, vector<8x8xf32>
    %cst_53 = arith.constant dense<0xFF800000> : vector<8xf32>
    %103 = vector.multi_reduction <maximumf>, %102, %cst_53 [1] : vector<8x8xf32> to vector<8xf32>
    %104 = vector.shape_cast %103 : vector<8xf32> to vector<8x1xf32>
    %105 = vector.broadcast %104 : vector<8x1xf32> to vector<8x8xf32>
    %106 = arith.subf %102, %105 : vector<8x8xf32>
    %107 = math.exp %106 : vector<8x8xf32>
    %cst_54 = arith.constant dense<0.000000e+00> : vector<8xf32>
    %108 = vector.multi_reduction <add>, %107, %cst_54 [1] : vector<8x8xf32> to vector<8xf32>
    %109 = vector.shape_cast %108 : vector<8xf32> to vector<8x1xf32>
    %110 = tpu.reciprocal %109 {approx = true} : vector<8x1xf32> -> vector<8x1xf32>
    %111 = vector.broadcast %110 : vector<8x1xf32> to vector<8x8xf32>
    %112 = arith.mulf %107, %111 : vector<8x8xf32>
    %113 = arith.truncf %112 : vector<8x8xf32> to vector<8x8xbf16>
    %cst_55 = arith.constant dense<0.000000e+00> : vector<8x32xf32>
    %114 = tpu.matmul %113, %95, %cst_55 {dimension_numbers = #tpu.dot_dimension_numbers<[1], [0], [0], [1], [0, 0, 1, 1], [], []>} : vector<8x8xbf16>, vector<8x32xbf16>, vector<8x32xf32> -> vector<8x32xf32>
    %115 = arith.truncf %114 : vector<8x32xf32> to vector<8x32xbf16>
    %c0_56 = arith.constant 0 : index
    %c0_57 = arith.constant 0 : index
    %c96_58 = arith.constant 96 : index
    %116 = vector.load %arg2[%c0_56, %c0_57, %c96_58] : memref<1x8x128xbf16, #tpu.memory_space<vmem>>, vector<1x8x32xbf16>
    %117 = vector.shape_cast %116 : vector<1x8x32xbf16> to vector<8x32xbf16>
    %118 = vector.shape_cast %115 : vector<8x32xbf16> to vector<1x8x32xbf16>
    tpu.vector_store %arg2[%c0_56, %c0_57, %c96_58], %118 {strides = array<i32>} : memref<1x8x128xbf16, #tpu.memory_space<vmem>>, vector<1x8x32xbf16>,
    return
  }
  func.func @transform_0(%arg0: i32) -> (i32, i32, i32) {
    %c0_i32 = arith.constant 0 : i32
    %c0_i32_0 = arith.constant 0 : i32
    %c0_i32_1 = arith.constant 0 : i32
    return %arg0, %c0_i32, %c0_i32_0 : i32, i32, i32
  }
  func.func @transform_1(%arg0: i32) -> (i32, i32, i32) {
    %c0_i32 = arith.constant 0 : i32
    %c0_i32_0 = arith.constant 0 : i32
    %c0_i32_1 = arith.constant 0 : i32
    return %arg0, %c0_i32, %c0_i32_0 : i32, i32, i32
  }
}

module attributes {stable_mosaic.version = 11 : i64} {
  func.func @_ln_linear_kernel(%arg0: i32, %arg1: i32, %arg2: memref<16x128xf32, #tpu.memory_space<vmem>>, %arg3: memref<1x128xf32, #tpu.memory_space<vmem>>, %arg4: memref<1x128xf32, #tpu.memory_space<vmem>>, %arg5: memref<128x512xbf16, #tpu.memory_space<vmem>>, %arg6: memref<1x512xf32, #tpu.memory_space<vmem>>, %arg7: memref<16x512xbf16, #tpu.memory_space<vmem>>, %arg8: memref<16x128xbf16, #tpu.memory_space<vmem>>) attributes {dimension_semantics = [#tpu.dimension_semantics<parallel>, #tpu.dimension_semantics<arbitrary>], iteration_bounds = array<i64: 1, 1>, scalar_prefetch = 0 : i64, scratch_operands = 1 : i64, tpu.core_type = #tpu.core_type<tc>, window_params = [{transform_indices = @transform_0, window_bounds = array<i64: 16, 128>}, {pipeline_mode = #tpu.pipeline_mode<synchronous>, transform_indices = @transform_1, window_bounds = array<i64: 1, 128>}, {pipeline_mode = #tpu.pipeline_mode<synchronous>, transform_indices = @transform_2, window_bounds = array<i64: 1, 128>}, {transform_indices = @transform_3, window_bounds = array<i64: 128, 512>}, {transform_indices = @transform_4, window_bounds = array<i64: 1, 512>}, {transform_indices = @transform_5, window_bounds = array<i64: 16, 512>}]} {
    %c0_i32 = arith.constant 0 : i32
    %0 = arith.cmpi eq, %arg1, %c0_i32 : i32
    %1 = arith.extui %0 : i1 to i32
    %c0_i32_0 = arith.constant 0 : i32
    %2 = arith.cmpi ne, %1, %c0_i32_0 : i32
    scf.if %2 {
      %c0_12 = arith.constant 0 : index
      %c0_13 = arith.constant 0 : index
      %24 = vector.load %arg2[%c0_12, %c0_13] : memref<16x128xf32, #tpu.memory_space<vmem>>, vector<16x128xf32>
      %cst_14 = arith.constant dense<0.000000e+00> : vector<16xf32>
      %25 = vector.multi_reduction <add>, %24, %cst_14 [1] : vector<16x128xf32> to vector<16xf32>
      %26 = vector.shape_cast %25 : vector<16xf32> to vector<16x1xf32>
      %cst_15 = arith.constant 1.280000e+02 : f32
      %27 = vector.broadcast %cst_15 : f32 to vector<16x1xf32>
      %28 = arith.divf %26, %27 : vector<16x1xf32>
      %29 = vector.broadcast %28 : vector<16x1xf32> to vector<16x128xf32>
      %30 = arith.subf %24, %29 : vector<16x128xf32>
      %31 = arith.mulf %30, %30 : vector<16x128xf32>
      %cst_16 = arith.constant dense<0.000000e+00> : vector<16xf32>
      %32 = vector.multi_reduction <add>, %31, %cst_16 [1] : vector<16x128xf32> to vector<16xf32>
      %33 = vector.shape_cast %32 : vector<16xf32> to vector<16x1xf32>
      %cst_17 = arith.constant 1.280000e+02 : f32
      %34 = vector.broadcast %cst_17 : f32 to vector<16x1xf32>
      %35 = arith.divf %33, %34 : vector<16x1xf32>
      %cst_18 = arith.constant 9.99999974E-6 : f32
      %36 = vector.broadcast %cst_18 : f32 to vector<16x1xf32>
      %37 = arith.addf %35, %36 : vector<16x1xf32>
      %38 = math.rsqrt %37 : vector<16x1xf32>
      %39 = vector.broadcast %38 : vector<16x1xf32> to vector<16x128xf32>
      %40 = arith.mulf %30, %39 : vector<16x128xf32>
      %c0_19 = arith.constant 0 : index
      %c0_20 = arith.constant 0 : index
      %41 = vector.load %arg3[%c0_19, %c0_20] : memref<1x128xf32, #tpu.memory_space<vmem>>, vector<1x128xf32>
      %42 = vector.broadcast %41 : vector<1x128xf32> to vector<16x128xf32>
      %43 = arith.mulf %40, %42 : vector<16x128xf32>
      %c0_21 = arith.constant 0 : index
      %c0_22 = arith.constant 0 : index
      %44 = vector.load %arg4[%c0_21, %c0_22] : memref<1x128xf32, #tpu.memory_space<vmem>>, vector<1x128xf32>
      %45 = vector.broadcast %44 : vector<1x128xf32> to vector<16x128xf32>
      %46 = arith.addf %43, %45 : vector<16x128xf32>
      %47 = arith.truncf %46 : vector<16x128xf32> to vector<16x128xbf16>
      %c0_23 = arith.constant 0 : index
      %c0_24 = arith.constant 0 : index
      %48 = vector.load %arg8[%c0_23, %c0_24] : memref<16x128xbf16, #tpu.memory_space<vmem>>, vector<16x128xbf16>
      tpu.vector_store %arg8[%c0_23, %c0_24], %47 {strides = array<i32>} : memref<16x128xbf16, #tpu.memory_space<vmem>>, vector<16x128xbf16>,
    } else {
    }
    %c0 = arith.constant 0 : index
    %c0_1 = arith.constant 0 : index
    %3 = vector.load %arg8[%c0, %c0_1] : memref<16x128xbf16, #tpu.memory_space<vmem>>, vector<16x128xbf16>
    %c0_2 = arith.constant 0 : index
    %c0_3 = arith.constant 0 : index
    %4 = vector.load %arg5[%c0_2, %c0_3] : memref<128x512xbf16, #tpu.memory_space<vmem>>, vector<128x512xbf16>
    %cst = arith.constant dense<0.000000e+00> : vector<16x512xf32>
    %5 = tpu.matmul %3, %4, %cst {dimension_numbers = #tpu.dot_dimension_numbers<[1], [0], [0], [1], [0, 0, 1, 1], [], []>} : vector<16x128xbf16>, vector<128x512xbf16>, vector<16x512xf32> -> vector<16x512xf32>
    %c0_4 = arith.constant 0 : index
    %c0_5 = arith.constant 0 : index
    %6 = vector.load %arg6[%c0_4, %c0_5] : memref<1x512xf32, #tpu.memory_space<vmem>>, vector<1x512xf32>
    %7 = vector.broadcast %6 : vector<1x512xf32> to vector<16x512xf32>
    %8 = arith.addf %5, %7 : vector<16x512xf32>
    %cst_6 = arith.constant 5.000000e-01 : f32
    %9 = vector.broadcast %cst_6 : f32 to vector<16x512xf32>
    %10 = arith.mulf %9, %8 : vector<16x512xf32>
    %cst_7 = arith.constant 4.471500e-02 : f32
    %11 = vector.broadcast %cst_7 : f32 to vector<16x512xf32>
    %12 = arith.mulf %11, %8 : vector<16x512xf32>
    %13 = arith.mulf %12, %8 : vector<16x512xf32>
    %14 = arith.mulf %13, %8 : vector<16x512xf32>
    %15 = arith.addf %8, %14 : vector<16x512xf32>
    %cst_8 = arith.constant 0.797884583 : f32
    %16 = vector.broadcast %cst_8 : f32 to vector<16x512xf32>
    %17 = arith.mulf %16, %15 : vector<16x512xf32>
    %18 = math.tanh %17 : vector<16x512xf32>
    %cst_9 = arith.constant 1.000000e+00 : f32
    %19 = vector.broadcast %cst_9 : f32 to vector<16x512xf32>
    %20 = arith.addf %19, %18 : vector<16x512xf32>
    %21 = arith.mulf %10, %20 : vector<16x512xf32>
    %22 = arith.truncf %21 : vector<16x512xf32> to vector<16x512xbf16>
    %c0_10 = arith.constant 0 : index
    %c0_11 = arith.constant 0 : index
    %23 = vector.load %arg7[%c0_10, %c0_11] : memref<16x512xbf16, #tpu.memory_space<vmem>>, vector<16x512xbf16>
    tpu.vector_store %arg7[%c0_10, %c0_11], %22 {strides = array<i32>} : memref<16x512xbf16, #tpu.memory_space<vmem>>, vector<16x512xbf16>,
    return
  }
  func.func @transform_0(%arg0: i32, %arg1: i32) -> (i32, i32) {
    %c0_i32 = arith.constant 0 : i32
    %c0_i32_0 = arith.constant 0 : i32
    return %arg0, %c0_i32 : i32, i32
  }
  func.func @transform_1(%arg0: i32, %arg1: i32) -> (i32, i32) {
    %c0_i32 = arith.constant 0 : i32
    %c0_i32_0 = arith.constant 0 : i32
    %c0_i32_1 = arith.constant 0 : i32
    return %c0_i32, %c0_i32_0 : i32, i32
  }
  func.func @transform_2(%arg0: i32, %arg1: i32) -> (i32, i32) {
    %c0_i32 = arith.constant 0 : i32
    %c0_i32_0 = arith.constant 0 : i32
    %c0_i32_1 = arith.constant 0 : i32
    return %c0_i32, %c0_i32_0 : i32, i32
  }
  func.func @transform_3(%arg0: i32, %arg1: i32) -> (i32, i32) {
    %c0_i32 = arith.constant 0 : i32
    %c0_i32_0 = arith.constant 0 : i32
    return %c0_i32, %arg1 : i32, i32
  }
  func.func @transform_4(%arg0: i32, %arg1: i32) -> (i32, i32) {
    %c0_i32 = arith.constant 0 : i32
    %c0_i32_0 = arith.constant 0 : i32
    return %c0_i32, %arg1 : i32, i32
  }
  func.func @transform_5(%arg0: i32, %arg1: i32) -> (i32, i32) {
    %c0_i32 = arith.constant 0 : i32
    return %arg0, %arg1 : i32, i32
  }
}

module attributes {stable_mosaic.version = 11 : i64} {
  func.func @_linear_kernel(%arg0: i32, %arg1: i32, %arg2: i32, %arg3: memref<16x512xbf16, #tpu.memory_space<vmem>>, %arg4: memref<512x128xbf16, #tpu.memory_space<vmem>>, %arg5: memref<1x128xf32, #tpu.memory_space<vmem>>, %arg6: memref<16x128xf32, #tpu.memory_space<vmem>>, %arg7: memref<16x128xf32, #tpu.memory_space<vmem>>, %arg8: memref<16x128xf32, #tpu.memory_space<vmem>>) attributes {dimension_semantics = [#tpu.dimension_semantics<parallel>, #tpu.dimension_semantics<parallel>, #tpu.dimension_semantics<arbitrary>], iteration_bounds = array<i64: 1, 1, 1>, scalar_prefetch = 0 : i64, scratch_operands = 1 : i64, tpu.core_type = #tpu.core_type<tc>, window_params = [{transform_indices = @transform_0, window_bounds = array<i64: 16, 512>}, {transform_indices = @transform_1, window_bounds = array<i64: 512, 128>}, {transform_indices = @transform_2, window_bounds = array<i64: 1, 128>}, {transform_indices = @transform_3, window_bounds = array<i64: 16, 128>}, {transform_indices = @transform_4, window_bounds = array<i64: 16, 128>}]} {
    %c0_i32 = arith.constant 0 : i32
    %0 = arith.cmpi eq, %arg2, %c0_i32 : i32
    %1 = arith.extui %0 : i1 to i32
    %c0_i32_0 = arith.constant 0 : i32
    %2 = arith.cmpi ne, %1, %c0_i32_0 : i32
    scf.if %2 {
      %cst_10 = arith.constant 0.000000e+00 : f32
      %12 = vector.broadcast %cst_10 : f32 to vector<16x128xf32>
      %c0_11 = arith.constant 0 : index
      %c0_12 = arith.constant 0 : index
      %13 = vector.load %arg8[%c0_11, %c0_12] : memref<16x128xf32, #tpu.memory_space<vmem>>, vector<16x128xf32>
      tpu.vector_store %arg8[%c0_11, %c0_12], %12 {strides = array<i32>} : memref<16x128xf32, #tpu.memory_space<vmem>>, vector<16x128xf32>,
    } else {
    }
    %c0 = arith.constant 0 : index
    %c0_1 = arith.constant 0 : index
    %3 = vector.load %arg8[%c0, %c0_1] : memref<16x128xf32, #tpu.memory_space<vmem>>, vector<16x128xf32>
    %c0_2 = arith.constant 0 : index
    %c0_3 = arith.constant 0 : index
    %4 = vector.load %arg3[%c0_2, %c0_3] : memref<16x512xbf16, #tpu.memory_space<vmem>>, vector<16x512xbf16>
    %c0_4 = arith.constant 0 : index
    %c0_5 = arith.constant 0 : index
    %5 = vector.load %arg4[%c0_4, %c0_5] : memref<512x128xbf16, #tpu.memory_space<vmem>>, vector<512x128xbf16>
    %cst = arith.constant dense<0.000000e+00> : vector<16x128xf32>
    %6 = tpu.matmul %4, %5, %cst {dimension_numbers = #tpu.dot_dimension_numbers<[1], [0], [0], [1], [0, 0, 1, 1], [], []>} : vector<16x512xbf16>, vector<512x128xbf16>, vector<16x128xf32> -> vector<16x128xf32>
    %7 = arith.addf %3, %6 : vector<16x128xf32>
    %c0_6 = arith.constant 0 : index
    %c0_7 = arith.constant 0 : index
    %8 = vector.load %arg8[%c0_6, %c0_7] : memref<16x128xf32, #tpu.memory_space<vmem>>, vector<16x128xf32>
    tpu.vector_store %arg8[%c0_6, %c0_7], %7 {strides = array<i32>} : memref<16x128xf32, #tpu.memory_space<vmem>>, vector<16x128xf32>,
    %c0_i32_8 = arith.constant 0 : i32
    %9 = arith.cmpi eq, %arg2, %c0_i32_8 : i32
    %10 = arith.extui %9 : i1 to i32
    %c0_i32_9 = arith.constant 0 : i32
    %11 = arith.cmpi ne, %10, %c0_i32_9 : i32
    scf.if %11 {
      %c0_10 = arith.constant 0 : index
      %c0_11 = arith.constant 0 : index
      %12 = vector.load %arg8[%c0_10, %c0_11] : memref<16x128xf32, #tpu.memory_space<vmem>>, vector<16x128xf32>
      %c0_12 = arith.constant 0 : index
      %c0_13 = arith.constant 0 : index
      %13 = vector.load %arg5[%c0_12, %c0_13] : memref<1x128xf32, #tpu.memory_space<vmem>>, vector<1x128xf32>
      %14 = vector.broadcast %13 : vector<1x128xf32> to vector<16x128xf32>
      %15 = arith.addf %12, %14 : vector<16x128xf32>
      %c0_14 = arith.constant 0 : index
      %c0_15 = arith.constant 0 : index
      %16 = vector.load %arg6[%c0_14, %c0_15] : memref<16x128xf32, #tpu.memory_space<vmem>>, vector<16x128xf32>
      %17 = arith.addf %15, %16 : vector<16x128xf32>
      %c0_16 = arith.constant 0 : index
      %c0_17 = arith.constant 0 : index
      %18 = vector.load %arg7[%c0_16, %c0_17] : memref<16x128xf32, #tpu.memory_space<vmem>>, vector<16x128xf32>
      tpu.vector_store %arg7[%c0_16, %c0_17], %17 {strides = array<i32>} : memref<16x128xf32, #tpu.memory_space<vmem>>, vector<16x128xf32>,
    } else {
    }
    return
  }
  func.func @transform_0(%arg0: i32, %arg1: i32, %arg2: i32) -> (i32, i32) {
    %c0_i32 = arith.constant 0 : i32
    return %arg0, %arg2 : i32, i32
  }
  func.func @transform_1(%arg0: i32, %arg1: i32, %arg2: i32) -> (i32, i32) {
    %c0_i32 = arith.constant 0 : i32
    return %arg2, %arg1 : i32, i32
  }
  func.func @transform_2(%arg0: i32, %arg1: i32, %arg2: i32) -> (i32, i32) {
    %c0_i32 = arith.constant 0 : i32
    %c0_i32_0 = arith.constant 0 : i32
    return %c0_i32, %arg1 : i32, i32
  }
  func.func @transform_3(%arg0: i32, %arg1: i32, %arg2: i32) -> (i32, i32) {
    %c0_i32 = arith.constant 0 : i32
    return %arg0, %arg1 : i32, i32
  }
  func.func @transform_4(%arg0: i32, %arg1: i32, %arg2: i32) -> (i32, i32) {
    %c0_i32 = arith.constant 0 : i32
    return %arg0, %arg1 : i32, i32
  }
}

module attributes {stable_mosaic.version = 11 : i64} {
  func.func @_linear_kernel(%arg0: i32, %arg1: i32, %arg2: i32, %arg3: memref<16x128xbf16, #tpu.memory_space<vmem>>, %arg4: memref<128x128xbf16, #tpu.memory_space<vmem>>, %arg5: memref<1x128xf32, #tpu.memory_space<vmem>>, %arg6: memref<16x128xf32, #tpu.memory_space<vmem>>, %arg7: memref<16x128xf32, #tpu.memory_space<vmem>>, %arg8: memref<16x128xf32, #tpu.memory_space<vmem>>) attributes {dimension_semantics = [#tpu.dimension_semantics<parallel>, #tpu.dimension_semantics<parallel>, #tpu.dimension_semantics<arbitrary>], iteration_bounds = array<i64: 1, 1, 1>, scalar_prefetch = 0 : i64, scratch_operands = 1 : i64, tpu.core_type = #tpu.core_type<tc>, window_params = [{transform_indices = @transform_0, window_bounds = array<i64: 16, 128>}, {transform_indices = @transform_1, window_bounds = array<i64: 128, 128>}, {transform_indices = @transform_2, window_bounds = array<i64: 1, 128>}, {transform_indices = @transform_3, window_bounds = array<i64: 16, 128>}, {transform_indices = @transform_4, window_bounds = array<i64: 16, 128>}]} {
    %c0_i32 = arith.constant 0 : i32
    %0 = arith.cmpi eq, %arg2, %c0_i32 : i32
    %1 = arith.extui %0 : i1 to i32
    %c0_i32_0 = arith.constant 0 : i32
    %2 = arith.cmpi ne, %1, %c0_i32_0 : i32
    scf.if %2 {
      %cst_10 = arith.constant 0.000000e+00 : f32
      %12 = vector.broadcast %cst_10 : f32 to vector<16x128xf32>
      %c0_11 = arith.constant 0 : index
      %c0_12 = arith.constant 0 : index
      %13 = vector.load %arg8[%c0_11, %c0_12] : memref<16x128xf32, #tpu.memory_space<vmem>>, vector<16x128xf32>
      tpu.vector_store %arg8[%c0_11, %c0_12], %12 {strides = array<i32>} : memref<16x128xf32, #tpu.memory_space<vmem>>, vector<16x128xf32>,
    } else {
    }
    %c0 = arith.constant 0 : index
    %c0_1 = arith.constant 0 : index
    %3 = vector.load %arg8[%c0, %c0_1] : memref<16x128xf32, #tpu.memory_space<vmem>>, vector<16x128xf32>
    %c0_2 = arith.constant 0 : index
    %c0_3 = arith.constant 0 : index
    %4 = vector.load %arg3[%c0_2, %c0_3] : memref<16x128xbf16, #tpu.memory_space<vmem>>, vector<16x128xbf16>
    %c0_4 = arith.constant 0 : index
    %c0_5 = arith.constant 0 : index
    %5 = vector.load %arg4[%c0_4, %c0_5] : memref<128x128xbf16, #tpu.memory_space<vmem>>, vector<128x128xbf16>
    %cst = arith.constant dense<0.000000e+00> : vector<16x128xf32>
    %6 = tpu.matmul %4, %5, %cst {dimension_numbers = #tpu.dot_dimension_numbers<[1], [0], [0], [1], [0, 0, 1, 1], [], []>} : vector<16x128xbf16>, vector<128x128xbf16>, vector<16x128xf32> -> vector<16x128xf32>
    %7 = arith.addf %3, %6 : vector<16x128xf32>
    %c0_6 = arith.constant 0 : index
    %c0_7 = arith.constant 0 : index
    %8 = vector.load %arg8[%c0_6, %c0_7] : memref<16x128xf32, #tpu.memory_space<vmem>>, vector<16x128xf32>
    tpu.vector_store %arg8[%c0_6, %c0_7], %7 {strides = array<i32>} : memref<16x128xf32, #tpu.memory_space<vmem>>, vector<16x128xf32>,
    %c0_i32_8 = arith.constant 0 : i32
    %9 = arith.cmpi eq, %arg2, %c0_i32_8 : i32
    %10 = arith.extui %9 : i1 to i32
    %c0_i32_9 = arith.constant 0 : i32
    %11 = arith.cmpi ne, %10, %c0_i32_9 : i32
    scf.if %11 {
      %c0_10 = arith.constant 0 : index
      %c0_11 = arith.constant 0 : index
      %12 = vector.load %arg8[%c0_10, %c0_11] : memref<16x128xf32, #tpu.memory_space<vmem>>, vector<16x128xf32>
      %c0_12 = arith.constant 0 : index
      %c0_13 = arith.constant 0 : index
      %13 = vector.load %arg5[%c0_12, %c0_13] : memref<1x128xf32, #tpu.memory_space<vmem>>, vector<1x128xf32>
      %14 = vector.broadcast %13 : vector<1x128xf32> to vector<16x128xf32>
      %15 = arith.addf %12, %14 : vector<16x128xf32>
      %c0_14 = arith.constant 0 : index
      %c0_15 = arith.constant 0 : index
      %16 = vector.load %arg6[%c0_14, %c0_15] : memref<16x128xf32, #tpu.memory_space<vmem>>, vector<16x128xf32>
      %17 = arith.addf %15, %16 : vector<16x128xf32>
      %c0_16 = arith.constant 0 : index
      %c0_17 = arith.constant 0 : index
      %18 = vector.load %arg7[%c0_16, %c0_17] : memref<16x128xf32, #tpu.memory_space<vmem>>, vector<16x128xf32>
      tpu.vector_store %arg7[%c0_16, %c0_17], %17 {strides = array<i32>} : memref<16x128xf32, #tpu.memory_space<vmem>>, vector<16x128xf32>,
    } else {
    }
    return
  }
  func.func @transform_0(%arg0: i32, %arg1: i32, %arg2: i32) -> (i32, i32) {
    %c0_i32 = arith.constant 0 : i32
    return %arg0, %arg2 : i32, i32
  }
  func.func @transform_1(%arg0: i32, %arg1: i32, %arg2: i32) -> (i32, i32) {
    %c0_i32 = arith.constant 0 : i32
    return %arg2, %arg1 : i32, i32
  }
  func.func @transform_2(%arg0: i32, %arg1: i32, %arg2: i32) -> (i32, i32) {
    %c0_i32 = arith.constant 0 : i32
    %c0_i32_0 = arith.constant 0 : i32
    return %c0_i32, %arg1 : i32, i32
  }
  func.func @transform_3(%arg0: i32, %arg1: i32, %arg2: i32) -> (i32, i32) {
    %c0_i32 = arith.constant 0 : i32
    return %arg0, %arg1 : i32, i32
  }
  func.func @transform_4(%arg0: i32, %arg1: i32, %arg2: i32) -> (i32, i32) {
    %c0_i32 = arith.constant 0 : i32
    return %arg0, %arg1 : i32, i32
  }
}

module attributes {stable_mosaic.version = 11 : i64} {
  func.func @_ln_linear_kernel(%arg0: i32, %arg1: i32, %arg2: memref<16x128xf32, #tpu.memory_space<vmem>>, %arg3: memref<1x128xf32, #tpu.memory_space<vmem>>, %arg4: memref<1x128xf32, #tpu.memory_space<vmem>>, %arg5: memref<128x256xbf16, #tpu.memory_space<vmem>>, %arg6: memref<1x256xf32, #tpu.memory_space<vmem>>, %arg7: memref<16x256xf32, #tpu.memory_space<vmem>>, %arg8: memref<16x128xbf16, #tpu.memory_space<vmem>>) attributes {dimension_semantics = [#tpu.dimension_semantics<parallel>, #tpu.dimension_semantics<arbitrary>], iteration_bounds = array<i64: 1, 1>, scalar_prefetch = 0 : i64, scratch_operands = 1 : i64, tpu.core_type = #tpu.core_type<tc>, window_params = [{transform_indices = @transform_0, window_bounds = array<i64: 16, 128>}, {pipeline_mode = #tpu.pipeline_mode<synchronous>, transform_indices = @transform_1, window_bounds = array<i64: 1, 128>}, {pipeline_mode = #tpu.pipeline_mode<synchronous>, transform_indices = @transform_2, window_bounds = array<i64: 1, 128>}, {transform_indices = @transform_3, window_bounds = array<i64: 128, 256>}, {transform_indices = @transform_4, window_bounds = array<i64: 1, 256>}, {transform_indices = @transform_5, window_bounds = array<i64: 16, 256>}]} {
    %c0_i32 = arith.constant 0 : i32
    %0 = arith.cmpi eq, %arg1, %c0_i32 : i32
    %1 = arith.extui %0 : i1 to i32
    %c0_i32_0 = arith.constant 0 : i32
    %2 = arith.cmpi ne, %1, %c0_i32_0 : i32
    scf.if %2 {
      %c0_8 = arith.constant 0 : index
      %c0_9 = arith.constant 0 : index
      %10 = vector.load %arg2[%c0_8, %c0_9] : memref<16x128xf32, #tpu.memory_space<vmem>>, vector<16x128xf32>
      %cst_10 = arith.constant dense<0.000000e+00> : vector<16xf32>
      %11 = vector.multi_reduction <add>, %10, %cst_10 [1] : vector<16x128xf32> to vector<16xf32>
      %12 = vector.shape_cast %11 : vector<16xf32> to vector<16x1xf32>
      %cst_11 = arith.constant 1.280000e+02 : f32
      %13 = vector.broadcast %cst_11 : f32 to vector<16x1xf32>
      %14 = arith.divf %12, %13 : vector<16x1xf32>
      %15 = vector.broadcast %14 : vector<16x1xf32> to vector<16x128xf32>
      %16 = arith.subf %10, %15 : vector<16x128xf32>
      %17 = arith.mulf %16, %16 : vector<16x128xf32>
      %cst_12 = arith.constant dense<0.000000e+00> : vector<16xf32>
      %18 = vector.multi_reduction <add>, %17, %cst_12 [1] : vector<16x128xf32> to vector<16xf32>
      %19 = vector.shape_cast %18 : vector<16xf32> to vector<16x1xf32>
      %cst_13 = arith.constant 1.280000e+02 : f32
      %20 = vector.broadcast %cst_13 : f32 to vector<16x1xf32>
      %21 = arith.divf %19, %20 : vector<16x1xf32>
      %cst_14 = arith.constant 9.99999974E-6 : f32
      %22 = vector.broadcast %cst_14 : f32 to vector<16x1xf32>
      %23 = arith.addf %21, %22 : vector<16x1xf32>
      %24 = math.rsqrt %23 : vector<16x1xf32>
      %25 = vector.broadcast %24 : vector<16x1xf32> to vector<16x128xf32>
      %26 = arith.mulf %16, %25 : vector<16x128xf32>
      %c0_15 = arith.constant 0 : index
      %c0_16 = arith.constant 0 : index
      %27 = vector.load %arg3[%c0_15, %c0_16] : memref<1x128xf32, #tpu.memory_space<vmem>>, vector<1x128xf32>
      %28 = vector.broadcast %27 : vector<1x128xf32> to vector<16x128xf32>
      %29 = arith.mulf %26, %28 : vector<16x128xf32>
      %c0_17 = arith.constant 0 : index
      %c0_18 = arith.constant 0 : index
      %30 = vector.load %arg4[%c0_17, %c0_18] : memref<1x128xf32, #tpu.memory_space<vmem>>, vector<1x128xf32>
      %31 = vector.broadcast %30 : vector<1x128xf32> to vector<16x128xf32>
      %32 = arith.addf %29, %31 : vector<16x128xf32>
      %33 = arith.truncf %32 : vector<16x128xf32> to vector<16x128xbf16>
      %c0_19 = arith.constant 0 : index
      %c0_20 = arith.constant 0 : index
      %34 = vector.load %arg8[%c0_19, %c0_20] : memref<16x128xbf16, #tpu.memory_space<vmem>>, vector<16x128xbf16>
      tpu.vector_store %arg8[%c0_19, %c0_20], %33 {strides = array<i32>} : memref<16x128xbf16, #tpu.memory_space<vmem>>, vector<16x128xbf16>,
    } else {
    }
    %c0 = arith.constant 0 : index
    %c0_1 = arith.constant 0 : index
    %3 = vector.load %arg8[%c0, %c0_1] : memref<16x128xbf16, #tpu.memory_space<vmem>>, vector<16x128xbf16>
    %c0_2 = arith.constant 0 : index
    %c0_3 = arith.constant 0 : index
    %4 = vector.load %arg5[%c0_2, %c0_3] : memref<128x256xbf16, #tpu.memory_space<vmem>>, vector<128x256xbf16>
    %cst = arith.constant dense<0.000000e+00> : vector<16x256xf32>
    %5 = tpu.matmul %3, %4, %cst {dimension_numbers = #tpu.dot_dimension_numbers<[1], [0], [0], [1], [0, 0, 1, 1], [], []>} : vector<16x128xbf16>, vector<128x256xbf16>, vector<16x256xf32> -> vector<16x256xf32>
    %c0_4 = arith.constant 0 : index
    %c0_5 = arith.constant 0 : index
    %6 = vector.load %arg6[%c0_4, %c0_5] : memref<1x256xf32, #tpu.memory_space<vmem>>, vector<1x256xf32>
    %7 = vector.broadcast %6 : vector<1x256xf32> to vector<16x256xf32>
    %8 = arith.addf %5, %7 : vector<16x256xf32>
    %c0_6 = arith.constant 0 : index
    %c0_7 = arith.constant 0 : index
    %9 = vector.load %arg7[%c0_6, %c0_7] : memref<16x256xf32, #tpu.memory_space<vmem>>, vector<16x256xf32>
    tpu.vector_store %arg7[%c0_6, %c0_7], %8 {strides = array<i32>} : memref<16x256xf32, #tpu.memory_space<vmem>>, vector<16x256xf32>,
    return
  }
  func.func @transform_0(%arg0: i32, %arg1: i32) -> (i32, i32) {
    %c0_i32 = arith.constant 0 : i32
    %c0_i32_0 = arith.constant 0 : i32
    return %arg0, %c0_i32 : i32, i32
  }
  func.func @transform_1(%arg0: i32, %arg1: i32) -> (i32, i32) {
    %c0_i32 = arith.constant 0 : i32
    %c0_i32_0 = arith.constant 0 : i32
    %c0_i32_1 = arith.constant 0 : i32
    return %c0_i32, %c0_i32_0 : i32, i32
  }
  func.func @transform_2(%arg0: i32, %arg1: i32) -> (i32, i32) {
    %c0_i32 = arith.constant 0 : i32
    %c0_i32_0 = arith.constant 0 : i32
    %c0_i32_1 = arith.constant 0 : i32
    return %c0_i32, %c0_i32_0 : i32, i32
  }
  func.func @transform_3(%arg0: i32, %arg1: i32) -> (i32, i32) {
    %c0_i32 = arith.constant 0 : i32
    %c0_i32_0 = arith.constant 0 : i32
    return %c0_i32, %arg1 : i32, i32
  }
  func.func @transform_4(%arg0: i32, %arg1: i32) -> (i32, i32) {
    %c0_i32 = arith.constant 0 : i32
    %c0_i32_0 = arith.constant 0 : i32
    return %c0_i32, %arg1 : i32, i32
  }
  func.func @transform_5(%arg0: i32, %arg1: i32) -> (i32, i32) {
    %c0_i32 = arith.constant 0 : i32
    return %arg0, %arg1 : i32, i32
  }
}

</mosaic_0001>

<llo_original>
// kernel: _lambda_.13
$region0: #{_lambda_.13}
  #allocation0 [shape = 'u32[]', space=smem, size = 0x4, offset = 0x4, fixed_abs, tag = 'smem constant byte address 0x4 - core index']
  #allocation1 [shape = 'u32[144,128]{1,0:T(1,128)}', space=vmem, size = 0x12000, scoped, tag = 'internal scratch']
  #allocation2 [shape = 'f32[16,128]{1,0:T(8,128)}', space=vmem, size = 0x2000, scoped, tag = 'scratch operand']
  %s0 = inlined_call_operand.vmem [shape: bf16[16,128], index: 0, kind: input, shape index: {}]
  %s1 = inlined_call_operand.vmem [shape: bf16[128,128], index: 1, kind: input, shape index: {}]
  %s2 = inlined_call_operand.hbm [shape: f32[1,128], index: 2, kind: input, shape index: {}]
  %s3 = inlined_call_operand.vmem [shape: f32[16,128], index: 3, kind: input, shape index: {}]
  %s4 = inlined_call_operand.vmem [shape: f32[16,128], index: 4, kind: output, shape index: {}]
  %s5 = sld [smem:[#allocation0]]
  $region38: #{_lambda_.13} parent=0
    _
  %s7 = ssub.s32 1, %s5
  %s8 = scalar_select 0, %s7, %s5
  $region1: #{_lambda_.13} parent=0
    #allocation3 [shape = 'u8[512]{0}', space=vmem, size = 0x400, scoped, tag = 'input window, operand 2, single buffered']
    #allocation4 [shape = 's32[1]{0}', space=sflag, size = 0x4, scoped, tag = 'scoped memory for _lambda_.13']
    %9 = vsyncpa [#allocation4], 0
    // Predicated region
    $region2: #{_lambda_.13} parent=1 // pred_check
      _
    $region3: #{_lambda_.13} parent=1 // pred_check_branch
      %11 = sbr.rel (0) target = $region5
    $region4: #{_lambda_.13} parent=1 // pred_region
      _
    $region5: #{_lambda_.13} parent=1 // pred_fallthru
      _
    // Predicated region
    $region6: #{_lambda_.13} parent=1 // pred_check
      _
    $region7: #{_lambda_.13} parent=1 // pred_check_branch
      %13 = sbr.rel (0) target = $region9
    $region8: #{_lambda_.13} parent=1 // pred_region
      _
    $region9: #{_lambda_.13} parent=1 // pred_fallthru
      _
    // Predicated region
    $region10: #{_lambda_.13} parent=1 // pred_check
      _
    $region11: #{_lambda_.13} parent=1 // pred_check_branch
      %15 = sbr.rel (0) target = $region13
    $region12: #{_lambda_.13} parent=1 // pred_region
      %s17 = ssub.s32 16, 16
      %18 = vsyncadd [#allocation4], %s17
      %s20 = sshll.u32 [#allocation3], 4
      %s21 = int_to_ptr.vmem [resolvable:$true] %s20
      %23 = dma.hbm_to_vmem [thread:$0]  %s2, 16, %s21, [#allocation4]
    $region13: #{_lambda_.13} parent=1 // pred_fallthru
      _
    // Predicated region
    $region14: #{_lambda_.13} parent=1 // pred_check
      _
    $region15: #{_lambda_.13} parent=1 // pred_check_branch
      %25 = sbr.rel (0) target = $region17
    $region16: #{_lambda_.13} parent=1 // pred_region
      _
    $region17: #{_lambda_.13} parent=1 // pred_fallthru
      _
    // Predicated region
    $region18: #{_lambda_.13} parent=1 // pred_check
      _
    $region19: #{_lambda_.13} parent=1 // pred_check_branch
      %27 = sbr.rel (0) target = $region21
    $region20: #{_lambda_.13} parent=1 // pred_region
      %28 = dma.done [#allocation4], 16
    $region21: #{_lambda_.13} parent=1 // pred_fallthru
      _
    %p30 = scmp.eq.s32.totalorder 0, 0
    // Predicated region
    $region22: #{_lambda_.13} parent=1 // pred_check
      %p31 = pneg %p30
    $region23: #{_lambda_.13} parent=1 // pred_check_branch
      %33 = sbr.rel (%p31) target = $region25
    $region24: #{_lambda_.13} parent=1 // pred_region
      %34 = vst [vmem:[#allocation2] sm:$0xff] 0.0
      %35 = vst [vmem:[#allocation2 + $0x8] sm:$0xff] 0.0
    $region25: #{_lambda_.13} parent=1 // pred_fallthru
      _
    %v36 = vld [vmem:[#allocation2] sm:$0xff]
    %v37 = vld [vmem:[#allocation2 + $0x8] sm:$0xff]
    %v38 = vld [vmem:[%s0] sm:$0xf]
    %v39 = vld [vmem:[%s0 + $0x4] sm:$0xf]
    %v40 = vld [vmem:[%s1] sm:$0xf]
    %v41 = vld [vmem:[%s1 + $0x4] sm:$0xf]
    %v42 = vld [vmem:[%s1 + $0x8] sm:$0xf]
    %v43 = vld [vmem:[%s1 + $0xc] sm:$0xf]
    %v44 = vld [vmem:[%s1 + $0x10] sm:$0xf]
    %v45 = vld [vmem:[%s1 + $0x14] sm:$0xf]
    %v46 = vld [vmem:[%s1 + $0x18] sm:$0xf]
    %v47 = vld [vmem:[%s1 + $0x1c] sm:$0xf]
    %v48 = vld [vmem:[%s1 + $0x20] sm:$0xf]
    %v49 = vld [vmem:[%s1 + $0x24] sm:$0xf]
    %v50 = vld [vmem:[%s1 + $0x28] sm:$0xf]
    %v51 = vld [vmem:[%s1 + $0x2c] sm:$0xf]
    %v52 = vld [vmem:[%s1 + $0x30] sm:$0xf]
    %v53 = vld [vmem:[%s1 + $0x34] sm:$0xf]
    %v54 = vld [vmem:[%s1 + $0x38] sm:$0xf]
    %v55 = vld [vmem:[%s1 + $0x3c] sm:$0xf]
    %v58 = vunpack.c.l.b16 %v38
    %v59 = vunpack.c.l.b16 %v39
    %v60 = vpack.c.b16 %v59, %v58
    %v78 = vunpack.c.l.b16 %v40
    %v79 = vunpack.c.l.b16 %v41
    %v80 = vunpack.c.l.b16 %v42
    %v81 = vunpack.c.l.b16 %v43
    %v82 = vunpack.c.l.b16 %v44
    %v83 = vunpack.c.l.b16 %v45
    %v84 = vunpack.c.l.b16 %v46
    %v85 = vunpack.c.l.b16 %v47
    %v86 = vunpack.c.l.b16 %v48
    %v87 = vunpack.c.l.b16 %v49
    %v88 = vunpack.c.l.b16 %v50
    %v89 = vunpack.c.l.b16 %v51
    %v90 = vunpack.c.l.b16 %v52
    %v91 = vunpack.c.l.b16 %v53
    %v92 = vunpack.c.l.b16 %v54
    %v93 = vunpack.c.l.b16 %v55
    %v94 = vpack.c.b16 %v79, %v78
    %v95 = vpack.c.b16 %v81, %v80
    %v96 = vpack.c.b16 %v83, %v82
    %v97 = vpack.c.b16 %v85, %v84
    %v98 = vpack.c.b16 %v87, %v86
    %v99 = vpack.c.b16 %v89, %v88
    %v100 = vpack.c.b16 %v91, %v90
    %v101 = vpack.c.b16 %v93, %v92
    %110 = vmatprep.subr.bf16.mxu0 0
    %111 = vmatpush1.bf16.msra.mxu0 %v94
    %112 = vmatprep.subr.bf16.mxu0 0
    %113 = vmatpush1.bf16.msra.mxu0 %v95
    %114 = vmatprep.subr.bf16.mxu0 0
    %115 = vmatpush1.bf16.msra.mxu0 %v96
    %116 = vmatprep.subr.bf16.mxu0 0
    %117 = vmatpush1.bf16.msra.mxu0 %v97
    %118 = vmatprep.subr.bf16.mxu0 0
    %119 = vmatpush1.bf16.msra.mxu0 %v98
    %120 = vmatprep.subr.bf16.mxu0 0
    %121 = vmatpush1.bf16.msra.mxu0 %v99
    %122 = vmatprep.subr.bf16.mxu0 0
    %123 = vmatpush1.bf16.msra.mxu0 %v100
    %124 = vmatprep.subr.bf16.mxu0 0
    %125 = vmatpush1.bf16.msra.mxu0 %v101
    %126 = vmatprep.subr.bf16.mxu0 0
    %127 = vmatpush1.bf16.msra.mxu0 0
    %128 = vmatprep.subr.bf16.mxu0 0
    %129 = vmatpush1.bf16.msra.mxu0 0
    %130 = vmatprep.subr.bf16.mxu0 0
    %131 = vmatpush1.bf16.msra.mxu0 0
    %132 = vmatprep.subr.bf16.mxu0 0
    %133 = vmatpush1.bf16.msra.mxu0 0
    %134 = vmatprep.subr.bf16.mxu0 0
    %135 = vmatpush1.bf16.msra.mxu0 0
    %136 = vmatprep.subr.bf16.mxu0 0
    %137 = vmatpush1.bf16.msra.mxu0 0
    %138 = vmatprep.subr.bf16.mxu0 0
    %139 = vmatpush1.bf16.msra.mxu0 0
    %140 = vmatprep.subr.bf16.mxu0 0
    %141 = vmatpush1.bf16.msra.mxu0 0
    %142 = vmatprep.mubr.bf16.mxu0 0
    %143 = vmatmul.mubr.bf16.gmra.mrb[0].mxu0 %v60
    %v144 = vpop.f32.mrb[0].mxu0
    %v145 = vadd.f32 0.0, %v144
    %v146 = vpop.f32.mrb[0].mxu0
    %v147 = vpop.f32.mrb[0].mxu0
    %v148 = vadd.f32 0.0, %v147
    %v149 = vpop.f32.mrb[0].mxu0
    %150 = vdwg.mxu0
    %v151 = vadd.f32 %v36, %v145
    %v152 = vadd.f32 %v37, %v148
    %153 = vst [vmem:[#allocation2] sm:$0xff] %v151
    %154 = vst [vmem:[#allocation2 + $0x8] sm:$0xff] %v152
    // Predicated region
    $region26: #{_lambda_.13} parent=1 // pred_check
      %p155 = pneg %p30
    $region27: #{_lambda_.13} parent=1 // pred_check_branch
      %157 = sbr.rel (%p155) target = $region29
    $region28: #{_lambda_.13} parent=1 // pred_region
      %v158 = vld [vmem:[#allocation2] sm:$0xff]
      %v159 = vld [vmem:[#allocation2 + $0x8] sm:$0xff]
      %v160 = vld [vmem:[#allocation3] sm:$0x1]
      %v162 = vlaneseq
      %v163 = vshrl.u32 %v162, 7
      %v164 = vsub.s32 0, %v163
      %v165 = vrot.slane %v160, %v164
      %v167 = vadd.f32 %v158, %v165
      %v168 = vadd.f32 %v159, %v165
      %v169 = vld [vmem:[%s3] sm:$0xff]
      %v170 = vld [vmem:[%s3 + $0x8] sm:$0xff]
      %v171 = vadd.f32 %v167, %v169
      %v172 = vadd.f32 %v168, %v170
      %173 = vst [vmem:[%s4] sm:$0xff] %v171
      %174 = vst [vmem:[%s4 + $0x8] sm:$0xff] %v172
    $region29: #{_lambda_.13} parent=1 // pred_fallthru
      _
    // Predicated region
    $region30: #{_lambda_.13} parent=1 // pred_check
      _
    $region31: #{_lambda_.13} parent=1 // pred_check_branch
      %176 = sbr.rel (0) target = $region33
    $region32: #{_lambda_.13} parent=1 // pred_region
      _
    $region33: #{_lambda_.13} parent=1 // pred_fallthru
      _
    // Predicated region
    $region34: #{_lambda_.13} parent=1 // pred_check
      _
    $region35: #{_lambda_.13} parent=1 // pred_check_branch
      %178 = sbr.rel (0) target = $region37
    $region36: #{_lambda_.13} parent=1 // pred_region
      _
    $region37: #{_lambda_.13} parent=1 // pred_fallthru
      _
    %179 = vsyncpa [#allocation4], 1

// kernel: _lambda_.11
$region0: #{_lambda_.11}
  #allocation0 [shape = 'u32[]', space=smem, size = 0x4, offset = 0x4, fixed_abs, tag = 'smem constant byte address 0x4 - core index']
  #allocation1 [shape = 'u32[144,128]{1,0:T(1,128)}', space=vmem, size = 0x12000, scoped, tag = 'internal scratch']
  #allocation2 [shape = 'bf16[16,128]{1,0:T(16,128)(2,1)}', space=vmem, size = 0x1000, scoped, tag = 'scratch operand']
  %s0 = inlined_call_operand.vmem [shape: f32[16,128], index: 0, kind: input, shape index: {}]
  %s1 = inlined_call_operand.vmem [shape: f32[1,128], index: 1, kind: input, shape index: {}]
  %s2 = inlined_call_operand.vmem [shape: f32[1,128], index: 2, kind: input, shape index: {}]
  %s3 = inlined_call_operand.vmem [shape: bf16[128,384], index: 3, kind: input, shape index: {}]
  %s4 = inlined_call_operand.vmem [shape: f32[1,384], index: 4, kind: input, shape index: {}]
  %s5 = inlined_call_operand.vmem [shape: bf16[16,384], index: 5, kind: output, shape index: {}]
  %s6 = sld [smem:[#allocation0]]
  $region34: #{_lambda_.11} parent=0
    _
  %s8 = ssub.s32 1, %s6
  %s9 = scalar_select 0, %s8, %s6
  // Predicated region
  $region2: #{_lambda_.11} parent=0 // pred_check
    _
  $region3: #{_lambda_.11} parent=0 // pred_check_branch
    %11 = sbr.rel (0) target = $region5
  $region4: #{_lambda_.11} parent=0 // pred_region
    _
  $region5: #{_lambda_.11} parent=0 // pred_fallthru
    _
  // Predicated region
  $region6: #{_lambda_.11} parent=0 // pred_check
    _
  $region7: #{_lambda_.11} parent=0 // pred_check_branch
    %13 = sbr.rel (0) target = $region9
  $region8: #{_lambda_.11} parent=0 // pred_region
    _
  $region9: #{_lambda_.11} parent=0 // pred_fallthru
    _
  // Predicated region
  $region10: #{_lambda_.11} parent=0 // pred_check
    _
  $region11: #{_lambda_.11} parent=0 // pred_check_branch
    %15 = sbr.rel (0) target = $region13
  $region12: #{_lambda_.11} parent=0 // pred_region
    _
  $region13: #{_lambda_.11} parent=0 // pred_fallthru
    _
  // Predicated region
  $region14: #{_lambda_.11} parent=0 // pred_check
    _
  $region15: #{_lambda_.11} parent=0 // pred_check_branch
    %17 = sbr.rel (0) target = $region17
  $region16: #{_lambda_.11} parent=0 // pred_region
    _
  $region17: #{_lambda_.11} parent=0 // pred_fallthru
    _
  // Predicated region
  $region18: #{_lambda_.11} parent=0 // pred_check
    _
  $region19: #{_lambda_.11} parent=0 // pred_check_branch
    %19 = sbr.rel (0) target = $region21
  $region20: #{_lambda_.11} parent=0 // pred_region
    _
  $region21: #{_lambda_.11} parent=0 // pred_fallthru
    _
  %p21 = scmp.eq.s32.totalorder 0, 0
  // Predicated region
  $region22: #{_lambda_.11} parent=0 // pred_check
    %p22 = pneg %p21
  $region23: #{_lambda_.11} parent=0 // pred_check_branch
    %24 = sbr.rel (%p22) target = $region25
  $region24: #{_lambda_.11} parent=0 // pred_region
    %v25 = vld [vmem:[%s0] sm:$0xff]
    %v26 = vld [vmem:[%s0 + $0x8] sm:$0xff]
    %27 = vadd.xlane.f32.xlu0 %v25
    %v28 = vpop.xlane.xlu0 %27
    %29 = vadd.xlane.f32.xlu0 %v26
    %v30 = vpop.xlane.xlu0 %29
    %v31 = vrcp.pop 128.0
    %v32 = vmul.f32 %v28, %v31
    %v33 = vmul.f32 %v30, %v31
    %v34 = vsub.f32 %v25, %v32
    %v35 = vsub.f32 %v26, %v33
    %v36 = vmul.f32 %v34, %v34
    %v37 = vmul.f32 %v35, %v35
    %38 = vadd.xlane.f32.xlu0 %v36
    %v39 = vpop.xlane.xlu0 %38
    %40 = vadd.xlane.f32.xlu0 %v37
    %v41 = vpop.xlane.xlu0 %40
    %v42 = vmul.f32 %v39, %v31
    %v43 = vmul.f32 %v41, %v31
    %v44 = vadd.f32 %v42, 1e-05
    %v45 = vadd.f32 %v43, 1e-05
    %v46 = vrsqrt.pop %v44
    %v47 = vrsqrt.pop %v45
    %v48 = vmul.f32 %v34, %v46
    %v49 = vmul.f32 %v35, %v47
    %v50 = vld [vmem:[%s1] sm:$0x1]
    %v52 = vlaneseq
    %v53 = vshrl.u32 %v52, 7
    %v54 = vsub.s32 0, %v53
    %v55 = vrot.slane %v50, %v54
    %v57 = vmul.f32 %v48, %v55
    %v58 = vmul.f32 %v49, %v55
    %v59 = vld [vmem:[%s2] sm:$0x1]
    %v61 = vlaneseq
    %v62 = vshrl.u32 %v61, 7
    %v63 = vsub.s32 0, %v62
    %v64 = vrot.slane %v59, %v63
    %v66 = vadd.f32 %v57, %v64
    %v67 = vadd.f32 %v58, %v64
    %v68 = vpack.c.bf16 %v67, %v66
    %69 = vst [vmem:[#allocation2] sm:$0xff] %v68
  $region25: #{_lambda_.11} parent=0 // pred_fallthru
    _
  %v70 = vld [vmem:[#allocation2] sm:$0xff]
  %v71 = vld [vmem:[%s3] sm:$0xff]
  %v72 = vld [vmem:[%s3 + $0x8] sm:$0xf]
  %v73 = vld [vmem:[%s3 + $0xc] sm:$0xff]
  %v74 = vld [vmem:[%s3 + $0x14] sm:$0xf]
  %v75 = vld [vmem:[%s3 + $0x18] sm:$0xff]
  %v76 = vld [vmem:[%s3 + $0x20] sm:$0xf]
  %v77 = vld [vmem:[%s3 + $0x24] sm:$0xff]
  %v78 = vld [vmem:[%s3 + $0x2c] sm:$0xf]
  %v79 = vld [vmem:[%s3 + $0x30] sm:$0xff]
  %v80 = vld [vmem:[%s3 + $0x38] sm:$0xf]
  %v81 = vld [vmem:[%s3 + $0x3c] sm:$0xff]
  %v82 = vld [vmem:[%s3 + $0x44] sm:$0xf]
  %v83 = vld [vmem:[%s3 + $0x48] sm:$0xff]
  %v84 = vld [vmem:[%s3 + $0x50] sm:$0xf]
  %v85 = vld [vmem:[%s3 + $0x54] sm:$0xff]
  %v86 = vld [vmem:[%s3 + $0x5c] sm:$0xf]
  %v87 = vld [vmem:[%s3 + $0x60] sm:$0xff]
  %v88 = vld [vmem:[%s3 + $0x68] sm:$0xf]
  %v89 = vld [vmem:[%s3 + $0x6c] sm:$0xff]
  %v90 = vld [vmem:[%s3 + $0x74] sm:$0xf]
  %v91 = vld [vmem:[%s3 + $0x78] sm:$0xff]
  %v92 = vld [vmem:[%s3 + $0x80] sm:$0xf]
  %v93 = vld [vmem:[%s3 + $0x84] sm:$0xff]
  %v94 = vld [vmem:[%s3 + $0x8c] sm:$0xf]
  %v95 = vld [vmem:[%s3 + $0x90] sm:$0xff]
  %v96 = vld [vmem:[%s3 + $0x98] sm:$0xf]
  %v97 = vld [vmem:[%s3 + $0x9c] sm:$0xff]
  %v98 = vld [vmem:[%s3 + $0xa4] sm:$0xf]
  %v99 = vld [vmem:[%s3 + $0xa8] sm:$0xff]
  %v100 = vld [vmem:[%s3 + $0xb0] sm:$0xf]
  %v101 = vld [vmem:[%s3 + $0xb4] sm:$0xff]
  %v102 = vld [vmem:[%s3 + $0xbc] sm:$0xf]
  %v103 = vld [vmem:[%s4] sm:$0x7]
  %v105 = vlaneseq
  %v106 = vshrl.u32 %v105, 7
  %v107 = vsub.s32 0, %v106
  %v108 = vrot.slane %v103, %v107
  %v109 = vlaneseq
  %v110 = vshrl.u32 %v109, 7
  %v111 = vsub.s32 1, %v110
  %v112 = vrot.slane %v103, %v111
  %v113 = vlaneseq
  %v114 = vshrl.u32 %v113, 7
  %v115 = vsub.s32 2, %v114
  %v116 = vrot.slane %v103, %v115
  %v152 = vunpack.c.l.b16 %v71
  %v153 = vunpack.c.h.b16 %v71
  %v154 = vunpack.c.l.b16 %v72
  %v155 = vunpack.c.l.b16 %v73
  %v156 = vunpack.c.h.b16 %v73
  %v157 = vunpack.c.l.b16 %v74
  %v158 = vunpack.c.l.b16 %v75
  %v159 = vunpack.c.h.b16 %v75
  %v160 = vunpack.c.l.b16 %v76
  %v161 = vunpack.c.l.b16 %v77
  %v162 = vunpack.c.h.b16 %v77
  %v163 = vunpack.c.l.b16 %v78
  %v164 = vunpack.c.l.b16 %v79
  %v165 = vunpack.c.h.b16 %v79
  %v166 = vunpack.c.l.b16 %v80
  %v167 = vunpack.c.l.b16 %v81
  %v168 = vunpack.c.h.b16 %v81
  %v169 = vunpack.c.l.b16 %v82
  %v170 = vunpack.c.l.b16 %v83
  %v171 = vunpack.c.h.b16 %v83
  %v172 = vunpack.c.l.b16 %v84
  %v173 = vunpack.c.l.b16 %v85
  %v174 = vunpack.c.h.b16 %v85
  %v175 = vunpack.c.l.b16 %v86
  %v176 = vunpack.c.l.b16 %v87
  %v177 = vunpack.c.h.b16 %v87
  %v178 = vunpack.c.l.b16 %v88
  %v179 = vunpack.c.l.b16 %v89
  %v180 = vunpack.c.h.b16 %v89
  %v181 = vunpack.c.l.b16 %v90
  %v182 = vunpack.c.l.b16 %v91
  %v183 = vunpack.c.h.b16 %v91
  %v184 = vunpack.c.l.b16 %v92
  %v185 = vunpack.c.l.b16 %v93
  %v186 = vunpack.c.h.b16 %v93
  %v187 = vunpack.c.l.b16 %v94
  %v188 = vunpack.c.l.b16 %v95
  %v189 = vunpack.c.h.b16 %v95
  %v190 = vunpack.c.l.b16 %v96
  %v191 = vunpack.c.l.b16 %v97
  %v192 = vunpack.c.h.b16 %v97
  %v193 = vunpack.c.l.b16 %v98
  %v194 = vunpack.c.l.b16 %v99
  %v195 = vunpack.c.h.b16 %v99
  %v196 = vunpack.c.l.b16 %v100
  %v197 = vunpack.c.l.b16 %v101
  %v198 = vunpack.c.h.b16 %v101
  %v199 = vunpack.c.l.b16 %v102
  %v200 = vpack.c.b16 %v155, %v152
  %v201 = vpack.c.b16 %v156, %v153
  %v202 = vpack.c.b16 %v157, %v154
  %v203 = vpack.c.b16 %v161, %v158
  %v204 = vpack.c.b16 %v162, %v159
  %v205 = vpack.c.b16 %v163, %v160
  %v206 = vpack.c.b16 %v167, %v164
  %v207 = vpack.c.b16 %v168, %v165
  %v208 = vpack.c.b16 %v169, %v166
  %v209 = vpack.c.b16 %v173, %v170
  %v210 = vpack.c.b16 %v174, %v171
  %v211 = vpack.c.b16 %v175, %v172
  %v212 = vpack.c.b16 %v179, %v176
  %v213 = vpack.c.b16 %v180, %v177
  %v214 = vpack.c.b16 %v181, %v178
  %v215 = vpack.c.b16 %v185, %v182
  %v216 = vpack.c.b16 %v186, %v183
  %v217 = vpack.c.b16 %v187, %v184
  %v218 = vpack.c.b16 %v191, %v188
  %v219 = vpack.c.b16 %v192, %v189
  %v220 = vpack.c.b16 %v193, %v190
  %v221 = vpack.c.b16 %v197, %v194
  %v222 = vpack.c.b16 %v198, %v195
  %v223 = vpack.c.b16 %v199, %v196
  %248 = vmatprep.subr.bf16.mxu0 %v201
  %249 = vmatpush1.bf16.msra.mxu0 %v200
  %250 = vmatprep.subr.bf16.mxu0 %v204
  %251 = vmatpush1.bf16.msra.mxu0 %v203
  %252 = vmatprep.subr.bf16.mxu0 %v207
  %253 = vmatpush1.bf16.msra.mxu0 %v206
  %254 = vmatprep.subr.bf16.mxu0 %v210
  %255 = vmatpush1.bf16.msra.mxu0 %v209
  %256 = vmatprep.subr.bf16.mxu0 %v213
  %257 = vmatpush1.bf16.msra.mxu0 %v212
  %258 = vmatprep.subr.bf16.mxu0 %v216
  %259 = vmatpush1.bf16.msra.mxu0 %v215
  %260 = vmatprep.subr.bf16.mxu0 %v219
  %261 = vmatpush1.bf16.msra.mxu0 %v218
  %262 = vmatprep.subr.bf16.mxu0 %v222
  %263 = vmatpush1.bf16.msra.mxu0 %v221
  %264 = vmatprep.subr.bf16.mxu0 0
  %265 = vmatpush1.bf16.msra.mxu0 0
  %266 = vmatprep.subr.bf16.mxu0 0
  %267 = vmatpush1.bf16.msra.mxu0 0
  %268 = vmatprep.subr.bf16.mxu0 0
  %269 = vmatpush1.bf16.msra.mxu0 0
  %270 = vmatprep.subr.bf16.mxu0 0
  %271 = vmatpush1.bf16.msra.mxu0 0
  %272 = vmatprep.subr.bf16.mxu0 0
  %273 = vmatpush1.bf16.msra.mxu0 0
  %274 = vmatprep.subr.bf16.mxu0 0
  %275 = vmatpush1.bf16.msra.mxu0 0
  %276 = vmatprep.subr.bf16.mxu0 0
  %277 = vmatpush1.bf16.msra.mxu0 0
  %278 = vmatprep.subr.bf16.mxu0 0
  %279 = vmatpush1.bf16.msra.mxu0 0
  %280 = vmatprep.mubr.bf16.mxu0 0
  %281 = vmatmul.mubr.bf16.gmra.mrb[0].mxu0 %v70
  %v282 = vpop.f32.mrb[0].mxu0
  %v283 = vadd.f32 %v108, %v282
  %v284 = vpop.f32.mrb[0].mxu0
  %v285 = vadd.f32 %v112, %v284
  %v286 = vpop.f32.mrb[0].mxu0
  %v287 = vadd.f32 %v108, %v286
  %v288 = vpop.f32.mrb[0].mxu0
  %v289 = vadd.f32 %v112, %v288
  %290 = vdwg.mxu0
  %291 = vmatprep.subr.bf16.mxu0 0
  %292 = vmatpush1.bf16.msra.mxu0 %v202
  %293 = vmatprep.subr.bf16.mxu0 0
  %294 = vmatpush1.bf16.msra.mxu0 %v205
  %295 = vmatprep.subr.bf16.mxu0 0
  %296 = vmatpush1.bf16.msra.mxu0 %v208
  %297 = vmatprep.subr.bf16.mxu0 0
  %298 = vmatpush1.bf16.msra.mxu0 %v211
  %299 = vmatprep.subr.bf16.mxu0 0
  %300 = vmatpush1.bf16.msra.mxu0 %v214
  %301 = vmatprep.subr.bf16.mxu0 0
  %302 = vmatpush1.bf16.msra.mxu0 %v217
  %303 = vmatprep.subr.bf16.mxu0 0
  %304 = vmatpush1.bf16.msra.mxu0 %v220
  %305 = vmatprep.subr.bf16.mxu0 0
  %306 = vmatpush1.bf16.msra.mxu0 %v223
  %307 = vmatprep.subr.bf16.mxu0 0
  %308 = vmatpush1.bf16.msra.mxu0 0
  %309 = vmatprep.subr.bf16.mxu0 0
  %310 = vmatpush1.bf16.msra.mxu0 0
  %311 = vmatprep.subr.bf16.mxu0 0
  %312 = vmatpush1.bf16.msra.mxu0 0
  %313 = vmatprep.subr.bf16.mxu0 0
  %314 = vmatpush1.bf16.msra.mxu0 0
  %315 = vmatprep.subr.bf16.mxu0 0
  %316 = vmatpush1.bf16.msra.mxu0 0
  %317 = vmatprep.subr.bf16.mxu0 0
  %318 = vmatpush1.bf16.msra.mxu0 0
  %319 = vmatprep.subr.bf16.mxu0 0
  %320 = vmatpush1.bf16.msra.mxu0 0
  %321 = vmatprep.subr.bf16.mxu0 0
  %322 = vmatpush1.bf16.msra.mxu0 0
  %323 = vmatprep.mubr.bf16.mxu0 0
  %324 = vmatmul.mubr.bf16.gmra.mrb[0].mxu0 %v70
  %v325 = vpop.f32.mrb[0].mxu0
  %v326 = vadd.f32 %v116, %v325
  %v327 = vpop.f32.mrb[0].mxu0
  %v328 = vpop.f32.mrb[0].mxu0
  %v329 = vadd.f32 %v116, %v328
  %v330 = vpop.f32.mrb[0].mxu0
  %331 = vdwg.mxu0
  %v332 = vpack.c.bf16 %v287, %v283
  %v333 = vpack.c.bf16 %v289, %v285
  %v334 = vpack.c.bf16 %v329, %v326
  %v338 = vunpack.c.l.b16 %v332
  %v339 = vunpack.c.l.b16 %v333
  %v340 = vunpack.c.l.b16 %v334
  %v341 = vunpack.c.h.b16 %v332
  %v342 = vunpack.c.h.b16 %v333
  %v343 = vunpack.c.h.b16 %v334
  %v344 = vpack.c.b16 %v339, %v338
  %v345 = vpack.c.b16 %v340, %v340
  %v346 = vpack.c.b16 %v342, %v341
  %v347 = vpack.c.b16 %v343, %v343
  %352 = vst [vmem:[%s5] sm:$0xff] %v344
  %353 = vst [vmem:[%s5 + $0x8] sm:$0xf] %v345
  %354 = vst [vmem:[%s5 + $0xc] sm:$0xff] %v346
  %355 = vst [vmem:[%s5 + $0x14] sm:$0xf] %v347
  // Predicated region
  $region26: #{_lambda_.11} parent=0 // pred_check
    _
  $region27: #{_lambda_.11} parent=0 // pred_check_branch
    %357 = sbr.rel (0) target = $region29
  $region28: #{_lambda_.11} parent=0 // pred_region
    _
  $region29: #{_lambda_.11} parent=0 // pred_fallthru
    _
  // Predicated region
  $region30: #{_lambda_.11} parent=0 // pred_check
    _
  $region31: #{_lambda_.11} parent=0 // pred_check_branch
    %359 = sbr.rel (0) target = $region33
  $region32: #{_lambda_.11} parent=0 // pred_region
    _
  $region33: #{_lambda_.11} parent=0 // pred_fallthru
    _

// kernel: _lambda_.14
$region0: #{_lambda_.14}
  #allocation0 [shape = 'u32[]', space=smem, size = 0x4, offset = 0x4, fixed_abs, tag = 'smem constant byte address 0x4 - core index']
  #allocation1 [shape = 'u32[144,128]{1,0:T(1,128)}', space=vmem, size = 0x12000, scoped, tag = 'internal scratch']
  #allocation2 [shape = 'bf16[16,128]{1,0:T(16,128)(2,1)}', space=vmem, size = 0x1000, scoped, tag = 'scratch operand']
  %s0 = inlined_call_operand.vmem [shape: f32[16,128], index: 0, kind: input, shape index: {}]
  %s1 = inlined_call_operand.vmem [shape: f32[1,128], index: 1, kind: input, shape index: {}]
  %s2 = inlined_call_operand.vmem [shape: f32[1,128], index: 2, kind: input, shape index: {}]
  %s3 = inlined_call_operand.vmem [shape: bf16[128,512], index: 3, kind: input, shape index: {}]
  %s4 = inlined_call_operand.vmem [shape: f32[1,512], index: 4, kind: input, shape index: {}]
  %s5 = inlined_call_operand.vmem [shape: bf16[16,512], index: 5, kind: output, shape index: {}]
  %s6 = sld [smem:[#allocation0]]
  $region34: #{_lambda_.14} parent=0
    _
  %s8 = ssub.s32 1, %s6
  %s9 = scalar_select 0, %s8, %s6
  // Predicated region
  $region2: #{_lambda_.14} parent=0 // pred_check
    _
  $region3: #{_lambda_.14} parent=0 // pred_check_branch
    %11 = sbr.rel (0) target = $region5
  $region4: #{_lambda_.14} parent=0 // pred_region
    _
  $region5: #{_lambda_.14} parent=0 // pred_fallthru
    _
  // Predicated region
  $region6: #{_lambda_.14} parent=0 // pred_check
    _
  $region7: #{_lambda_.14} parent=0 // pred_check_branch
    %13 = sbr.rel (0) target = $region9
  $region8: #{_lambda_.14} parent=0 // pred_region
    _
  $region9: #{_lambda_.14} parent=0 // pred_fallthru
    _
  // Predicated region
  $region10: #{_lambda_.14} parent=0 // pred_check
    _
  $region11: #{_lambda_.14} parent=0 // pred_check_branch
    %15 = sbr.rel (0) target = $region13
  $region12: #{_lambda_.14} parent=0 // pred_region
    _
  $region13: #{_lambda_.14} parent=0 // pred_fallthru
    _
  // Predicated region
  $region14: #{_lambda_.14} parent=0 // pred_check
    _
  $region15: #{_lambda_.14} parent=0 // pred_check_branch
    %17 = sbr.rel (0) target = $region17
  $region16: #{_lambda_.14} parent=0 // pred_region
    _
  $region17: #{_lambda_.14} parent=0 // pred_fallthru
    _
  // Predicated region
  $region18: #{_lambda_.14} parent=0 // pred_check
    _
  $region19: #{_lambda_.14} parent=0 // pred_check_branch
    %19 = sbr.rel (0) target = $region21
  $region20: #{_lambda_.14} parent=0 // pred_region
    _
  $region21: #{_lambda_.14} parent=0 // pred_fallthru
    _
  %p21 = scmp.eq.s32.totalorder 0, 0
  // Predicated region
  $region22: #{_lambda_.14} parent=0 // pred_check
    %p22 = pneg %p21
  $region23: #{_lambda_.14} parent=0 // pred_check_branch
    %24 = sbr.rel (%p22) target = $region25
  $region24: #{_lambda_.14} parent=0 // pred_region
    %v25 = vld [vmem:[%s0] sm:$0xff]
    %v26 = vld [vmem:[%s0 + $0x8] sm:$0xff]
    %27 = vadd.xlane.f32.xlu0 %v25
    %v28 = vpop.xlane.xlu0 %27
    %29 = vadd.xlane.f32.xlu0 %v26
    %v30 = vpop.xlane.xlu0 %29
    %v31 = vrcp.pop 128.0
    %v32 = vmul.f32 %v28, %v31
    %v33 = vmul.f32 %v30, %v31
    %v34 = vsub.f32 %v25, %v32
    %v35 = vsub.f32 %v26, %v33
    %v36 = vmul.f32 %v34, %v34
    %v37 = vmul.f32 %v35, %v35
    %38 = vadd.xlane.f32.xlu0 %v36
    %v39 = vpop.xlane.xlu0 %38
    %40 = vadd.xlane.f32.xlu0 %v37
    %v41 = vpop.xlane.xlu0 %40
    %v42 = vmul.f32 %v39, %v31
    %v43 = vmul.f32 %v41, %v31
    %v44 = vadd.f32 %v42, 1e-05
    %v45 = vadd.f32 %v43, 1e-05
    %v46 = vrsqrt.pop %v44
    %v47 = vrsqrt.pop %v45
    %v48 = vmul.f32 %v34, %v46
    %v49 = vmul.f32 %v35, %v47
    %v50 = vld [vmem:[%s1] sm:$0x1]
    %v52 = vlaneseq
    %v53 = vshrl.u32 %v52, 7
    %v54 = vsub.s32 0, %v53
    %v55 = vrot.slane %v50, %v54
    %v57 = vmul.f32 %v48, %v55
    %v58 = vmul.f32 %v49, %v55
    %v59 = vld [vmem:[%s2] sm:$0x1]
    %v61 = vlaneseq
    %v62 = vshrl.u32 %v61, 7
    %v63 = vsub.s32 0, %v62
    %v64 = vrot.slane %v59, %v63
    %v66 = vadd.f32 %v57, %v64
    %v67 = vadd.f32 %v58, %v64
    %v68 = vpack.c.bf16 %v67, %v66
    %69 = vst [vmem:[#allocation2] sm:$0xff] %v68
  $region25: #{_lambda_.14} parent=0 // pred_fallthru
    _
  %v70 = vld [vmem:[#allocation2] sm:$0xff]
  %v71 = vld [vmem:[%s3] sm:$0xff]
  %v72 = vld [vmem:[%s3 + $0x8] sm:$0xff]
  %v73 = vld [vmem:[%s3 + $0x10] sm:$0xff]
  %v74 = vld [vmem:[%s3 + $0x18] sm:$0xff]
  %v75 = vld [vmem:[%s3 + $0x20] sm:$0xff]
  %v76 = vld [vmem:[%s3 + $0x28] sm:$0xff]
  %v77 = vld [vmem:[%s3 + $0x30] sm:$0xff]
  %v78 = vld [vmem:[%s3 + $0x38] sm:$0xff]
  %v79 = vld [vmem:[%s3 + $0x40] sm:$0xff]
  %v80 = vld [vmem:[%s3 + $0x48] sm:$0xff]
  %v81 = vld [vmem:[%s3 + $0x50] sm:$0xff]
  %v82 = vld [vmem:[%s3 + $0x58] sm:$0xff]
  %v83 = vld [vmem:[%s3 + $0x60] sm:$0xff]
  %v84 = vld [vmem:[%s3 + $0x68] sm:$0xff]
  %v85 = vld [vmem:[%s3 + $0x70] sm:$0xff]
  %v86 = vld [vmem:[%s3 + $0x78] sm:$0xff]
  %v87 = vld [vmem:[%s3 + $0x80] sm:$0xff]
  %v88 = vld [vmem:[%s3 + $0x88] sm:$0xff]
  %v89 = vld [vmem:[%s3 + $0x90] sm:$0xff]
  %v90 = vld [vmem:[%s3 + $0x98] sm:$0xff]
  %v91 = vld [vmem:[%s3 + $0xa0] sm:$0xff]
  %v92 = vld [vmem:[%s3 + $0xa8] sm:$0xff]
  %v93 = vld [vmem:[%s3 + $0xb0] sm:$0xff]
  %v94 = vld [vmem:[%s3 + $0xb8] sm:$0xff]
  %v95 = vld [vmem:[%s3 + $0xc0] sm:$0xff]
  %v96 = vld [vmem:[%s3 + $0xc8] sm:$0xff]
  %v97 = vld [vmem:[%s3 + $0xd0] sm:$0xff]
  %v98 = vld [vmem:[%s3 + $0xd8] sm:$0xff]
  %v99 = vld [vmem:[%s3 + $0xe0] sm:$0xff]
  %v100 = vld [vmem:[%s3 + $0xe8] sm:$0xff]
  %v101 = vld [vmem:[%s3 + $0xf0] sm:$0xff]
  %v102 = vld [vmem:[%s3 + $0xf8] sm:$0xff]
  %v103 = vld [vmem:[%s4] sm:$0xf]
  %v105 = vlaneseq
  %v106 = vshrl.u32 %v105, 7
  %v107 = vsub.s32 0, %v106
  %v108 = vrot.slane %v103, %v107
  %v109 = vlaneseq
  %v110 = vshrl.u32 %v109, 7
  %v111 = vsub.s32 1, %v110
  %v112 = vrot.slane %v103, %v111
  %v113 = vlaneseq
  %v114 = vshrl.u32 %v113, 7
  %v115 = vsub.s32 2, %v114
  %v116 = vrot.slane %v103, %v115
  %v117 = vlaneseq
  %v118 = vshrl.u32 %v117, 7
  %v119 = vsub.s32 3, %v118
  %v120 = vrot.slane %v103, %v119
  %v157 = vunpack.c.l.b16 %v71
  %v158 = vunpack.c.h.b16 %v71
  %v159 = vunpack.c.l.b16 %v72
  %v160 = vunpack.c.h.b16 %v72
  %v161 = vunpack.c.l.b16 %v73
  %v162 = vunpack.c.h.b16 %v73
  %v163 = vunpack.c.l.b16 %v74
  %v164 = vunpack.c.h.b16 %v74
  %v165 = vunpack.c.l.b16 %v75
  %v166 = vunpack.c.h.b16 %v75
  %v167 = vunpack.c.l.b16 %v76
  %v168 = vunpack.c.h.b16 %v76
  %v169 = vunpack.c.l.b16 %v77
  %v170 = vunpack.c.h.b16 %v77
  %v171 = vunpack.c.l.b16 %v78
  %v172 = vunpack.c.h.b16 %v78
  %v173 = vunpack.c.l.b16 %v79
  %v174 = vunpack.c.h.b16 %v79
  %v175 = vunpack.c.l.b16 %v80
  %v176 = vunpack.c.h.b16 %v80
  %v177 = vunpack.c.l.b16 %v81
  %v178 = vunpack.c.h.b16 %v81
  %v179 = vunpack.c.l.b16 %v82
  %v180 = vunpack.c.h.b16 %v82
  %v181 = vunpack.c.l.b16 %v83
  %v182 = vunpack.c.h.b16 %v83
  %v183 = vunpack.c.l.b16 %v84
  %v184 = vunpack.c.h.b16 %v84
  %v185 = vunpack.c.l.b16 %v85
  %v186 = vunpack.c.h.b16 %v85
  %v187 = vunpack.c.l.b16 %v86
  %v188 = vunpack.c.h.b16 %v86
  %v189 = vunpack.c.l.b16 %v87
  %v190 = vunpack.c.h.b16 %v87
  %v191 = vunpack.c.l.b16 %v88
  %v192 = vunpack.c.h.b16 %v88
  %v193 = vunpack.c.l.b16 %v89
  %v194 = vunpack.c.h.b16 %v89
  %v195 = vunpack.c.l.b16 %v90
  %v196 = vunpack.c.h.b16 %v90
  %v197 = vunpack.c.l.b16 %v91
  %v198 = vunpack.c.h.b16 %v91
  %v199 = vunpack.c.l.b16 %v92
  %v200 = vunpack.c.h.b16 %v92
  %v201 = vunpack.c.l.b16 %v93
  %v202 = vunpack.c.h.b16 %v93
  %v203 = vunpack.c.l.b16 %v94
  %v204 = vunpack.c.h.b16 %v94
  %v205 = vunpack.c.l.b16 %v95
  %v206 = vunpack.c.h.b16 %v95
  %v207 = vunpack.c.l.b16 %v96
  %v208 = vunpack.c.h.b16 %v96
  %v209 = vunpack.c.l.b16 %v97
  %v210 = vunpack.c.h.b16 %v97
  %v211 = vunpack.c.l.b16 %v98
  %v212 = vunpack.c.h.b16 %v98
  %v213 = vunpack.c.l.b16 %v99
  %v214 = vunpack.c.h.b16 %v99
  %v215 = vunpack.c.l.b16 %v100
  %v216 = vunpack.c.h.b16 %v100
  %v217 = vunpack.c.l.b16 %v101
  %v218 = vunpack.c.h.b16 %v101
  %v219 = vunpack.c.l.b16 %v102
  %v220 = vunpack.c.h.b16 %v102
  %v221 = vpack.c.b16 %v161, %v157
  %v222 = vpack.c.b16 %v162, %v158
  %v223 = vpack.c.b16 %v163, %v159
  %v224 = vpack.c.b16 %v164, %v160
  %v225 = vpack.c.b16 %v169, %v165
  %v226 = vpack.c.b16 %v170, %v166
  %v227 = vpack.c.b16 %v171, %v167
  %v228 = vpack.c.b16 %v172, %v168
  %v229 = vpack.c.b16 %v177, %v173
  %v230 = vpack.c.b16 %v178, %v174
  %v231 = vpack.c.b16 %v179, %v175
  %v232 = vpack.c.b16 %v180, %v176
  %v233 = vpack.c.b16 %v185, %v181
  %v234 = vpack.c.b16 %v186, %v182
  %v235 = vpack.c.b16 %v187, %v183
  %v236 = vpack.c.b16 %v188, %v184
  %v237 = vpack.c.b16 %v193, %v189
  %v238 = vpack.c.b16 %v194, %v190
  %v239 = vpack.c.b16 %v195, %v191
  %v240 = vpack.c.b16 %v196, %v192
  %v241 = vpack.c.b16 %v201, %v197
  %v242 = vpack.c.b16 %v202, %v198
  %v243 = vpack.c.b16 %v203, %v199
  %v244 = vpack.c.b16 %v204, %v200
  %v245 = vpack.c.b16 %v209, %v205
  %v246 = vpack.c.b16 %v210, %v206
  %v247 = vpack.c.b16 %v211, %v207
  %v248 = vpack.c.b16 %v212, %v208
  %v249 = vpack.c.b16 %v217, %v213
  %v250 = vpack.c.b16 %v218, %v214
  %v251 = vpack.c.b16 %v219, %v215
  %v252 = vpack.c.b16 %v220, %v216
  %285 = vmatprep.subr.bf16.mxu0 %v222
  %286 = vmatpush1.bf16.msra.mxu0 %v221
  %287 = vmatprep.subr.bf16.mxu0 %v226
  %288 = vmatpush1.bf16.msra.mxu0 %v225
  %289 = vmatprep.subr.bf16.mxu0 %v230
  %290 = vmatpush1.bf16.msra.mxu0 %v229
  %291 = vmatprep.subr.bf16.mxu0 %v234
  %292 = vmatpush1.bf16.msra.mxu0 %v233
  %293 = vmatprep.subr.bf16.mxu0 %v238
  %294 = vmatpush1.bf16.msra.mxu0 %v237
  %295 = vmatprep.subr.bf16.mxu0 %v242
  %296 = vmatpush1.bf16.msra.mxu0 %v241
  %297 = vmatprep.subr.bf16.mxu0 %v246
  %298 = vmatpush1.bf16.msra.mxu0 %v245
  %299 = vmatprep.subr.bf16.mxu0 %v250
  %300 = vmatpush1.bf16.msra.mxu0 %v249
  %301 = vmatprep.subr.bf16.mxu0 0
  %302 = vmatpush1.bf16.msra.mxu0 0
  %303 = vmatprep.subr.bf16.mxu0 0
  %304 = vmatpush1.bf16.msra.mxu0 0
  %305 = vmatprep.subr.bf16.mxu0 0
  %306 = vmatpush1.bf16.msra.mxu0 0
  %307 = vmatprep.subr.bf16.mxu0 0
  %308 = vmatpush1.bf16.msra.mxu0 0
  %309 = vmatprep.subr.bf16.mxu0 0
  %310 = vmatpush1.bf16.msra.mxu0 0
  %311 = vmatprep.subr.bf16.mxu0 0
  %312 = vmatpush1.bf16.msra.mxu0 0
  %313 = vmatprep.subr.bf16.mxu0 0
  %314 = vmatpush1.bf16.msra.mxu0 0
  %315 = vmatprep.subr.bf16.mxu0 0
  %316 = vmatpush1.bf16.msra.mxu0 0
  %317 = vmatprep.mubr.bf16.mxu0 0
  %318 = vmatmul.mubr.bf16.gmra.mrb[0].mxu0 %v70
  %v319 = vpop.f32.mrb[0].mxu0
  %v320 = vadd.f32 %v108, %v319
  %v321 = vpop.f32.mrb[0].mxu0
  %v322 = vadd.f32 %v112, %v321
  %v323 = vpop.f32.mrb[0].mxu0
  %v324 = vadd.f32 %v108, %v323
  %v325 = vpop.f32.mrb[0].mxu0
  %v326 = vadd.f32 %v112, %v325
  %327 = vdwg.mxu0
  %328 = vmatprep.subr.bf16.mxu0 %v224
  %329 = vmatpush1.bf16.msra.mxu0 %v223
  %330 = vmatprep.subr.bf16.mxu0 %v228
  %331 = vmatpush1.bf16.msra.mxu0 %v227
  %332 = vmatprep.subr.bf16.mxu0 %v232
  %333 = vmatpush1.bf16.msra.mxu0 %v231
  %334 = vmatprep.subr.bf16.mxu0 %v236
  %335 = vmatpush1.bf16.msra.mxu0 %v235
  %336 = vmatprep.subr.bf16.mxu0 %v240
  %337 = vmatpush1.bf16.msra.mxu0 %v239
  %338 = vmatprep.subr.bf16.mxu0 %v244
  %339 = vmatpush1.bf16.msra.mxu0 %v243
  %340 = vmatprep.subr.bf16.mxu0 %v248
  %341 = vmatpush1.bf16.msra.mxu0 %v247
  %342 = vmatprep.subr.bf16.mxu0 %v252
  %343 = vmatpush1.bf16.msra.mxu0 %v251
  %344 = vmatprep.subr.bf16.mxu0 0
  %345 = vmatpush1.bf16.msra.mxu0 0
  %346 = vmatprep.subr.bf16.mxu0 0
  %347 = vmatpush1.bf16.msra.mxu0 0
  %348 = vmatprep.subr.bf16.mxu0 0
  %349 = vmatpush1.bf16.msra.mxu0 0
  %350 = vmatprep.subr.bf16.mxu0 0
  %351 = vmatpush1.bf16.msra.mxu0 0
  %352 = vmatprep.subr.bf16.mxu0 0
  %353 = vmatpush1.bf16.msra.mxu0 0
  %354 = vmatprep.subr.bf16.mxu0 0
  %355 = vmatpush1.bf16.msra.mxu0 0
  %356 = vmatprep.subr.bf16.mxu0 0
  %357 = vmatpush1.bf16.msra.mxu0 0
  %358 = vmatprep.subr.bf16.mxu0 0
  %359 = vmatpush1.bf16.msra.mxu0 0
  %360 = vmatprep.mubr.bf16.mxu0 0
  %361 = vmatmul.mubr.bf16.gmra.mrb[0].mxu0 %v70
  %v362 = vpop.f32.mrb[0].mxu0
  %v363 = vadd.f32 %v116, %v362
  %v364 = vpop.f32.mrb[0].mxu0
  %v365 = vadd.f32 %v120, %v364
  %v366 = vpop.f32.mrb[0].mxu0
  %v367 = vadd.f32 %v116, %v366
  %v368 = vpop.f32.mrb[0].mxu0
  %v369 = vadd.f32 %v120, %v368
  %370 = vdwg.mxu0
  %v371 = vmul.f32 %v320, 0.5
  %v372 = vmul.f32 %v322, 0.5
  %v373 = vmul.f32 %v363, 0.5
  %v374 = vmul.f32 %v365, 0.5
  %v375 = vmul.f32 %v324, 0.5
  %v376 = vmul.f32 %v326, 0.5
  %v377 = vmul.f32 %v367, 0.5
  %v378 = vmul.f32 %v369, 0.5
  %v379 = vmul.f32 %v320, 0.044715
  %v380 = vmul.f32 %v322, 0.044715
  %v381 = vmul.f32 %v363, 0.044715
  %v382 = vmul.f32 %v365, 0.044715
  %v383 = vmul.f32 %v324, 0.044715
  %v384 = vmul.f32 %v326, 0.044715
  %v385 = vmul.f32 %v367, 0.044715
  %v386 = vmul.f32 %v369, 0.044715
  %v387 = vmul.f32 %v379, %v320
  %v388 = vmul.f32 %v380, %v322
  %v389 = vmul.f32 %v381, %v363
  %v390 = vmul.f32 %v382, %v365
  %v391 = vmul.f32 %v383, %v324
  %v392 = vmul.f32 %v384, %v326
  %v393 = vmul.f32 %v385, %v367
  %v394 = vmul.f32 %v386, %v369
  %v395 = vmul.f32 %v387, %v320
  %v396 = vmul.f32 %v388, %v322
  %v397 = vmul.f32 %v389, %v363
  %v398 = vmul.f32 %v390, %v365
  %v399 = vmul.f32 %v391, %v324
  %v400 = vmul.f32 %v392, %v326
  %v401 = vmul.f32 %v393, %v367
  %v402 = vmul.f32 %v394, %v369
  %v403 = vadd.f32 %v320, %v395
  %v404 = vadd.f32 %v322, %v396
  %v405 = vadd.f32 %v363, %v397
  %v406 = vadd.f32 %v365, %v398
  %v407 = vadd.f32 %v324, %v399
  %v408 = vadd.f32 %v326, %v400
  %v409 = vadd.f32 %v367, %v401
  %v410 = vadd.f32 %v369, %v402
  %v411 = vmul.f32 %v403, 0.7978846
  %v412 = vmul.f32 %v404, 0.7978846
  %v413 = vmul.f32 %v405, 0.7978846
  %v414 = vmul.f32 %v406, 0.7978846
  %v415 = vmul.f32 %v407, 0.7978846
  %v416 = vmul.f32 %v408, 0.7978846
  %v417 = vmul.f32 %v409, 0.7978846
  %v418 = vmul.f32 %v410, 0.7978846
  %v419 = vtanh.pop %v411
  %v420 = vtanh.pop %v412
  %v421 = vtanh.pop %v413
  %v422 = vtanh.pop %v414
  %v423 = vtanh.pop %v415
  %v424 = vtanh.pop %v416
  %v425 = vtanh.pop %v417
  %v426 = vtanh.pop %v418
  %v427 = vadd.f32 %v419, 1.0
  %v428 = vadd.f32 %v420, 1.0
  %v429 = vadd.f32 %v421, 1.0
  %v430 = vadd.f32 %v422, 1.0
  %v431 = vadd.f32 %v423, 1.0
  %v432 = vadd.f32 %v424, 1.0
  %v433 = vadd.f32 %v425, 1.0
  %v434 = vadd.f32 %v426, 1.0
  %v435 = vmul.f32 %v371, %v427
  %v436 = vmul.f32 %v372, %v428
  %v437 = vmul.f32 %v373, %v429
  %v438 = vmul.f32 %v374, %v430
  %v439 = vmul.f32 %v375, %v431
  %v440 = vmul.f32 %v376, %v432
  %v441 = vmul.f32 %v377, %v433
  %v442 = vmul.f32 %v378, %v434
  %v443 = vpack.c.bf16 %v439, %v435
  %v444 = vpack.c.bf16 %v440, %v436
  %v445 = vpack.c.bf16 %v441, %v437
  %v446 = vpack.c.bf16 %v442, %v438
  %v451 = vunpack.c.l.b16 %v443
  %v452 = vunpack.c.l.b16 %v444
  %v453 = vunpack.c.l.b16 %v445
  %v454 = vunpack.c.l.b16 %v446
  %v455 = vunpack.c.h.b16 %v443
  %v456 = vunpack.c.h.b16 %v444
  %v457 = vunpack.c.h.b16 %v445
  %v458 = vunpack.c.h.b16 %v446
  %v459 = vpack.c.b16 %v452, %v451
  %v460 = vpack.c.b16 %v454, %v453
  %v461 = vpack.c.b16 %v456, %v455
  %v462 = vpack.c.b16 %v458, %v457
  %467 = vst [vmem:[%s5] sm:$0xff] %v459
  %468 = vst [vmem:[%s5 + $0x8] sm:$0xff] %v460
  %469 = vst [vmem:[%s5 + $0x10] sm:$0xff] %v461
  %470 = vst [vmem:[%s5 + $0x18] sm:$0xff] %v462
  // Predicated region
  $region26: #{_lambda_.14} parent=0 // pred_check
    _
  $region27: #{_lambda_.14} parent=0 // pred_check_branch
    %472 = sbr.rel (0) target = $region29
  $region28: #{_lambda_.14} parent=0 // pred_region
    _
  $region29: #{_lambda_.14} parent=0 // pred_fallthru
    _
  // Predicated region
  $region30: #{_lambda_.14} parent=0 // pred_check
    _
  $region31: #{_lambda_.14} parent=0 // pred_check_branch
    %474 = sbr.rel (0) target = $region33
  $region32: #{_lambda_.14} parent=0 // pred_region
    _
  $region33: #{_lambda_.14} parent=0 // pred_fallthru
    _

// kernel: _lambda_.12
$region0: #{_lambda_.12}
  #allocation0 [shape = 'u32[]', space=smem, size = 0x4, offset = 0x4, fixed_abs, tag = 'smem constant byte address 0x4 - core index']
  #allocation1 [shape = 'u32[144,128]{1,0:T(1,128)}', space=vmem, size = 0x12000, scoped, tag = 'internal scratch']
  %s0 = inlined_call_operand.vmem [shape: bf16[2,8,384], index: 0, kind: input, shape index: {}]
  %s1 = inlined_call_operand.vmem [shape: bf16[2,8,128], index: 1, kind: output, shape index: {}]
  %s2 = sld [smem:[#allocation0]]
  $region37: #{_lambda_.12} parent=0
    _
  %s4 = ssub.s32 1, %s2
  %s5 = scalar_select 0, %s4, %s2
  loop: start=0, step=1, limit=4
  $region2: #{_lambda_.12} parent=0 // loop_pre_header
    _
  $region3: #{_lambda_.12} parent=0 // loop_header
    %s7 = sphi 0, %s11
    %p8 = scmp.ge.s32.totalorder %s7, 4
    %s17 = sphi 0, %s19
    %s20 = sphi 0, %s17
    %s21 = sphi 0, %s20
    %s37 = sphi 0, %s21
    %s43 = sphi 0, %s45
    %s46 = sphi 0, %s43
    %s47 = sphi 0, %s46
    %s63 = sphi 0, %s47
  $region4: #{_lambda_.12} parent=0 // loop_header_branch
    %10 = sbr.rel (%p8) target = $region8
  $region5: #{_lambda_.12} parent=0 // loop_body
    %s12 = ssub.s32 %s7, 1
    %s13 = ssub.s32 %s7, 2
    %s14 = sadd.s32 %s7, 1
    %s15 = ssub.s32 %s7, %s14
    %p16 = scmp.eq.s32.totalorder %s15, 0
    %s18 = sadd.s32 %s17, 1
    %s19 = scalar_select %p16, %s17, %s18
    %p22 = pneg %p16
    %p23 = scmp.eq.s32.totalorder %s7, 1
    %p24 = por %p22, %p23
    %p25 = scmp.ne.s32.totalorder %s17, %s20
    %p26 = scmp.eq.s32.totalorder %s7, 0
    %p27 = por %p25, %p26
    %p28 = scmp.ne.s32.totalorder %s17, %s20
    %p29 = scmp.eq.s32.totalorder %s12, 1
    %p30 = por %p28, %p29
    %p31 = scmp.ne.s32.totalorder %s20, %s21
    %p32 = scmp.eq.s32.totalorder %s12, 0
    %p33 = por %p31, %p32
    %p34 = scmp.ne.s32.totalorder %s20, %s21
    %p35 = scmp.eq.s32.totalorder %s13, 1
    %p36 = por %p34, %p35
    %p38 = scmp.ne.s32.totalorder %s21, %s37
    %p39 = scmp.eq.s32.totalorder %s13, 0
    %p40 = por %p38, %p39
    %s41 = ssub.s32 %s7, %s14
    %p42 = scmp.eq.s32.totalorder %s41, 0
    %s44 = sadd.s32 %s43, 1
    %s45 = scalar_select %p42, %s43, %s44
    %p48 = pneg %p42
    %p49 = scmp.eq.s32.totalorder %s7, 1
    %p50 = por %p48, %p49
    %p51 = scmp.ne.s32.totalorder %s43, %s46
    %p52 = scmp.eq.s32.totalorder %s7, 0
    %p53 = por %p51, %p52
    %p54 = scmp.ne.s32.totalorder %s43, %s46
    %p55 = scmp.eq.s32.totalorder %s12, 1
    %p56 = por %p54, %p55
    %p57 = scmp.ne.s32.totalorder %s46, %s47
    %p58 = scmp.eq.s32.totalorder %s12, 0
    %p59 = por %p57, %p58
    %p60 = scmp.ne.s32.totalorder %s46, %s47
    %p61 = scmp.eq.s32.totalorder %s13, 1
    %p62 = por %p60, %p61
    %p64 = scmp.ne.s32.totalorder %s47, %s63
    %p65 = scmp.eq.s32.totalorder %s13, 0
    %p66 = por %p64, %p65
    %p67 = scmp.le.s32.totalorder 1, %s7
    %p68 = scmp.lt.s32.totalorder %s7, 3
    %p69 = pnand %p67, %p68
    %p70 = pneg %p69
    // Predicated region
    $region9: #{_lambda_.12} parent=5 // pred_check
      _
    $region10: #{_lambda_.12} parent=5 // pred_check_branch
      %72 = sbr.rel (%p69) target = $region12
    $region11: #{_lambda_.12} parent=5 // pred_region
      %s73 = ssub.s32 %s7, 1
    $region12: #{_lambda_.12} parent=5 // pred_fallthru
      _
    %p74 = scmp.lt.s32.totalorder %s7, 2
    // Predicated region
    $region13: #{_lambda_.12} parent=5 // pred_check
      %p75 = pneg %p74
    $region14: #{_lambda_.12} parent=5 // pred_check_branch
      %77 = sbr.rel (%p75) target = $region16
    $region15: #{_lambda_.12} parent=5 // pred_region
      // Predicated region
      $region17: #{_lambda_.12} parent=15 // pred_check
        %p78 = pneg %p27
      $region18: #{_lambda_.12} parent=15 // pred_check_branch
        %80 = sbr.rel (%p78) target = $region20
      $region19: #{_lambda_.12} parent=15 // pred_region
        %p81 = scmp.lt.s32.totalorder %s7, 1
        %s82 = scalar_select %p81, %s7, 1
        %s83 = smul.addr %s82, 3
        %s84 = smul.addr %s83, 4
        %s85 = scalar_lea.vmem %s0, %s84
      $region20: #{_lambda_.12} parent=15 // pred_fallthru
        _
    $region16: #{_lambda_.12} parent=5 // pred_fallthru
      _
    %p86 = scmp.le.s32.totalorder 1, %s7
    %p87 = scmp.lt.s32.totalorder %s7, 3
    %p88 = pnand %p86, %p87
    %p89 = pneg %p88
    // Predicated region
    $region21: #{_lambda_.12} parent=5 // pred_check
      _
    $region22: #{_lambda_.12} parent=5 // pred_check_branch
      %91 = sbr.rel (%p88) target = $region24
    $region23: #{_lambda_.12} parent=5 // pred_region
      %s92 = ssub.s32 %s7, 1
      %p93 = scmp.lt.s32.totalorder %s12, 1
      %s94 = scalar_select %p93, %s12, 1
      %s95 = smul.addr %s94, 3
      %s96 = smul.addr %s95, 4
      %s97 = scalar_lea.vmem %s0, %s96
      %p98 = pneg %p33
      %p99 = pneg %p30
      %p100 = pneg %p59
      %p101 = pneg %p56
      %p102 = scmp.lt.s32.totalorder %s12, 1
      %s103 = scalar_select %p102, %s12, 1
      %s104 = smul.addr %s103, 4
      %s105 = scalar_lea.vmem %s1, %s104
      %p106 = scmp.lt.s32.totalorder %s12, 1
      %s107 = scalar_select %p106, %s12, 1
      %s108 = smul.addr %s107, 3
      %s109 = smul.addr %s108, 4
      %s110 = scalar_lea.vmem %s0, %s109
      %p111 = scmp.lt.s32.totalorder %s12, 1
      %s112 = scalar_select %p111, %s12, 1
      %s113 = smul.addr %s112, 4
      %s114 = scalar_lea.vmem %s1, %s113
      %v116 = vlaneseq
      %v117 = vshrl.u32 %v116, 7
      %v118 = vlaneseq
      %v119 = vand.u32 %v118, 127
      %vm120 = vcmp.le.s32.totalorder %v119, %v117
      %v121 = vld [vmem:[%s110] sm:$0xf]
      %v122 = vld [vmem:[%s110 + $0x4] sm:$0xf]
      %v123 = vld [vmem:[%s110 + $0x8] sm:$0xf]
      %v124 = vunpack.c.l.bf16 %v121
      %v125 = vmul.f32 %v124, 0.17677669
      %v126 = vpack.c.bf16 %v125, %v125
      %vm127 = vcmask 261120
      %v129 = vsel %vm127, %v126, 0
      %v132 = vsel %vm127, %v122, 0
      %134 = vmatprep.subr.bf16.mxu0 0
      %135 = vmatpush1.bf16.xpose.msra.mxu0 %v132
      %136 = vmatprep.subr.bf16.mxu0 0
      %137 = vmatpush1.bf16.xpose.msra.mxu0 0
      %138 = vmatprep.subr.bf16.mxu0 0
      %139 = vmatpush1.bf16.xpose.msra.mxu0 0
      %140 = vmatprep.subr.bf16.mxu0 0
      %141 = vmatpush1.bf16.xpose.msra.mxu0 0
      %142 = vmatprep.subr.bf16.mxu0 0
      %143 = vmatpush1.bf16.xpose.msra.mxu0 0
      %144 = vmatprep.subr.bf16.mxu0 0
      %145 = vmatpush1.bf16.xpose.msra.mxu0 0
      %146 = vmatprep.subr.bf16.mxu0 0
      %147 = vmatpush1.bf16.xpose.msra.mxu0 0
      %148 = vmatprep.subr.bf16.mxu0 0
      %149 = vmatpush1.bf16.xpose.msra.mxu0 0
      %150 = vmatprep.subr.bf16.mxu0 0
      %151 = vmatpush1.bf16.xpose.msra.mxu0 0
      %152 = vmatprep.subr.bf16.mxu0 0
      %153 = vmatpush1.bf16.xpose.msra.mxu0 0
      %154 = vmatprep.subr.bf16.mxu0 0
      %155 = vmatpush1.bf16.xpose.msra.mxu0 0
      %156 = vmatprep.subr.bf16.mxu0 0
      %157 = vmatpush1.bf16.xpose.msra.mxu0 0
      %158 = vmatprep.subr.bf16.mxu0 0
      %159 = vmatpush1.bf16.xpose.msra.mxu0 0
      %160 = vmatprep.subr.bf16.mxu0 0
      %161 = vmatpush1.bf16.xpose.msra.mxu0 0
      %162 = vmatprep.subr.bf16.mxu0 0
      %163 = vmatpush1.bf16.xpose.msra.mxu0 0
      %164 = vmatprep.subr.bf16.mxu0 0
      %165 = vmatpush1.bf16.xpose.msra.mxu0 0
      %166 = vmatprep.mubr.bf16.mxu0 0
      %167 = vmatmul.mubr.bf16.gmra.mrb[0].mxu0 %v129
      %v168 = vpop.f32.mrb[0].mxu0
      %v169 = vadd.f32 0.0, %v168
      %v170 = vpop.f32.mrb[0].mxu0
      %v171 = vpop.f32.mrb[0].mxu0
      %v172 = vpop.f32.mrb[0].mxu0
      %173 = vdwg.mxu0
      %v174 = vsel %vm120, %v169, -1e+30
      %vm175 = vcmask 64512
      %v176 = vsel %vm175, %v174, -inf
      %177 = vmax.xlane.f32.xlu0 %v176
      %v178 = vpop.xlane.xlu0 %177
      %v179 = vsub.f32 %v174, %v178
      %v180 = vmul.f32 %v179, 1.442695
      %v181 = vpow.pop %v180
      %v182 = vsel %vm175, %v181, 0.0
      %183 = vadd.xlane.f32.xlu0 %v182
      %v184 = vpop.xlane.xlu0 %183
      %v185 = vrcp.pop %v184
      %v186 = vmul.f32 %v181, %v185
      %v187 = vpack.c.bf16 %v186, %v186
      %v189 = vsel %vm175, %v187, 0
      %vm191 = vcmask 1043456
      %v193 = vsel %vm191, %v123, 0
      %195 = vmatprep.subr.bf16.mxu0 0
      %196 = vmatpush1.bf16.msra.mxu0 %v193
      %197 = vmatprep.subr.bf16.mxu0 0
      %198 = vmatpush1.bf16.msra.mxu0 0
      %199 = vmatprep.subr.bf16.mxu0 0
      %200 = vmatpush1.bf16.msra.mxu0 0
      %201 = vmatprep.subr.bf16.mxu0 0
      %202 = vmatpush1.bf16.msra.mxu0 0
      %203 = vmatprep.subr.bf16.mxu0 0
      %204 = vmatpush1.bf16.msra.mxu0 0
      %205 = vmatprep.subr.bf16.mxu0 0
      %206 = vmatpush1.bf16.msra.mxu0 0
      %207 = vmatprep.subr.bf16.mxu0 0
      %208 = vmatpush1.bf16.msra.mxu0 0
      %209 = vmatprep.subr.bf16.mxu0 0
      %210 = vmatpush1.bf16.msra.mxu0 0
      %211 = vmatprep.subr.bf16.mxu0 0
      %212 = vmatpush1.bf16.msra.mxu0 0
      %213 = vmatprep.subr.bf16.mxu0 0
      %214 = vmatpush1.bf16.msra.mxu0 0
      %215 = vmatprep.subr.bf16.mxu0 0
      %216 = vmatpush1.bf16.msra.mxu0 0
      %217 = vmatprep.subr.bf16.mxu0 0
      %218 = vmatpush1.bf16.msra.mxu0 0
      %219 = vmatprep.subr.bf16.mxu0 0
      %220 = vmatpush1.bf16.msra.mxu0 0
      %221 = vmatprep.subr.bf16.mxu0 0
      %222 = vmatpush1.bf16.msra.mxu0 0
      %223 = vmatprep.subr.bf16.mxu0 0
      %224 = vmatpush1.bf16.msra.mxu0 0
      %225 = vmatprep.subr.bf16.mxu0 0
      %226 = vmatpush1.bf16.msra.mxu0 0
      %227 = vmatprep.mubr.bf16.mxu0 0
      %228 = vmatmul.mubr.bf16.gmra.mrb[0].mxu0 %v189
      %v229 = vpop.f32.mrb[0].mxu0
      %v230 = vadd.f32 0.0, %v229
      %v231 = vpop.f32.mrb[0].mxu0
      %v232 = vpop.f32.mrb[0].mxu0
      %v233 = vpop.f32.mrb[0].mxu0
      %234 = vdwg.mxu0
      %v235 = vpack.c.bf16 %v230, %v230
      %vm236 = vcmask 257024
      %237 = vst.msk [vmem:[%s114] sm:$0xf] %vm236, %v235
      %v238 = vld [vmem:[%s110] sm:$0xf]
      %v239 = vld [vmem:[%s110 + $0x4] sm:$0xf]
      %v240 = vld [vmem:[%s110 + $0x8] sm:$0xf]
      %v241 = vunpack.c.l.bf16 %v238
      %v242 = vmul.f32 %v241, 0.17677669
      %v243 = vpack.c.bf16 %v242, %v242
      %245 = vrot.lane.b32.xlu0 %v243, 96
      %v246 = vpop.permute.xlu0 %245
      %v248 = vunpack.c.l.b16 %v239
      %v249 = vpack.c.b16 %v248, %v248
      %250 = vrot.lane.b32.xlu0 %v249, 96
      %v251 = vpop.permute.xlu0 %250
      %v253 = vsel %vm127, %v246, 0
      %v256 = vsel %vm127, %v251, 0
      %258 = vmatprep.subr.bf16.mxu0 0
      %259 = vmatpush1.bf16.xpose.msra.mxu0 %v256
      %260 = vmatprep.subr.bf16.mxu0 0
      %261 = vmatpush1.bf16.xpose.msra.mxu0 0
      %262 = vmatprep.subr.bf16.mxu0 0
      %263 = vmatpush1.bf16.xpose.msra.mxu0 0
      %264 = vmatprep.subr.bf16.mxu0 0
      %265 = vmatpush1.bf16.xpose.msra.mxu0 0
      %266 = vmatprep.subr.bf16.mxu0 0
      %267 = vmatpush1.bf16.xpose.msra.mxu0 0
      %268 = vmatprep.subr.bf16.mxu0 0
      %269 = vmatpush1.bf16.xpose.msra.mxu0 0
      %270 = vmatprep.subr.bf16.mxu0 0
      %271 = vmatpush1.bf16.xpose.msra.mxu0 0
      %272 = vmatprep.subr.bf16.mxu0 0
      %273 = vmatpush1.bf16.xpose.msra.mxu0 0
      %274 = vmatprep.subr.bf16.mxu0 0
      %275 = vmatpush1.bf16.xpose.msra.mxu0 0
      %276 = vmatprep.subr.bf16.mxu0 0
      %277 = vmatpush1.bf16.xpose.msra.mxu0 0
      %278 = vmatprep.subr.bf16.mxu0 0
      %279 = vmatpush1.bf16.xpose.msra.mxu0 0
      %280 = vmatprep.subr.bf16.mxu0 0
      %281 = vmatpush1.bf16.xpose.msra.mxu0 0
      %282 = vmatprep.subr.bf16.mxu0 0
      %283 = vmatpush1.bf16.xpose.msra.mxu0 0
      %284 = vmatprep.subr.bf16.mxu0 0
      %285 = vmatpush1.bf16.xpose.msra.mxu0 0
      %286 = vmatprep.subr.bf16.mxu0 0
      %287 = vmatpush1.bf16.xpose.msra.mxu0 0
      %288 = vmatprep.subr.bf16.mxu0 0
      %289 = vmatpush1.bf16.xpose.msra.mxu0 0
      %290 = vmatprep.mubr.bf16.mxu0 0
      %291 = vmatmul.mubr.bf16.gmra.mrb[0].mxu0 %v253
      %v292 = vpop.f32.mrb[0].mxu0
      %v293 = vadd.f32 0.0, %v292
      %v294 = vpop.f32.mrb[0].mxu0
      %v295 = vpop.f32.mrb[0].mxu0
      %v296 = vpop.f32.mrb[0].mxu0
      %297 = vdwg.mxu0
      %v298 = vsel %vm120, %v293, -1e+30
      %v299 = vsel %vm175, %v298, -inf
      %300 = vmax.xlane.f32.xlu0 %v299
      %v301 = vpop.xlane.xlu0 %300
      %v302 = vsub.f32 %v298, %v301
      %v303 = vmul.f32 %v302, 1.442695
      %v304 = vpow.pop %v303
      %v305 = vsel %vm175, %v304, 0.0
      %306 = vadd.xlane.f32.xlu0 %v305
      %v307 = vpop.xlane.xlu0 %306
      %v308 = vrcp.pop %v307
      %v309 = vmul.f32 %v304, %v308
      %v310 = vpack.c.bf16 %v309, %v309
      %v312 = vunpack.c.l.b16 %v240
      %v313 = vpack.c.b16 %v312, %v312
      %314 = vrot.lane.b32.xlu0 %v313, 96
      %v315 = vpop.permute.xlu0 %314
      %v317 = vsel %vm175, %v310, 0
      %v320 = vsel %vm191, %v315, 0
      %322 = vmatprep.subr.bf16.mxu0 0
      %323 = vmatpush1.bf16.msra.mxu0 %v320
      %324 = vmatprep.subr.bf16.mxu0 0
      %325 = vmatpush1.bf16.msra.mxu0 0
      %326 = vmatprep.subr.bf16.mxu0 0
      %327 = vmatpush1.bf16.msra.mxu0 0
      %328 = vmatprep.subr.bf16.mxu0 0
      %329 = vmatpush1.bf16.msra.mxu0 0
      %330 = vmatprep.subr.bf16.mxu0 0
      %331 = vmatpush1.bf16.msra.mxu0 0
      %332 = vmatprep.subr.bf16.mxu0 0
      %333 = vmatpush1.bf16.msra.mxu0 0
      %334 = vmatprep.subr.bf16.mxu0 0
      %335 = vmatpush1.bf16.msra.mxu0 0
      %336 = vmatprep.subr.bf16.mxu0 0
      %337 = vmatpush1.bf16.msra.mxu0 0
      %338 = vmatprep.subr.bf16.mxu0 0
      %339 = vmatpush1.bf16.msra.mxu0 0
      %340 = vmatprep.subr.bf16.mxu0 0
      %341 = vmatpush1.bf16.msra.mxu0 0
      %342 = vmatprep.subr.bf16.mxu0 0
      %343 = vmatpush1.bf16.msra.mxu0 0
      %344 = vmatprep.subr.bf16.mxu0 0
      %345 = vmatpush1.bf16.msra.mxu0 0
      %346 = vmatprep.subr.bf16.mxu0 0
      %347 = vmatpush1.bf16.msra.mxu0 0
      %348 = vmatprep.subr.bf16.mxu0 0
      %349 = vmatpush1.bf16.msra.mxu0 0
      %350 = vmatprep.subr.bf16.mxu0 0
      %351 = vmatpush1.bf16.msra.mxu0 0
      %352 = vmatprep.subr.bf16.mxu0 0
      %353 = vmatpush1.bf16.msra.mxu0 0
      %354 = vmatprep.mubr.bf16.mxu0 0
      %355 = vmatmul.mubr.bf16.gmra.mrb[0].mxu0 %v317
      %v356 = vpop.f32.mrb[0].mxu0
      %v357 = vadd.f32 0.0, %v356
      %v358 = vpop.f32.mrb[0].mxu0
      %v359 = vpop.f32.mrb[0].mxu0
      %v360 = vpop.f32.mrb[0].mxu0
      %361 = vdwg.mxu0
      %v362 = vpack.c.bf16 %v357, %v357
      %v364 = vunpack.c.l.b16 %v362
      %v365 = vpack.c.b16 %v364, %v364
      %366 = vrot.lane.b32.xlu0 %v365, 32
      %v367 = vpop.permute.xlu0 %366
      %vm369 = vcmask 519424
      %370 = vst.msk [vmem:[%s114] sm:$0xf] %vm369, %v367
      %v371 = vld [vmem:[%s110] sm:$0xf]
      %v372 = vld [vmem:[%s110 + $0x4] sm:$0xf]
      %v373 = vld [vmem:[%s110 + $0x8] sm:$0xf]
      %v374 = vunpack.c.l.bf16 %v371
      %v375 = vmul.f32 %v374, 0.17677669
      %v376 = vpack.c.bf16 %v375, %v375
      %378 = vrot.lane.b32.xlu0 %v376, 64
      %v379 = vpop.permute.xlu0 %378
      %v381 = vunpack.c.l.b16 %v372
      %v382 = vpack.c.b16 %v381, %v381
      %383 = vrot.lane.b32.xlu0 %v382, 64
      %v384 = vpop.permute.xlu0 %383
      %v386 = vsel %vm127, %v379, 0
      %v389 = vsel %vm127, %v384, 0
      %391 = vmatprep.subr.bf16.mxu0 0
      %392 = vmatpush1.bf16.xpose.msra.mxu0 %v389
      %393 = vmatprep.subr.bf16.mxu0 0
      %394 = vmatpush1.bf16.xpose.msra.mxu0 0
      %395 = vmatprep.subr.bf16.mxu0 0
      %396 = vmatpush1.bf16.xpose.msra.mxu0 0
      %397 = vmatprep.subr.bf16.mxu0 0
      %398 = vmatpush1.bf16.xpose.msra.mxu0 0
      %399 = vmatprep.subr.bf16.mxu0 0
      %400 = vmatpush1.bf16.xpose.msra.mxu0 0
      %401 = vmatprep.subr.bf16.mxu0 0
      %402 = vmatpush1.bf16.xpose.msra.mxu0 0
      %403 = vmatprep.subr.bf16.mxu0 0
      %404 = vmatpush1.bf16.xpose.msra.mxu0 0
      %405 = vmatprep.subr.bf16.mxu0 0
      %406 = vmatpush1.bf16.xpose.msra.mxu0 0
      %407 = vmatprep.subr.bf16.mxu0 0
      %408 = vmatpush1.bf16.xpose.msra.mxu0 0
      %409 = vmatprep.subr.bf16.mxu0 0
      %410 = vmatpush1.bf16.xpose.msra.mxu0 0
      %411 = vmatprep.subr.bf16.mxu0 0
      %412 = vmatpush1.bf16.xpose.msra.mxu0 0
      %413 = vmatprep.subr.bf16.mxu0 0
      %414 = vmatpush1.bf16.xpose.msra.mxu0 0
      %415 = vmatprep.subr.bf16.mxu0 0
      %416 = vmatpush1.bf16.xpose.msra.mxu0 0
      %417 = vmatprep.subr.bf16.mxu0 0
      %418 = vmatpush1.bf16.xpose.msra.mxu0 0
      %419 = vmatprep.subr.bf16.mxu0 0
      %420 = vmatpush1.bf16.xpose.msra.mxu0 0
      %421 = vmatprep.subr.bf16.mxu0 0
      %422 = vmatpush1.bf16.xpose.msra.mxu0 0
      %423 = vmatprep.mubr.bf16.mxu0 0
      %424 = vmatmul.mubr.bf16.gmra.mrb[0].mxu0 %v386
      %v425 = vpop.f32.mrb[0].mxu0
      %v426 = vadd.f32 0.0, %v425
      %v427 = vpop.f32.mrb[0].mxu0
      %v428 = vpop.f32.mrb[0].mxu0
      %v429 = vpop.f32.mrb[0].mxu0
      %430 = vdwg.mxu0
      %v431 = vsel %vm120, %v426, -1e+30
      %v432 = vsel %vm175, %v431, -inf
      %433 = vmax.xlane.f32.xlu0 %v432
      %v434 = vpop.xlane.xlu0 %433
      %v435 = vsub.f32 %v431, %v434
      %v436 = vmul.f32 %v435, 1.442695
      %v437 = vpow.pop %v436
      %v438 = vsel %vm175, %v437, 0.0
      %439 = vadd.xlane.f32.xlu0 %v438
      %v440 = vpop.xlane.xlu0 %439
      %v441 = vrcp.pop %v440
      %v442 = vmul.f32 %v437, %v441
      %v443 = vpack.c.bf16 %v442, %v442
      %v445 = vunpack.c.l.b16 %v373
      %v446 = vpack.c.b16 %v445, %v445
      %447 = vrot.lane.b32.xlu0 %v446, 64
      %v448 = vpop.permute.xlu0 %447
      %v450 = vsel %vm175, %v443, 0
      %v453 = vsel %vm191, %v448, 0
      %455 = vmatprep.subr.bf16.mxu0 0
      %456 = vmatpush1.bf16.msra.mxu0 %v453
      %457 = vmatprep.subr.bf16.mxu0 0
      %458 = vmatpush1.bf16.msra.mxu0 0
      %459 = vmatprep.subr.bf16.mxu0 0
      %460 = vmatpush1.bf16.msra.mxu0 0
      %461 = vmatprep.subr.bf16.mxu0 0
      %462 = vmatpush1.bf16.msra.mxu0 0
      %463 = vmatprep.subr.bf16.mxu0 0
      %464 = vmatpush1.bf16.msra.mxu0 0
      %465 = vmatprep.subr.bf16.mxu0 0
      %466 = vmatpush1.bf16.msra.mxu0 0
      %467 = vmatprep.subr.bf16.mxu0 0
      %468 = vmatpush1.bf16.msra.mxu0 0
      %469 = vmatprep.subr.bf16.mxu0 0
      %470 = vmatpush1.bf16.msra.mxu0 0
      %471 = vmatprep.subr.bf16.mxu0 0
      %472 = vmatpush1.bf16.msra.mxu0 0
      %473 = vmatprep.subr.bf16.mxu0 0
      %474 = vmatpush1.bf16.msra.mxu0 0
      %475 = vmatprep.subr.bf16.mxu0 0
      %476 = vmatpush1.bf16.msra.mxu0 0
      %477 = vmatprep.subr.bf16.mxu0 0
      %478 = vmatpush1.bf16.msra.mxu0 0
      %479 = vmatprep.subr.bf16.mxu0 0
      %480 = vmatpush1.bf16.msra.mxu0 0
      %481 = vmatprep.subr.bf16.mxu0 0
      %482 = vmatpush1.bf16.msra.mxu0 0
      %483 = vmatprep.subr.bf16.mxu0 0
      %484 = vmatpush1.bf16.msra.mxu0 0
      %485 = vmatprep.subr.bf16.mxu0 0
      %486 = vmatpush1.bf16.msra.mxu0 0
      %487 = vmatprep.mubr.bf16.mxu0 0
      %488 = vmatmul.mubr.bf16.gmra.mrb[0].mxu0 %v450
      %v489 = vpop.f32.mrb[0].mxu0
      %v490 = vadd.f32 0.0, %v489
      %v491 = vpop.f32.mrb[0].mxu0
      %v492 = vpop.f32.mrb[0].mxu0
      %v493 = vpop.f32.mrb[0].mxu0
      %494 = vdwg.mxu0
      %v495 = vpack.c.bf16 %v490, %v490
      %v497 = vunpack.c.l.b16 %v495
      %v498 = vpack.c.b16 %v497, %v497
      %499 = vrot.lane.b32.xlu0 %v498, 64
      %v500 = vpop.permute.xlu0 %499
      %vm502 = vcmask 781824
      %503 = vst.msk [vmem:[%s114] sm:$0xf] %vm502, %v500
      %v504 = vld [vmem:[%s110] sm:$0xf]
      %v505 = vld [vmem:[%s110 + $0x4] sm:$0xf]
      %v506 = vld [vmem:[%s110 + $0x8] sm:$0xf]
      %v507 = vunpack.c.l.bf16 %v504
      %v508 = vmul.f32 %v507, 0.17677669
      %v509 = vpack.c.bf16 %v508, %v508
      %511 = vrot.lane.b32.xlu0 %v509, 32
      %v512 = vpop.permute.xlu0 %511
      %v514 = vunpack.c.l.b16 %v505
      %v515 = vpack.c.b16 %v514, %v514
      %516 = vrot.lane.b32.xlu0 %v515, 32
      %v517 = vpop.permute.xlu0 %516
      %v519 = vsel %vm127, %v512, 0
      %v522 = vsel %vm127, %v517, 0
      %524 = vmatprep.subr.bf16.mxu0 0
      %525 = vmatpush1.bf16.xpose.msra.mxu0 %v522
      %526 = vmatprep.subr.bf16.mxu0 0
      %527 = vmatpush1.bf16.xpose.msra.mxu0 0
      %528 = vmatprep.subr.bf16.mxu0 0
      %529 = vmatpush1.bf16.xpose.msra.mxu0 0
      %530 = vmatprep.subr.bf16.mxu0 0
      %531 = vmatpush1.bf16.xpose.msra.mxu0 0
      %532 = vmatprep.subr.bf16.mxu0 0
      %533 = vmatpush1.bf16.xpose.msra.mxu0 0
      %534 = vmatprep.subr.bf16.mxu0 0
      %535 = vmatpush1.bf16.xpose.msra.mxu0 0
      %536 = vmatprep.subr.bf16.mxu0 0
      %537 = vmatpush1.bf16.xpose.msra.mxu0 0
      %538 = vmatprep.subr.bf16.mxu0 0
      %539 = vmatpush1.bf16.xpose.msra.mxu0 0
      %540 = vmatprep.subr.bf16.mxu0 0
      %541 = vmatpush1.bf16.xpose.msra.mxu0 0
      %542 = vmatprep.subr.bf16.mxu0 0
      %543 = vmatpush1.bf16.xpose.msra.mxu0 0
      %544 = vmatprep.subr.bf16.mxu0 0
      %545 = vmatpush1.bf16.xpose.msra.mxu0 0
      %546 = vmatprep.subr.bf16.mxu0 0
      %547 = vmatpush1.bf16.xpose.msra.mxu0 0
      %548 = vmatprep.subr.bf16.mxu0 0
      %549 = vmatpush1.bf16.xpose.msra.mxu0 0
      %550 = vmatprep.subr.bf16.mxu0 0
      %551 = vmatpush1.bf16.xpose.msra.mxu0 0
      %552 = vmatprep.subr.bf16.mxu0 0
      %553 = vmatpush1.bf16.xpose.msra.mxu0 0
      %554 = vmatprep.subr.bf16.mxu0 0
      %555 = vmatpush1.bf16.xpose.msra.mxu0 0
      %556 = vmatprep.mubr.bf16.mxu0 0
      %557 = vmatmul.mubr.bf16.gmra.mrb[0].mxu0 %v519
      %v558 = vpop.f32.mrb[0].mxu0
      %v559 = vadd.f32 0.0, %v558
      %v560 = vpop.f32.mrb[0].mxu0
      %v561 = vpop.f32.mrb[0].mxu0
      %v562 = vpop.f32.mrb[0].mxu0
      %563 = vdwg.mxu0
      %v564 = vsel %vm120, %v559, -1e+30
      %v565 = vsel %vm175, %v564, -inf
      %566 = vmax.xlane.f32.xlu0 %v565
      %v567 = vpop.xlane.xlu0 %566
      %v568 = vsub.f32 %v564, %v567
      %v569 = vmul.f32 %v568, 1.442695
      %v570 = vpow.pop %v569
      %v571 = vsel %vm175, %v570, 0.0
      %572 = vadd.xlane.f32.xlu0 %v571
      %v573 = vpop.xlane.xlu0 %572
      %v574 = vrcp.pop %v573
      %v575 = vmul.f32 %v570, %v574
      %v576 = vpack.c.bf16 %v575, %v575
      %v578 = vunpack.c.l.b16 %v506
      %v579 = vpack.c.b16 %v578, %v578
      %580 = vrot.lane.b32.xlu0 %v579, 32
      %v581 = vpop.permute.xlu0 %580
      %v583 = vsel %vm175, %v576, 0
      %v586 = vsel %vm191, %v581, 0
      %588 = vmatprep.subr.bf16.mxu0 0
      %589 = vmatpush1.bf16.msra.mxu0 %v586
      %590 = vmatprep.subr.bf16.mxu0 0
      %591 = vmatpush1.bf16.msra.mxu0 0
      %592 = vmatprep.subr.bf16.mxu0 0
      %593 = vmatpush1.bf16.msra.mxu0 0
      %594 = vmatprep.subr.bf16.mxu0 0
      %595 = vmatpush1.bf16.msra.mxu0 0
      %596 = vmatprep.subr.bf16.mxu0 0
      %597 = vmatpush1.bf16.msra.mxu0 0
      %598 = vmatprep.subr.bf16.mxu0 0
      %599 = vmatpush1.bf16.msra.mxu0 0
      %600 = vmatprep.subr.bf16.mxu0 0
      %601 = vmatpush1.bf16.msra.mxu0 0
      %602 = vmatprep.subr.bf16.mxu0 0
      %603 = vmatpush1.bf16.msra.mxu0 0
      %604 = vmatprep.subr.bf16.mxu0 0
      %605 = vmatpush1.bf16.msra.mxu0 0
      %606 = vmatprep.subr.bf16.mxu0 0
      %607 = vmatpush1.bf16.msra.mxu0 0
      %608 = vmatprep.subr.bf16.mxu0 0
      %609 = vmatpush1.bf16.msra.mxu0 0
      %610 = vmatprep.subr.bf16.mxu0 0
      %611 = vmatpush1.bf16.msra.mxu0 0
      %612 = vmatprep.subr.bf16.mxu0 0
      %613 = vmatpush1.bf16.msra.mxu0 0
      %614 = vmatprep.subr.bf16.mxu0 0
      %615 = vmatpush1.bf16.msra.mxu0 0
      %616 = vmatprep.subr.bf16.mxu0 0
      %617 = vmatpush1.bf16.msra.mxu0 0
      %618 = vmatprep.subr.bf16.mxu0 0
      %619 = vmatpush1.bf16.msra.mxu0 0
      %620 = vmatprep.mubr.bf16.mxu0 0
      %621 = vmatmul.mubr.bf16.gmra.mrb[0].mxu0 %v583
      %v622 = vpop.f32.mrb[0].mxu0
      %v623 = vadd.f32 0.0, %v622
      %v624 = vpop.f32.mrb[0].mxu0
      %v625 = vpop.f32.mrb[0].mxu0
      %v626 = vpop.f32.mrb[0].mxu0
      %627 = vdwg.mxu0
      %v628 = vpack.c.bf16 %v623, %v623
      %v630 = vunpack.c.l.b16 %v628
      %v631 = vpack.c.b16 %v630, %v630
      %632 = vrot.lane.b32.xlu0 %v631, 96
      %v633 = vpop.permute.xlu0 %632
      %vm635 = vcmask 1044224
      %636 = vst.msk [vmem:[%s114] sm:$0xf] %vm635, %v633
      %p637 = scmp.lt.s32.totalorder %s12, 1
      %s638 = scalar_select %p637, %s12, 1
      %s639 = smul.addr %s638, 4
      %s640 = scalar_lea.vmem %s1, %s639
      // Predicated region
      $region25: #{_lambda_.12} parent=23 // pred_check
        %p641 = pneg %p56
      $region26: #{_lambda_.12} parent=23 // pred_check_branch
        %643 = sbr.rel (%p641) target = $region28
      $region27: #{_lambda_.12} parent=23 // pred_region
        _
      $region28: #{_lambda_.12} parent=23 // pred_fallthru
        _
    $region24: #{_lambda_.12} parent=5 // pred_fallthru
      _
    %p644 = scmp.le.s32.totalorder 2, %s7
    // Predicated region
    $region29: #{_lambda_.12} parent=5 // pred_check
      %p645 = pneg %p644
    $region30: #{_lambda_.12} parent=5 // pred_check_branch
      %647 = sbr.rel (%p645) target = $region32
    $region31: #{_lambda_.12} parent=5 // pred_region
      %s648 = ssub.s32 %s7, 2
      // Predicated region
      $region33: #{_lambda_.12} parent=31 // pred_check
        %p649 = pneg %p62
      $region34: #{_lambda_.12} parent=31 // pred_check_branch
        %651 = sbr.rel (%p649) target = $region36
      $region35: #{_lambda_.12} parent=31 // pred_region
        %p652 = scmp.lt.s32.totalorder %s13, 1
        %s653 = scalar_select %p652, %s13, 1
        %s654 = smul.addr %s653, 4
        %s655 = scalar_lea.vmem %s1, %s654
      $region36: #{_lambda_.12} parent=31 // pred_fallthru
        _
    $region32: #{_lambda_.12} parent=5 // pred_fallthru
      _
  $region6: #{_lambda_.12} parent=0 // loop_footer
    %s11 = sadd.s32 1, %s7
  $region7: #{_lambda_.12} parent=0 // loop_footer_branch
    %6 = sbr.rel target = $region3
  $region8: #{_lambda_.12} parent=0 // loop_exit
    _

// kernel: _lambda_.18
$region0: #{_lambda_.18}
  #allocation0 [shape = 'u32[]', space=smem, size = 0x4, offset = 0x4, fixed_abs, tag = 'smem constant byte address 0x4 - core index']
  #allocation1 [shape = 'u32[144,128]{1,0:T(1,128)}', space=vmem, size = 0x12000, scoped, tag = 'internal scratch']
  #allocation2 [shape = 'f32[16,128]{1,0:T(8,128)}', space=vmem, size = 0x2000, scoped, tag = 'scratch operand']
  %s0 = inlined_call_operand.vmem [shape: bf16[16,128], index: 0, kind: input, shape index: {}]
  %s1 = inlined_call_operand.vmem [shape: bf16[128,128], index: 1, kind: input, shape index: {}]
  %s2 = inlined_call_operand.vmem [shape: f32[1,128], index: 2, kind: input, shape index: {}]
  %s3 = inlined_call_operand.vmem [shape: f32[16,128], index: 3, kind: input, shape index: {}]
  %s4 = inlined_call_operand.vmem [shape: f32[16,128], index: 4, kind: output, shape index: {}]
  %s5 = sld [smem:[#allocation0]]
  $region34: #{_lambda_.18} parent=0
    _
  %s7 = ssub.s32 1, %s5
  %s8 = scalar_select 0, %s7, %s5
  // Predicated region
  $region2: #{_lambda_.18} parent=0 // pred_check
    _
  $region3: #{_lambda_.18} parent=0 // pred_check_branch
    %10 = sbr.rel (0) target = $region5
  $region4: #{_lambda_.18} parent=0 // pred_region
    _
  $region5: #{_lambda_.18} parent=0 // pred_fallthru
    _
  // Predicated region
  $region6: #{_lambda_.18} parent=0 // pred_check
    _
  $region7: #{_lambda_.18} parent=0 // pred_check_branch
    %12 = sbr.rel (0) target = $region9
  $region8: #{_lambda_.18} parent=0 // pred_region
    _
  $region9: #{_lambda_.18} parent=0 // pred_fallthru
    _
  // Predicated region
  $region10: #{_lambda_.18} parent=0 // pred_check
    _
  $region11: #{_lambda_.18} parent=0 // pred_check_branch
    %14 = sbr.rel (0) target = $region13
  $region12: #{_lambda_.18} parent=0 // pred_region
    _
  $region13: #{_lambda_.18} parent=0 // pred_fallthru
    _
  // Predicated region
  $region14: #{_lambda_.18} parent=0 // pred_check
    _
  $region15: #{_lambda_.18} parent=0 // pred_check_branch
    %16 = sbr.rel (0) target = $region17
  $region16: #{_lambda_.18} parent=0 // pred_region
    _
  $region17: #{_lambda_.18} parent=0 // pred_fallthru
    _
  %p18 = scmp.eq.s32.totalorder 0, 0
  // Predicated region
  $region18: #{_lambda_.18} parent=0 // pred_check
    %p19 = pneg %p18
  $region19: #{_lambda_.18} parent=0 // pred_check_branch
    %21 = sbr.rel (%p19) target = $region21
  $region20: #{_lambda_.18} parent=0 // pred_region
    %22 = vst [vmem:[#allocation2] sm:$0xff] 0.0
    %23 = vst [vmem:[#allocation2 + $0x8] sm:$0xff] 0.0
  $region21: #{_lambda_.18} parent=0 // pred_fallthru
    _
  %v24 = vld [vmem:[#allocation2] sm:$0xff]
  %v25 = vld [vmem:[#allocation2 + $0x8] sm:$0xff]
  %v26 = vld [vmem:[%s0] sm:$0xf]
  %v27 = vld [vmem:[%s0 + $0x4] sm:$0xf]
  %v28 = vld [vmem:[%s1] sm:$0xf]
  %v29 = vld [vmem:[%s1 + $0x4] sm:$0xf]
  %v30 = vld [vmem:[%s1 + $0x8] sm:$0xf]
  %v31 = vld [vmem:[%s1 + $0xc] sm:$0xf]
  %v32 = vld [vmem:[%s1 + $0x10] sm:$0xf]
  %v33 = vld [vmem:[%s1 + $0x14] sm:$0xf]
  %v34 = vld [vmem:[%s1 + $0x18] sm:$0xf]
  %v35 = vld [vmem:[%s1 + $0x1c] sm:$0xf]
  %v36 = vld [vmem:[%s1 + $0x20] sm:$0xf]
  %v37 = vld [vmem:[%s1 + $0x24] sm:$0xf]
  %v38 = vld [vmem:[%s1 + $0x28] sm:$0xf]
  %v39 = vld [vmem:[%s1 + $0x2c] sm:$0xf]
  %v40 = vld [vmem:[%s1 + $0x30] sm:$0xf]
  %v41 = vld [vmem:[%s1 + $0x34] sm:$0xf]
  %v42 = vld [vmem:[%s1 + $0x38] sm:$0xf]
  %v43 = vld [vmem:[%s1 + $0x3c] sm:$0xf]
  %v46 = vunpack.c.l.b16 %v26
  %v47 = vunpack.c.l.b16 %v27
  %v48 = vpack.c.b16 %v47, %v46
  %v66 = vunpack.c.l.b16 %v28
  %v67 = vunpack.c.l.b16 %v29
  %v68 = vunpack.c.l.b16 %v30
  %v69 = vunpack.c.l.b16 %v31
  %v70 = vunpack.c.l.b16 %v32
  %v71 = vunpack.c.l.b16 %v33
  %v72 = vunpack.c.l.b16 %v34
  %v73 = vunpack.c.l.b16 %v35
  %v74 = vunpack.c.l.b16 %v36
  %v75 = vunpack.c.l.b16 %v37
  %v76 = vunpack.c.l.b16 %v38
  %v77 = vunpack.c.l.b16 %v39
  %v78 = vunpack.c.l.b16 %v40
  %v79 = vunpack.c.l.b16 %v41
  %v80 = vunpack.c.l.b16 %v42
  %v81 = vunpack.c.l.b16 %v43
  %v82 = vpack.c.b16 %v67, %v66
  %v83 = vpack.c.b16 %v69, %v68
  %v84 = vpack.c.b16 %v71, %v70
  %v85 = vpack.c.b16 %v73, %v72
  %v86 = vpack.c.b16 %v75, %v74
  %v87 = vpack.c.b16 %v77, %v76
  %v88 = vpack.c.b16 %v79, %v78
  %v89 = vpack.c.b16 %v81, %v80
  %98 = vmatprep.subr.bf16.mxu0 0
  %99 = vmatpush1.bf16.msra.mxu0 %v82
  %100 = vmatprep.subr.bf16.mxu0 0
  %101 = vmatpush1.bf16.msra.mxu0 %v83
  %102 = vmatprep.subr.bf16.mxu0 0
  %103 = vmatpush1.bf16.msra.mxu0 %v84
  %104 = vmatprep.subr.bf16.mxu0 0
  %105 = vmatpush1.bf16.msra.mxu0 %v85
  %106 = vmatprep.subr.bf16.mxu0 0
  %107 = vmatpush1.bf16.msra.mxu0 %v86
  %108 = vmatprep.subr.bf16.mxu0 0
  %109 = vmatpush1.bf16.msra.mxu0 %v87
  %110 = vmatprep.subr.bf16.mxu0 0
  %111 = vmatpush1.bf16.msra.mxu0 %v88
  %112 = vmatprep.subr.bf16.mxu0 0
  %113 = vmatpush1.bf16.msra.mxu0 %v89
  %114 = vmatprep.subr.bf16.mxu0 0
  %115 = vmatpush1.bf16.msra.mxu0 0
  %116 = vmatprep.subr.bf16.mxu0 0
  %117 = vmatpush1.bf16.msra.mxu0 0
  %118 = vmatprep.subr.bf16.mxu0 0
  %119 = vmatpush1.bf16.msra.mxu0 0
  %120 = vmatprep.subr.bf16.mxu0 0
  %121 = vmatpush1.bf16.msra.mxu0 0
  %122 = vmatprep.subr.bf16.mxu0 0
  %123 = vmatpush1.bf16.msra.mxu0 0
  %124 = vmatprep.subr.bf16.mxu0 0
  %125 = vmatpush1.bf16.msra.mxu0 0
  %126 = vmatprep.subr.bf16.mxu0 0
  %127 = vmatpush1.bf16.msra.mxu0 0
  %128 = vmatprep.subr.bf16.mxu0 0
  %129 = vmatpush1.bf16.msra.mxu0 0
  %130 = vmatprep.mubr.bf16.mxu0 0
  %131 = vmatmul.mubr.bf16.gmra.mrb[0].mxu0 %v48
  %v132 = vpop.f32.mrb[0].mxu0
  %v133 = vadd.f32 0.0, %v132
  %v134 = vpop.f32.mrb[0].mxu0
  %v135 = vpop.f32.mrb[0].mxu0
  %v136 = vadd.f32 0.0, %v135
  %v137 = vpop.f32.mrb[0].mxu0
  %138 = vdwg.mxu0
  %v139 = vadd.f32 %v24, %v133
  %v140 = vadd.f32 %v25, %v136
  %141 = vst [vmem:[#allocation2] sm:$0xff] %v139
  %142 = vst [vmem:[#allocation2 + $0x8] sm:$0xff] %v140
  // Predicated region
  $region22: #{_lambda_.18} parent=0 // pred_check
    %p143 = pneg %p18
  $region23: #{_lambda_.18} parent=0 // pred_check_branch
    %145 = sbr.rel (%p143) target = $region25
  $region24: #{_lambda_.18} parent=0 // pred_region
    %v146 = vld [vmem:[#allocation2] sm:$0xff]
    %v147 = vld [vmem:[#allocation2 + $0x8] sm:$0xff]
    %v148 = vld [vmem:[%s2] sm:$0x1]
    %v150 = vlaneseq
    %v151 = vshrl.u32 %v150, 7
    %v152 = vsub.s32 0, %v151
    %v153 = vrot.slane %v148, %v152
    %v155 = vadd.f32 %v146, %v153
    %v156 = vadd.f32 %v147, %v153
    %v157 = vld [vmem:[%s3] sm:$0xff]
    %v158 = vld [vmem:[%s3 + $0x8] sm:$0xff]
    %v159 = vadd.f32 %v155, %v157
    %v160 = vadd.f32 %v156, %v158
    %161 = vst [vmem:[%s4] sm:$0xff] %v159
    %162 = vst [vmem:[%s4 + $0x8] sm:$0xff] %v160
  $region25: #{_lambda_.18} parent=0 // pred_fallthru
    _
  // Predicated region
  $region26: #{_lambda_.18} parent=0 // pred_check
    _
  $region27: #{_lambda_.18} parent=0 // pred_check_branch
    %164 = sbr.rel (0) target = $region29
  $region28: #{_lambda_.18} parent=0 // pred_region
    _
  $region29: #{_lambda_.18} parent=0 // pred_fallthru
    _
  // Predicated region
  $region30: #{_lambda_.18} parent=0 // pred_check
    _
  $region31: #{_lambda_.18} parent=0 // pred_check_branch
    %166 = sbr.rel (0) target = $region33
  $region32: #{_lambda_.18} parent=0 // pred_region
    _
  $region33: #{_lambda_.18} parent=0 // pred_fallthru
    _

// kernel: _lambda_.15
$region0: #{_lambda_.15}
  #allocation0 [shape = 'u32[]', space=smem, size = 0x4, offset = 0x4, fixed_abs, tag = 'smem constant byte address 0x4 - core index']
  #allocation1 [shape = 'u32[144,128]{1,0:T(1,128)}', space=vmem, size = 0x12000, scoped, tag = 'internal scratch']
  #allocation2 [shape = 'f32[16,128]{1,0:T(8,128)}', space=vmem, size = 0x2000, scoped, tag = 'scratch operand']
  %s0 = inlined_call_operand.vmem [shape: bf16[16,512], index: 0, kind: input, shape index: {}]
  %s1 = inlined_call_operand.vmem [shape: bf16[512,128], index: 1, kind: input, shape index: {}]
  %s2 = inlined_call_operand.vmem [shape: f32[1,128], index: 2, kind: input, shape index: {}]
  %s3 = inlined_call_operand.vmem [shape: f32[16,128], index: 3, kind: input, shape index: {}]
  %s4 = inlined_call_operand.vmem [shape: f32[16,128], index: 4, kind: output, shape index: {}]
  %s5 = sld [smem:[#allocation0]]
  $region34: #{_lambda_.15} parent=0
    _
  %s7 = ssub.s32 1, %s5
  %s8 = scalar_select 0, %s7, %s5
  // Predicated region
  $region2: #{_lambda_.15} parent=0 // pred_check
    _
  $region3: #{_lambda_.15} parent=0 // pred_check_branch
    %10 = sbr.rel (0) target = $region5
  $region4: #{_lambda_.15} parent=0 // pred_region
    _
  $region5: #{_lambda_.15} parent=0 // pred_fallthru
    _
  // Predicated region
  $region6: #{_lambda_.15} parent=0 // pred_check
    _
  $region7: #{_lambda_.15} parent=0 // pred_check_branch
    %12 = sbr.rel (0) target = $region9
  $region8: #{_lambda_.15} parent=0 // pred_region
    _
  $region9: #{_lambda_.15} parent=0 // pred_fallthru
    _
  // Predicated region
  $region10: #{_lambda_.15} parent=0 // pred_check
    _
  $region11: #{_lambda_.15} parent=0 // pred_check_branch
    %14 = sbr.rel (0) target = $region13
  $region12: #{_lambda_.15} parent=0 // pred_region
    _
  $region13: #{_lambda_.15} parent=0 // pred_fallthru
    _
  // Predicated region
  $region14: #{_lambda_.15} parent=0 // pred_check
    _
  $region15: #{_lambda_.15} parent=0 // pred_check_branch
    %16 = sbr.rel (0) target = $region17
  $region16: #{_lambda_.15} parent=0 // pred_region
    _
  $region17: #{_lambda_.15} parent=0 // pred_fallthru
    _
  %p18 = scmp.eq.s32.totalorder 0, 0
  // Predicated region
  $region18: #{_lambda_.15} parent=0 // pred_check
    %p19 = pneg %p18
  $region19: #{_lambda_.15} parent=0 // pred_check_branch
    %21 = sbr.rel (%p19) target = $region21
  $region20: #{_lambda_.15} parent=0 // pred_region
    %22 = vst [vmem:[#allocation2] sm:$0xff] 0.0
    %23 = vst [vmem:[#allocation2 + $0x8] sm:$0xff] 0.0
  $region21: #{_lambda_.15} parent=0 // pred_fallthru
    _
  %v24 = vld [vmem:[#allocation2] sm:$0xff]
  %v25 = vld [vmem:[#allocation2 + $0x8] sm:$0xff]
  %v26 = vld [vmem:[%s0] sm:$0xff]
  %v27 = vld [vmem:[%s0 + $0x8] sm:$0xff]
  %v28 = vld [vmem:[%s0 + $0x10] sm:$0xff]
  %v29 = vld [vmem:[%s0 + $0x18] sm:$0xff]
  %v30 = vld [vmem:[%s1] sm:$0xf]
  %v31 = vld [vmem:[%s1 + $0x4] sm:$0xf]
  %v32 = vld [vmem:[%s1 + $0x8] sm:$0xf]
  %v33 = vld [vmem:[%s1 + $0xc] sm:$0xf]
  %v34 = vld [vmem:[%s1 + $0x10] sm:$0xf]
  %v35 = vld [vmem:[%s1 + $0x14] sm:$0xf]
  %v36 = vld [vmem:[%s1 + $0x18] sm:$0xf]
  %v37 = vld [vmem:[%s1 + $0x1c] sm:$0xf]
  %v38 = vld [vmem:[%s1 + $0x20] sm:$0xf]
  %v39 = vld [vmem:[%s1 + $0x24] sm:$0xf]
  %v40 = vld [vmem:[%s1 + $0x28] sm:$0xf]
  %v41 = vld [vmem:[%s1 + $0x2c] sm:$0xf]
  %v42 = vld [vmem:[%s1 + $0x30] sm:$0xf]
  %v43 = vld [vmem:[%s1 + $0x34] sm:$0xf]
  %v44 = vld [vmem:[%s1 + $0x38] sm:$0xf]
  %v45 = vld [vmem:[%s1 + $0x3c] sm:$0xf]
  %v46 = vld [vmem:[%s1 + $0x40] sm:$0xf]
  %v47 = vld [vmem:[%s1 + $0x44] sm:$0xf]
  %v48 = vld [vmem:[%s1 + $0x48] sm:$0xf]
  %v49 = vld [vmem:[%s1 + $0x4c] sm:$0xf]
  %v50 = vld [vmem:[%s1 + $0x50] sm:$0xf]
  %v51 = vld [vmem:[%s1 + $0x54] sm:$0xf]
  %v52 = vld [vmem:[%s1 + $0x58] sm:$0xf]
  %v53 = vld [vmem:[%s1 + $0x5c] sm:$0xf]
  %v54 = vld [vmem:[%s1 + $0x60] sm:$0xf]
  %v55 = vld [vmem:[%s1 + $0x64] sm:$0xf]
  %v56 = vld [vmem:[%s1 + $0x68] sm:$0xf]
  %v57 = vld [vmem:[%s1 + $0x6c] sm:$0xf]
  %v58 = vld [vmem:[%s1 + $0x70] sm:$0xf]
  %v59 = vld [vmem:[%s1 + $0x74] sm:$0xf]
  %v60 = vld [vmem:[%s1 + $0x78] sm:$0xf]
  %v61 = vld [vmem:[%s1 + $0x7c] sm:$0xf]
  %v62 = vld [vmem:[%s1 + $0x80] sm:$0xf]
  %v63 = vld [vmem:[%s1 + $0x84] sm:$0xf]
  %v64 = vld [vmem:[%s1 + $0x88] sm:$0xf]
  %v65 = vld [vmem:[%s1 + $0x8c] sm:$0xf]
  %v66 = vld [vmem:[%s1 + $0x90] sm:$0xf]
  %v67 = vld [vmem:[%s1 + $0x94] sm:$0xf]
  %v68 = vld [vmem:[%s1 + $0x98] sm:$0xf]
  %v69 = vld [vmem:[%s1 + $0x9c] sm:$0xf]
  %v70 = vld [vmem:[%s1 + $0xa0] sm:$0xf]
  %v71 = vld [vmem:[%s1 + $0xa4] sm:$0xf]
  %v72 = vld [vmem:[%s1 + $0xa8] sm:$0xf]
  %v73 = vld [vmem:[%s1 + $0xac] sm:$0xf]
  %v74 = vld [vmem:[%s1 + $0xb0] sm:$0xf]
  %v75 = vld [vmem:[%s1 + $0xb4] sm:$0xf]
  %v76 = vld [vmem:[%s1 + $0xb8] sm:$0xf]
  %v77 = vld [vmem:[%s1 + $0xbc] sm:$0xf]
  %v78 = vld [vmem:[%s1 + $0xc0] sm:$0xf]
  %v79 = vld [vmem:[%s1 + $0xc4] sm:$0xf]
  %v80 = vld [vmem:[%s1 + $0xc8] sm:$0xf]
  %v81 = vld [vmem:[%s1 + $0xcc] sm:$0xf]
  %v82 = vld [vmem:[%s1 + $0xd0] sm:$0xf]
  %v83 = vld [vmem:[%s1 + $0xd4] sm:$0xf]
  %v84 = vld [vmem:[%s1 + $0xd8] sm:$0xf]
  %v85 = vld [vmem:[%s1 + $0xdc] sm:$0xf]
  %v86 = vld [vmem:[%s1 + $0xe0] sm:$0xf]
  %v87 = vld [vmem:[%s1 + $0xe4] sm:$0xf]
  %v88 = vld [vmem:[%s1 + $0xe8] sm:$0xf]
  %v89 = vld [vmem:[%s1 + $0xec] sm:$0xf]
  %v90 = vld [vmem:[%s1 + $0xf0] sm:$0xf]
  %v91 = vld [vmem:[%s1 + $0xf4] sm:$0xf]
  %v92 = vld [vmem:[%s1 + $0xf8] sm:$0xf]
  %v93 = vld [vmem:[%s1 + $0xfc] sm:$0xf]
  %v98 = vunpack.c.l.b16 %v26
  %v99 = vunpack.c.h.b16 %v26
  %v100 = vunpack.c.l.b16 %v27
  %v101 = vunpack.c.h.b16 %v27
  %v102 = vunpack.c.l.b16 %v28
  %v103 = vunpack.c.h.b16 %v28
  %v104 = vunpack.c.l.b16 %v29
  %v105 = vunpack.c.h.b16 %v29
  %v106 = vpack.c.b16 %v102, %v98
  %v107 = vpack.c.b16 %v103, %v99
  %v108 = vpack.c.b16 %v104, %v100
  %v109 = vpack.c.b16 %v105, %v101
  %v178 = vunpack.c.l.b16 %v30
  %v179 = vunpack.c.l.b16 %v31
  %v180 = vunpack.c.l.b16 %v32
  %v181 = vunpack.c.l.b16 %v33
  %v182 = vunpack.c.l.b16 %v34
  %v183 = vunpack.c.l.b16 %v35
  %v184 = vunpack.c.l.b16 %v36
  %v185 = vunpack.c.l.b16 %v37
  %v186 = vunpack.c.l.b16 %v38
  %v187 = vunpack.c.l.b16 %v39
  %v188 = vunpack.c.l.b16 %v40
  %v189 = vunpack.c.l.b16 %v41
  %v190 = vunpack.c.l.b16 %v42
  %v191 = vunpack.c.l.b16 %v43
  %v192 = vunpack.c.l.b16 %v44
  %v193 = vunpack.c.l.b16 %v45
  %v194 = vunpack.c.l.b16 %v46
  %v195 = vunpack.c.l.b16 %v47
  %v196 = vunpack.c.l.b16 %v48
  %v197 = vunpack.c.l.b16 %v49
  %v198 = vunpack.c.l.b16 %v50
  %v199 = vunpack.c.l.b16 %v51
  %v200 = vunpack.c.l.b16 %v52
  %v201 = vunpack.c.l.b16 %v53
  %v202 = vunpack.c.l.b16 %v54
  %v203 = vunpack.c.l.b16 %v55
  %v204 = vunpack.c.l.b16 %v56
  %v205 = vunpack.c.l.b16 %v57
  %v206 = vunpack.c.l.b16 %v58
  %v207 = vunpack.c.l.b16 %v59
  %v208 = vunpack.c.l.b16 %v60
  %v209 = vunpack.c.l.b16 %v61
  %v210 = vunpack.c.l.b16 %v62
  %v211 = vunpack.c.l.b16 %v63
  %v212 = vunpack.c.l.b16 %v64
  %v213 = vunpack.c.l.b16 %v65
  %v214 = vunpack.c.l.b16 %v66
  %v215 = vunpack.c.l.b16 %v67
  %v216 = vunpack.c.l.b16 %v68
  %v217 = vunpack.c.l.b16 %v69
  %v218 = vunpack.c.l.b16 %v70
  %v219 = vunpack.c.l.b16 %v71
  %v220 = vunpack.c.l.b16 %v72
  %v221 = vunpack.c.l.b16 %v73
  %v222 = vunpack.c.l.b16 %v74
  %v223 = vunpack.c.l.b16 %v75
  %v224 = vunpack.c.l.b16 %v76
  %v225 = vunpack.c.l.b16 %v77
  %v226 = vunpack.c.l.b16 %v78
  %v227 = vunpack.c.l.b16 %v79
  %v228 = vunpack.c.l.b16 %v80
  %v229 = vunpack.c.l.b16 %v81
  %v230 = vunpack.c.l.b16 %v82
  %v231 = vunpack.c.l.b16 %v83
  %v232 = vunpack.c.l.b16 %v84
  %v233 = vunpack.c.l.b16 %v85
  %v234 = vunpack.c.l.b16 %v86
  %v235 = vunpack.c.l.b16 %v87
  %v236 = vunpack.c.l.b16 %v88
  %v237 = vunpack.c.l.b16 %v89
  %v238 = vunpack.c.l.b16 %v90
  %v239 = vunpack.c.l.b16 %v91
  %v240 = vunpack.c.l.b16 %v92
  %v241 = vunpack.c.l.b16 %v93
  %v242 = vpack.c.b16 %v179, %v178
  %v243 = vpack.c.b16 %v181, %v180
  %v244 = vpack.c.b16 %v183, %v182
  %v245 = vpack.c.b16 %v185, %v184
  %v246 = vpack.c.b16 %v187, %v186
  %v247 = vpack.c.b16 %v189, %v188
  %v248 = vpack.c.b16 %v191, %v190
  %v249 = vpack.c.b16 %v193, %v192
  %v250 = vpack.c.b16 %v195, %v194
  %v251 = vpack.c.b16 %v197, %v196
  %v252 = vpack.c.b16 %v199, %v198
  %v253 = vpack.c.b16 %v201, %v200
  %v254 = vpack.c.b16 %v203, %v202
  %v255 = vpack.c.b16 %v205, %v204
  %v256 = vpack.c.b16 %v207, %v206
  %v257 = vpack.c.b16 %v209, %v208
  %v258 = vpack.c.b16 %v211, %v210
  %v259 = vpack.c.b16 %v213, %v212
  %v260 = vpack.c.b16 %v215, %v214
  %v261 = vpack.c.b16 %v217, %v216
  %v262 = vpack.c.b16 %v219, %v218
  %v263 = vpack.c.b16 %v221, %v220
  %v264 = vpack.c.b16 %v223, %v222
  %v265 = vpack.c.b16 %v225, %v224
  %v266 = vpack.c.b16 %v227, %v226
  %v267 = vpack.c.b16 %v229, %v228
  %v268 = vpack.c.b16 %v231, %v230
  %v269 = vpack.c.b16 %v233, %v232
  %v270 = vpack.c.b16 %v235, %v234
  %v271 = vpack.c.b16 %v237, %v236
  %v272 = vpack.c.b16 %v239, %v238
  %v273 = vpack.c.b16 %v241, %v240
  %306 = vmatprep.subr.bf16.mxu0 0
  %307 = vmatpush1.bf16.msra.mxu0 %v242
  %308 = vmatprep.subr.bf16.mxu0 0
  %309 = vmatpush1.bf16.msra.mxu0 %v243
  %310 = vmatprep.subr.bf16.mxu0 0
  %311 = vmatpush1.bf16.msra.mxu0 %v244
  %312 = vmatprep.subr.bf16.mxu0 0
  %313 = vmatpush1.bf16.msra.mxu0 %v245
  %314 = vmatprep.subr.bf16.mxu0 0
  %315 = vmatpush1.bf16.msra.mxu0 %v246
  %316 = vmatprep.subr.bf16.mxu0 0
  %317 = vmatpush1.bf16.msra.mxu0 %v247
  %318 = vmatprep.subr.bf16.mxu0 0
  %319 = vmatpush1.bf16.msra.mxu0 %v248
  %320 = vmatprep.subr.bf16.mxu0 0
  %321 = vmatpush1.bf16.msra.mxu0 %v249
  %322 = vmatprep.subr.bf16.mxu0 0
  %323 = vmatpush1.bf16.msra.mxu0 %v250
  %324 = vmatprep.subr.bf16.mxu0 0
  %325 = vmatpush1.bf16.msra.mxu0 %v251
  %326 = vmatprep.subr.bf16.mxu0 0
  %327 = vmatpush1.bf16.msra.mxu0 %v252
  %328 = vmatprep.subr.bf16.mxu0 0
  %329 = vmatpush1.bf16.msra.mxu0 %v253
  %330 = vmatprep.subr.bf16.mxu0 0
  %331 = vmatpush1.bf16.msra.mxu0 %v254
  %332 = vmatprep.subr.bf16.mxu0 0
  %333 = vmatpush1.bf16.msra.mxu0 %v255
  %334 = vmatprep.subr.bf16.mxu0 0
  %335 = vmatpush1.bf16.msra.mxu0 %v256
  %336 = vmatprep.subr.bf16.mxu0 0
  %337 = vmatpush1.bf16.msra.mxu0 %v257
  %338 = vmatprep.mubr.bf16.mxu0 %v107
  %339 = vmatmul.mubr.bf16.gmra.mrb[0].mxu0 %v106
  %v340 = vpop.f32.mrb[0].mxu0
  %v341 = vadd.f32 0.0, %v340
  %v342 = vpop.f32.mrb[0].mxu0
  %v343 = vpop.f32.mrb[0].mxu0
  %v344 = vadd.f32 0.0, %v343
  %v345 = vpop.f32.mrb[0].mxu0
  %346 = vdwg.mxu0
  %347 = vmatprep.subr.bf16.mxu0 0
  %348 = vmatpush1.bf16.msra.mxu0 %v258
  %349 = vmatprep.subr.bf16.mxu0 0
  %350 = vmatpush1.bf16.msra.mxu0 %v259
  %351 = vmatprep.subr.bf16.mxu0 0
  %352 = vmatpush1.bf16.msra.mxu0 %v260
  %353 = vmatprep.subr.bf16.mxu0 0
  %354 = vmatpush1.bf16.msra.mxu0 %v261
  %355 = vmatprep.subr.bf16.mxu0 0
  %356 = vmatpush1.bf16.msra.mxu0 %v262
  %357 = vmatprep.subr.bf16.mxu0 0
  %358 = vmatpush1.bf16.msra.mxu0 %v263
  %359 = vmatprep.subr.bf16.mxu0 0
  %360 = vmatpush1.bf16.msra.mxu0 %v264
  %361 = vmatprep.subr.bf16.mxu0 0
  %362 = vmatpush1.bf16.msra.mxu0 %v265
  %363 = vmatprep.subr.bf16.mxu0 0
  %364 = vmatpush1.bf16.msra.mxu0 %v266
  %365 = vmatprep.subr.bf16.mxu0 0
  %366 = vmatpush1.bf16.msra.mxu0 %v267
  %367 = vmatprep.subr.bf16.mxu0 0
  %368 = vmatpush1.bf16.msra.mxu0 %v268
  %369 = vmatprep.subr.bf16.mxu0 0
  %370 = vmatpush1.bf16.msra.mxu0 %v269
  %371 = vmatprep.subr.bf16.mxu0 0
  %372 = vmatpush1.bf16.msra.mxu0 %v270
  %373 = vmatprep.subr.bf16.mxu0 0
  %374 = vmatpush1.bf16.msra.mxu0 %v271
  %375 = vmatprep.subr.bf16.mxu0 0
  %376 = vmatpush1.bf16.msra.mxu0 %v272
  %377 = vmatprep.subr.bf16.mxu0 0
  %378 = vmatpush1.bf16.msra.mxu0 %v273
  %379 = vmatprep.mubr.bf16.mxu0 %v109
  %380 = vmatmul.mubr.bf16.gmra.mrb[0].mxu0 %v108
  %v381 = vpop.f32.mrb[0].mxu0
  %v382 = vadd.f32 %v341, %v381
  %v383 = vpop.f32.mrb[0].mxu0
  %v384 = vpop.f32.mrb[0].mxu0
  %v385 = vadd.f32 %v344, %v384
  %v386 = vpop.f32.mrb[0].mxu0
  %387 = vdwg.mxu0
  %v388 = vadd.f32 %v24, %v382
  %v389 = vadd.f32 %v25, %v385
  %390 = vst [vmem:[#allocation2] sm:$0xff] %v388
  %391 = vst [vmem:[#allocation2 + $0x8] sm:$0xff] %v389
  // Predicated region
  $region22: #{_lambda_.15} parent=0 // pred_check
    %p392 = pneg %p18
  $region23: #{_lambda_.15} parent=0 // pred_check_branch
    %394 = sbr.rel (%p392) target = $region25
  $region24: #{_lambda_.15} parent=0 // pred_region
    %v395 = vld [vmem:[#allocation2] sm:$0xff]
    %v396 = vld [vmem:[#allocation2 + $0x8] sm:$0xff]
    %v397 = vld [vmem:[%s2] sm:$0x1]
    %v399 = vlaneseq
    %v400 = vshrl.u32 %v399, 7
    %v401 = vsub.s32 0, %v400
    %v402 = vrot.slane %v397, %v401
    %v404 = vadd.f32 %v395, %v402
    %v405 = vadd.f32 %v396, %v402
    %v406 = vld [vmem:[%s3] sm:$0xff]
    %v407 = vld [vmem:[%s3 + $0x8] sm:$0xff]
    %v408 = vadd.f32 %v404, %v406
    %v409 = vadd.f32 %v405, %v407
    %410 = vst [vmem:[%s4] sm:$0xff] %v408
    %411 = vst [vmem:[%s4 + $0x8] sm:$0xff] %v409
  $region25: #{_lambda_.15} parent=0 // pred_fallthru
    _
  // Predicated region
  $region26: #{_lambda_.15} parent=0 // pred_check
    _
  $region27: #{_lambda_.15} parent=0 // pred_check_branch
    %413 = sbr.rel (0) target = $region29
  $region28: #{_lambda_.15} parent=0 // pred_region
    _
  $region29: #{_lambda_.15} parent=0 // pred_fallthru
    _
  // Predicated region
  $region30: #{_lambda_.15} parent=0 // pred_check
    _
  $region31: #{_lambda_.15} parent=0 // pred_check_branch
    %415 = sbr.rel (0) target = $region33
  $region32: #{_lambda_.15} parent=0 // pred_region
    _
  $region33: #{_lambda_.15} parent=0 // pred_fallthru
    _

// kernel: _lambda_.21
$region0: #{_lambda_.21}
  #allocation0 [shape = 'u32[]', space=smem, size = 0x4, offset = 0x4, fixed_abs, tag = 'smem constant byte address 0x4 - core index']
  #allocation1 [shape = 'u32[144,128]{1,0:T(1,128)}', space=vmem, size = 0x12000, scoped, tag = 'internal scratch']
  #allocation2 [shape = 'bf16[16,128]{1,0:T(16,128)(2,1)}', space=vmem, size = 0x1000, scoped, tag = 'scratch operand']
  %s0 = inlined_call_operand.vmem [shape: f32[16,128], index: 0, kind: input, shape index: {}]
  %s1 = inlined_call_operand.vmem [shape: f32[1,128], index: 1, kind: input, shape index: {}]
  %s2 = inlined_call_operand.vmem [shape: f32[1,128], index: 2, kind: input, shape index: {}]
  %s3 = inlined_call_operand.vmem [shape: bf16[128,256], index: 3, kind: input, shape index: {}]
  %s4 = inlined_call_operand.vmem [shape: f32[1,256], index: 4, kind: input, shape index: {}]
  %s5 = inlined_call_operand.hbm [shape: f32[16,256], index: 5, kind: output, shape index: {}]
  %s6 = sld [smem:[#allocation0]]
  $region34: #{_lambda_.21} parent=0
    _
  %s8 = ssub.s32 1, %s6
  %s9 = scalar_select 0, %s8, %s6
  $region1: #{_lambda_.21} parent=0
    #allocation3 [shape = 'u8[16384]{0}', space=vmem, size = 0x4000, scoped, tag = 'output window, operand 0, single buffered']
    #allocation4 [shape = 's32[1]{0}', space=sflag, size = 0x4, scoped, tag = 'scoped memory for _lambda_.21']
    %10 = vsyncpa [#allocation4], 0
    // Predicated region
    $region2: #{_lambda_.21} parent=1 // pred_check
      _
    $region3: #{_lambda_.21} parent=1 // pred_check_branch
      %12 = sbr.rel (0) target = $region5
    $region4: #{_lambda_.21} parent=1 // pred_region
      _
    $region5: #{_lambda_.21} parent=1 // pred_fallthru
      _
    // Predicated region
    $region6: #{_lambda_.21} parent=1 // pred_check
      _
    $region7: #{_lambda_.21} parent=1 // pred_check_branch
      %14 = sbr.rel (0) target = $region9
    $region8: #{_lambda_.21} parent=1 // pred_region
      _
    $region9: #{_lambda_.21} parent=1 // pred_fallthru
      _
    // Predicated region
    $region10: #{_lambda_.21} parent=1 // pred_check
      _
    $region11: #{_lambda_.21} parent=1 // pred_check_branch
      %16 = sbr.rel (0) target = $region13
    $region12: #{_lambda_.21} parent=1 // pred_region
      _
    $region13: #{_lambda_.21} parent=1 // pred_fallthru
      _
    // Predicated region
    $region14: #{_lambda_.21} parent=1 // pred_check
      _
    $region15: #{_lambda_.21} parent=1 // pred_check_branch
      %18 = sbr.rel (0) target = $region17
    $region16: #{_lambda_.21} parent=1 // pred_region
      _
    $region17: #{_lambda_.21} parent=1 // pred_fallthru
      _
    // Predicated region
    $region18: #{_lambda_.21} parent=1 // pred_check
      _
    $region19: #{_lambda_.21} parent=1 // pred_check_branch
      %20 = sbr.rel (0) target = $region21
    $region20: #{_lambda_.21} parent=1 // pred_region
      _
    $region21: #{_lambda_.21} parent=1 // pred_fallthru
      _
    %p22 = scmp.eq.s32.totalorder 0, 0
    // Predicated region
    $region22: #{_lambda_.21} parent=1 // pred_check
      %p23 = pneg %p22
    $region23: #{_lambda_.21} parent=1 // pred_check_branch
      %25 = sbr.rel (%p23) target = $region25
    $region24: #{_lambda_.21} parent=1 // pred_region
      %v26 = vld [vmem:[%s0] sm:$0xff]
      %v27 = vld [vmem:[%s0 + $0x8] sm:$0xff]
      %28 = vadd.xlane.f32.xlu0 %v26
      %v29 = vpop.xlane.xlu0 %28
      %30 = vadd.xlane.f32.xlu0 %v27
      %v31 = vpop.xlane.xlu0 %30
      %v32 = vrcp.pop 128.0
      %v33 = vmul.f32 %v29, %v32
      %v34 = vmul.f32 %v31, %v32
      %v35 = vsub.f32 %v26, %v33
      %v36 = vsub.f32 %v27, %v34
      %v37 = vmul.f32 %v35, %v35
      %v38 = vmul.f32 %v36, %v36
      %39 = vadd.xlane.f32.xlu0 %v37
      %v40 = vpop.xlane.xlu0 %39
      %41 = vadd.xlane.f32.xlu0 %v38
      %v42 = vpop.xlane.xlu0 %41
      %v43 = vmul.f32 %v40, %v32
      %v44 = vmul.f32 %v42, %v32
      %v45 = vadd.f32 %v43, 1e-05
      %v46 = vadd.f32 %v44, 1e-05
      %v47 = vrsqrt.pop %v45
      %v48 = vrsqrt.pop %v46
      %v49 = vmul.f32 %v35, %v47
      %v50 = vmul.f32 %v36, %v48
      %v51 = vld [vmem:[%s1] sm:$0x1]
      %v53 = vlaneseq
      %v54 = vshrl.u32 %v53, 7
      %v55 = vsub.s32 0, %v54
      %v56 = vrot.slane %v51, %v55
      %v58 = vmul.f32 %v49, %v56
      %v59 = vmul.f32 %v50, %v56
      %v60 = vld [vmem:[%s2] sm:$0x1]
      %v62 = vlaneseq
      %v63 = vshrl.u32 %v62, 7
      %v64 = vsub.s32 0, %v63
      %v65 = vrot.slane %v60, %v64
      %v67 = vadd.f32 %v58, %v65
      %v68 = vadd.f32 %v59, %v65
      %v69 = vpack.c.bf16 %v68, %v67
      %70 = vst [vmem:[#allocation2] sm:$0xff] %v69
    $region25: #{_lambda_.21} parent=1 // pred_fallthru
      _
    %v71 = vld [vmem:[#allocation2] sm:$0xff]
    %v72 = vld [vmem:[%s3] sm:$0xff]
    %v73 = vld [vmem:[%s3 + $0x8] sm:$0xff]
    %v74 = vld [vmem:[%s3 + $0x10] sm:$0xff]
    %v75 = vld [vmem:[%s3 + $0x18] sm:$0xff]
    %v76 = vld [vmem:[%s3 + $0x20] sm:$0xff]
    %v77 = vld [vmem:[%s3 + $0x28] sm:$0xff]
    %v78 = vld [vmem:[%s3 + $0x30] sm:$0xff]
    %v79 = vld [vmem:[%s3 + $0x38] sm:$0xff]
    %v80 = vld [vmem:[%s3 + $0x40] sm:$0xff]
    %v81 = vld [vmem:[%s3 + $0x48] sm:$0xff]
    %v82 = vld [vmem:[%s3 + $0x50] sm:$0xff]
    %v83 = vld [vmem:[%s3 + $0x58] sm:$0xff]
    %v84 = vld [vmem:[%s3 + $0x60] sm:$0xff]
    %v85 = vld [vmem:[%s3 + $0x68] sm:$0xff]
    %v86 = vld [vmem:[%s3 + $0x70] sm:$0xff]
    %v87 = vld [vmem:[%s3 + $0x78] sm:$0xff]
    %v88 = vld [vmem:[%s4] sm:$0x3]
    %v90 = vlaneseq
    %v91 = vshrl.u32 %v90, 7
    %v92 = vsub.s32 0, %v91
    %v93 = vrot.slane %v88, %v92
    %v94 = vlaneseq
    %v95 = vshrl.u32 %v94, 7
    %v96 = vsub.s32 1, %v95
    %v97 = vrot.slane %v88, %v96
    %v116 = vunpack.c.l.b16 %v72
    %v117 = vunpack.c.h.b16 %v72
    %v118 = vunpack.c.l.b16 %v73
    %v119 = vunpack.c.h.b16 %v73
    %v120 = vunpack.c.l.b16 %v74
    %v121 = vunpack.c.h.b16 %v74
    %v122 = vunpack.c.l.b16 %v75
    %v123 = vunpack.c.h.b16 %v75
    %v124 = vunpack.c.l.b16 %v76
    %v125 = vunpack.c.h.b16 %v76
    %v126 = vunpack.c.l.b16 %v77
    %v127 = vunpack.c.h.b16 %v77
    %v128 = vunpack.c.l.b16 %v78
    %v129 = vunpack.c.h.b16 %v78
    %v130 = vunpack.c.l.b16 %v79
    %v131 = vunpack.c.h.b16 %v79
    %v132 = vunpack.c.l.b16 %v80
    %v133 = vunpack.c.h.b16 %v80
    %v134 = vunpack.c.l.b16 %v81
    %v135 = vunpack.c.h.b16 %v81
    %v136 = vunpack.c.l.b16 %v82
    %v137 = vunpack.c.h.b16 %v82
    %v138 = vunpack.c.l.b16 %v83
    %v139 = vunpack.c.h.b16 %v83
    %v140 = vunpack.c.l.b16 %v84
    %v141 = vunpack.c.h.b16 %v84
    %v142 = vunpack.c.l.b16 %v85
    %v143 = vunpack.c.h.b16 %v85
    %v144 = vunpack.c.l.b16 %v86
    %v145 = vunpack.c.h.b16 %v86
    %v146 = vunpack.c.l.b16 %v87
    %v147 = vunpack.c.h.b16 %v87
    %v148 = vpack.c.b16 %v118, %v116
    %v149 = vpack.c.b16 %v119, %v117
    %v150 = vpack.c.b16 %v122, %v120
    %v151 = vpack.c.b16 %v123, %v121
    %v152 = vpack.c.b16 %v126, %v124
    %v153 = vpack.c.b16 %v127, %v125
    %v154 = vpack.c.b16 %v130, %v128
    %v155 = vpack.c.b16 %v131, %v129
    %v156 = vpack.c.b16 %v134, %v132
    %v157 = vpack.c.b16 %v135, %v133
    %v158 = vpack.c.b16 %v138, %v136
    %v159 = vpack.c.b16 %v139, %v137
    %v160 = vpack.c.b16 %v142, %v140
    %v161 = vpack.c.b16 %v143, %v141
    %v162 = vpack.c.b16 %v146, %v144
    %v163 = vpack.c.b16 %v147, %v145
    %180 = vmatprep.subr.bf16.mxu0 %v149
    %181 = vmatpush1.bf16.msra.mxu0 %v148
    %182 = vmatprep.subr.bf16.mxu0 %v151
    %183 = vmatpush1.bf16.msra.mxu0 %v150
    %184 = vmatprep.subr.bf16.mxu0 %v153
    %185 = vmatpush1.bf16.msra.mxu0 %v152
    %186 = vmatprep.subr.bf16.mxu0 %v155
    %187 = vmatpush1.bf16.msra.mxu0 %v154
    %188 = vmatprep.subr.bf16.mxu0 %v157
    %189 = vmatpush1.bf16.msra.mxu0 %v156
    %190 = vmatprep.subr.bf16.mxu0 %v159
    %191 = vmatpush1.bf16.msra.mxu0 %v158
    %192 = vmatprep.subr.bf16.mxu0 %v161
    %193 = vmatpush1.bf16.msra.mxu0 %v160
    %194 = vmatprep.subr.bf16.mxu0 %v163
    %195 = vmatpush1.bf16.msra.mxu0 %v162
    %196 = vmatprep.subr.bf16.mxu0 0
    %197 = vmatpush1.bf16.msra.mxu0 0
    %198 = vmatprep.subr.bf16.mxu0 0
    %199 = vmatpush1.bf16.msra.mxu0 0
    %200 = vmatprep.subr.bf16.mxu0 0
    %201 = vmatpush1.bf16.msra.mxu0 0
    %202 = vmatprep.subr.bf16.mxu0 0
    %203 = vmatpush1.bf16.msra.mxu0 0
    %204 = vmatprep.subr.bf16.mxu0 0
    %205 = vmatpush1.bf16.msra.mxu0 0
    %206 = vmatprep.subr.bf16.mxu0 0
    %207 = vmatpush1.bf16.msra.mxu0 0
    %208 = vmatprep.subr.bf16.mxu0 0
    %209 = vmatpush1.bf16.msra.mxu0 0
    %210 = vmatprep.subr.bf16.mxu0 0
    %211 = vmatpush1.bf16.msra.mxu0 0
    %212 = vmatprep.mubr.bf16.mxu0 0
    %213 = vmatmul.mubr.bf16.gmra.mrb[0].mxu0 %v71
    %v214 = vpop.f32.mrb[0].mxu0
    %v215 = vadd.f32 %v93, %v214
    %v216 = vpop.f32.mrb[0].mxu0
    %v217 = vadd.f32 %v97, %v216
    %v218 = vpop.f32.mrb[0].mxu0
    %v219 = vadd.f32 %v93, %v218
    %v220 = vpop.f32.mrb[0].mxu0
    %v221 = vadd.f32 %v97, %v220
    %222 = vdwg.mxu0
    %223 = vst [vmem:[#allocation3] sm:$0xff] %v215
    %224 = vst [vmem:[#allocation3 + $0x8] sm:$0xff] %v217
    %225 = vst [vmem:[#allocation3 + $0x10] sm:$0xff] %v219
    %226 = vst [vmem:[#allocation3 + $0x18] sm:$0xff] %v221
    // Predicated region
    $region26: #{_lambda_.21} parent=1 // pred_check
      _
    $region27: #{_lambda_.21} parent=1 // pred_check_branch
      %228 = sbr.rel (0) target = $region29
    $region28: #{_lambda_.21} parent=1 // pred_region
      %s230 = ssub.s32 512, 512
      %231 = vsyncadd [#allocation4], %s230
      %s232 = sshll.u32 [#allocation3], 4
      %s233 = int_to_ptr.vmem [resolvable:$true] %s232
      %238 = dma.vmem_to_hbm [thread:$0]  %s233, 512, %s5, [#allocation4], 256, 256, 16
    $region29: #{_lambda_.21} parent=1 // pred_fallthru
      _
    // Predicated region
    $region30: #{_lambda_.21} parent=1 // pred_check
      _
    $region31: #{_lambda_.21} parent=1 // pred_check_branch
      %240 = sbr.rel (0) target = $region33
    $region32: #{_lambda_.21} parent=1 // pred_region
      %241 = dma.done [#allocation4], 512
    $region33: #{_lambda_.21} parent=1 // pred_fallthru
      _
    %242 = vsyncpa [#allocation4], 1

</llo_original>
